<compile_context>
chip_gen: v5e
topology: v5e:2x2
jax: 0.10.0
libtpu: 0.0.40
codegen_flags: <defaults>
</compile_context>

<pallas_src>
import functools

import jax
import jax.numpy as jnp
from jax.experimental import pallas as pl
from jax.experimental.pallas import tpu as pltpu


# --------------------------------------------------------------------------
# Fused BAPM kernel: one grid step == one batch sample, everything in VMEM
# --------------------------------------------------------------------------
def _make_bapm_kernel(N, Tp, P, H, nh, D):
    """N nodes, Tp conv time steps, P=stride*feat patch size, H hidden, nh heads,
    D=2H GRU dim."""
    C = (4 * nh + 1) * H            # fused spat projection width: q|k|v|gate|self
    scale = float(H) ** -0.5

    def kernel(xp_ref, wst_ref, bst_ref, wsp_ref, bsp_ref,
               wih_ref, whh_ref, bih_ref, bhh_ref, wtr_ref, btr_ref, o_ref):
        # ---- 1) StCNN: patch projection + ReLU (one MXU push for all (t,n)) ----
        xp = xp_ref[0].reshape(Tp * N, P)                          # [Tp*N, P] f32
        conv = jnp.dot(xp.astype(jnp.bfloat16), wst_ref[...],
                       preferred_element_type=jnp.float32) + bst_ref[...]
        conv = jnp.maximum(conv, 0.0)                              # [Tp*N, H] f32

        # ---- 2) SpatAttLayer: single fused lane-dense projection ----
        proj = jnp.dot(conv.astype(jnp.bfloat16), wsp_ref[...],
                       preferred_element_type=jnp.float32) + bsp_ref[...]
        proj = proj.reshape(Tp, N, C)
        q = proj[:, :, 0 * nh * H:1 * nh * H]
        k = proj[:, :, 1 * nh * H:2 * nh * H]
        v = proj[:, :, 2 * nh * H:3 * nh * H]
        g = proj[:, :, 3 * nh * H:4 * nh * H]
        hs = proj[:, :, 4 * nh * H:]                               # [Tp, N, H] self proj

        acc = jnp.zeros((Tp, N, H), jnp.float32)
        for hd in range(nh):                                       # static unroll (tiny)
            sl = slice(hd * H, (hd + 1) * H)
            qh = q[:, :, sl].astype(jnp.bfloat16)
            kh = k[:, :, sl].astype(jnp.bfloat16)
            vh = v[:, :, sl].astype(jnp.bfloat16)
            gh = g[:, :, sl]                                       # keep gate math f32
            # fully connected graph per (b, t): scores[t, i, j] = <q_i, k_j> / sqrt(H)
            scores = jnp.einsum('tnh,tmh->tnm', qh, kh,
                                preferred_element_type=jnp.float32) * scale
            m = jnp.max(scores, axis=-1, keepdims=True)
            p = jnp.exp(scores - m)
            alpha = p / jnp.sum(p, axis=-1, keepdims=True)
            agg = jnp.einsum('tnm,tmh->tnh', alpha.astype(jnp.bfloat16), vh,
                             preferred_element_type=jnp.float32)
            acc = acc + jax.nn.sigmoid(gh) * agg
        attn = acc * (1.0 / nh)                                    # merge='mean'
        spat = jnp.concatenate([hs, attn], axis=-1)                # [Tp, N, D]

        # ---- 3) TempLayer: GRU over time, fused [D, 3D] gate weights ----
        wih = wih_ref[...]
        whh = whh_ref[...]
        bih = bih_ref[...]
        bhh = bhh_ref[...]
        h = jnp.zeros((N, D), jnp.float32)
        for t in range(Tp):                                        # static unroll
            xt = spat[t].astype(jnp.bfloat16)                      # [N, D]
            gi = jnp.dot(xt, wih, preferred_element_type=jnp.float32) + bih
            ghh = jnp.dot(h.astype(jnp.bfloat16), whh,
                          preferred_element_type=jnp.float32) + bhh
            r = jax.nn.sigmoid(gi[:, :D] + ghh[:, :D])
            z = jax.nn.sigmoid(gi[:, D:2 * D] + ghh[:, D:2 * D])
            n_ = jnp.tanh(gi[:, 2 * D:] + r * ghh[:, 2 * D:])
            h = (1.0 - z) * n_ + z * h                             # [N, D] f32

        # ---- 4) TranLayer: VPU multiply + XLU reduce (no 1-lane MXU matmul) ----
        s = jnp.sum(h * wtr_ref[...], axis=-1, keepdims=True)      # [N, 1]
        s = jnp.sum(s, axis=0, keepdims=True)                      # [1, 1]
        pred = s + btr_ref[...]
        o_ref[...] = pred.reshape(1, 1, 1).astype(o_ref.dtype)

    return kernel


# --------------------------------------------------------------------------
# Wrapper: weight fusion / dtype casts (done once by XLA) + the pallas_call
# --------------------------------------------------------------------------
def bapm_forward(x, params, *, stride, num_heads):
    """x: [B, N, T, F] -> age prediction [B, 1]."""
    B, N, T, F = x.shape
    H = params["w_st"].shape[1]
    D = 2 * H
    nh = num_heads
    Tp = T // stride
    P = stride * F
    C = (4 * nh + 1) * H

    # Patchify + (b, t)-graph layout for the fused kernel (input-only XLA reshape).
    x = x[:, :, :Tp * stride, :]
    xp = x.reshape(B, N, Tp, P).transpose(0, 2, 1, 3)              # [B, Tp, N, P]

    # Fuse per-head / per-gate weights into lane-dense matrices; bf16 matmul inputs,
    # f32 biases / accumulation / elementwise math (v5e-safe).
    def heads_to_cols(w):                                          # [nh, H, H] -> [H, nh*H]
        return jnp.transpose(w, (1, 0, 2)).reshape(H, nh * H)

    w_st = params["w_st"].astype(jnp.bfloat16)                     # [P, H]
    b_st = params["b_st"].astype(jnp.float32)                      # [1, H]
    w_spat = jnp.concatenate(
        [heads_to_cols(params["wq"]), heads_to_cols(params["wk"]),
         heads_to_cols(params["wv"]), heads_to_cols(params["wg"]),
         params["ws"]], axis=1).astype(jnp.bfloat16)               # [H, C]
    b_spat = jnp.concatenate(
        [jnp.zeros((1, 3 * nh * H), jnp.float32),
         params["bg"].reshape(1, nh * H),
         params["bs"]], axis=1).astype(jnp.float32)                # [1, C]
    w_ih = jnp.transpose(params["w_ih"], (1, 0, 2)).reshape(D, 3 * D).astype(jnp.bfloat16)
    w_hh = jnp.transpose(params["w_hh"], (1, 0, 2)).reshape(D, 3 * D).astype(jnp.bfloat16)
    b_ih = params["b_ih"].reshape(1, 3 * D).astype(jnp.float32)
    b_hh = params["b_hh"].reshape(1, 3 * D).astype(jnp.float32)
    w_tr = params["w_tr"].reshape(N, D).astype(jnp.float32)
    b_tr = params["b_tr"].reshape(1, 1).astype(jnp.float32)

    kernel = _make_bapm_kernel(N, Tp, P, H, nh, D)

    out = pl.pallas_call(
        kernel,
        out_shape=jax.ShapeDtypeStruct((B, 1, 1), jnp.float32),
        grid_spec=pltpu.PrefetchScalarGridSpec(
            num_scalar_prefetch=0,
            grid=(B,),
            in_specs=[
                pl.BlockSpec((1, Tp, N, P), lambda b: (b, 0, 0, 0)),   # x patches
                pl.BlockSpec((P, H), lambda b: (0, 0)),                # w_st (bf16)
                pl.BlockSpec((1, H), lambda b: (0, 0)),                # b_st
                pl.BlockSpec((H, C), lambda b: (0, 0)),                # fused spat W
                pl.BlockSpec((1, C), lambda b: (0, 0)),                # fused spat b
                pl.BlockSpec((D, 3 * D), lambda b: (0, 0)),            # GRU w_ih
                pl.BlockSpec((D, 3 * D), lambda b: (0, 0)),            # GRU w_hh
                pl.BlockSpec((1, 3 * D), lambda b: (0, 0)),            # GRU b_ih
                pl.BlockSpec((1, 3 * D), lambda b: (0, 0)),            # GRU b_hh
                pl.BlockSpec((N, D), lambda b: (0, 0)),                # tran weight
                pl.BlockSpec((1, 1), lambda b: (0, 0)),                # tran bias
            ],
            out_specs=pl.BlockSpec((1, 1, 1), lambda b: (b, 0, 0)),
        ),
        compiler_params=pltpu.CompilerParams(
            dimension_semantics=("parallel",)),                    # batch -> megacore
    )(xp, w_st, b_st, w_spat, b_spat, w_ih, w_hh, b_ih, b_hh, w_tr, b_tr)

    return out.reshape(B, 1)


# --------------------------------------------------------------------------
# Parameter init (same structure as the reconstructed PyTorch module)
# --------------------------------------------------------------------------
def init_params(key, feat_dim, hidden_dim, num_nodes, stride, num_heads):
    D = 2 * hidden_dim
    ks = jax.random.split(key, 14)
    n = lambda k, shape, s=0.1: s * jax.random.normal(k, shape, jnp.float32)
    return {
        # StCNN (Conv1d kernel==stride, flattened as [stride*feat_dim, hidden])
        "w_st": n(ks[0], (stride * feat_dim, hidden_dim)),
        "b_st": n(ks[1], (1, hidden_dim), 0.02),
        # SpatAttLayer
        "wq": n(ks[2], (num_heads, hidden_dim, hidden_dim)),
        "wk": n(ks[3], (num_heads, hidden_dim, hidden_dim)),
        "wv": n(ks[4], (num_heads, hidden_dim, hidden_dim)),
        "wg": n(ks[5], (num_heads, hidden_dim, hidden_dim)),
        "bg": n(ks[6], (num_heads, 1, hidden_dim), 0.02),
        "ws": n(ks[7], (hidden_dim, hidden_dim)),
        "bs": n(ks[8], (1, hidden_dim), 0.02),
        # TempLayer (GRU, gate order: r, z, n)
        "w_ih": n(ks[9], (3, D, D)),
        "w_hh": n(ks[10], (3, D, D)),
        "b_ih": n(ks[11], (3, 1, D), 0.02),
        "b_hh": n(ks[12], (3, 1, D), 0.02),
        # TranLayer
        "w_tr": n(ks[13], (num_nodes * D, 1), 0.05),
        "b_tr": jnp.zeros((1, 1), jnp.float32),
    }


if __name__ == "__main__":
    # small, self-consistent config
    feat_dim, hidden_dim, num_nodes, stride, num_heads = 4, 16, 8, 2, 2
    B, T = 2, 16

    key = jax.random.PRNGKey(0)
    k_in, k_par = jax.random.split(key)
    x = jax.random.normal(k_in, (B, num_nodes, T, feat_dim), jnp.float32)
    params = init_params(k_par, feat_dim, hidden_dim, num_nodes, stride, num_heads)

    fwd = jax.jit(functools.partial(bapm_forward, stride=stride, num_heads=num_heads))
    pred = jax.block_until_ready(fwd(x, params))

    assert pred.shape == (B, 1), pred.shape
    assert bool(jnp.all(jnp.isfinite(pred)))
    print("KERNEL_OK")
</pallas_src>

<mosaic_0001>
module attributes {stable_mosaic.version = 11 : i64} {
  func.func @kernel(%arg0: i32, %arg1: memref<1x8x8x8xf32, #tpu.memory_space<vmem>>, %arg2: memref<8x16xbf16, #tpu.memory_space<vmem>>, %arg3: memref<1x16xf32, #tpu.memory_space<vmem>>, %arg4: memref<16x144xbf16, #tpu.memory_space<vmem>>, %arg5: memref<1x144xf32, #tpu.memory_space<vmem>>, %arg6: memref<32x96xbf16, #tpu.memory_space<vmem>>, %arg7: memref<32x96xbf16, #tpu.memory_space<vmem>>, %arg8: memref<1x96xf32, #tpu.memory_space<vmem>>, %arg9: memref<1x96xf32, #tpu.memory_space<vmem>>, %arg10: memref<8x32xf32, #tpu.memory_space<vmem>>, %arg11: memref<1x1xf32, #tpu.memory_space<vmem>>, %arg12: memref<1x1x1xf32, #tpu.memory_space<vmem>>) attributes {dimension_semantics = [#tpu.dimension_semantics<parallel>], iteration_bounds = array<i64: 2>, scalar_prefetch = 0 : i64, scratch_operands = 0 : i64, tpu.core_type = #tpu.core_type<tc>, window_params = [{transform_indices = @transform_0, window_bounds = array<i64: 1, 8, 8, 8>}, {pipeline_mode = #tpu.pipeline_mode<synchronous>, transform_indices = @transform_1, window_bounds = array<i64: 8, 16>}, {pipeline_mode = #tpu.pipeline_mode<synchronous>, transform_indices = @transform_2, window_bounds = array<i64: 1, 16>}, {pipeline_mode = #tpu.pipeline_mode<synchronous>, transform_indices = @transform_3, window_bounds = array<i64: 16, 144>}, {pipeline_mode = #tpu.pipeline_mode<synchronous>, transform_indices = @transform_4, window_bounds = array<i64: 1, 144>}, {pipeline_mode = #tpu.pipeline_mode<synchronous>, transform_indices = @transform_5, window_bounds = array<i64: 32, 96>}, {pipeline_mode = #tpu.pipeline_mode<synchronous>, transform_indices = @transform_6, window_bounds = array<i64: 32, 96>}, {pipeline_mode = #tpu.pipeline_mode<synchronous>, transform_indices = @transform_7, window_bounds = array<i64: 1, 96>}, {pipeline_mode = #tpu.pipeline_mode<synchronous>, transform_indices = @transform_8, window_bounds = array<i64: 1, 96>}, {pipeline_mode = #tpu.pipeline_mode<synchronous>, transform_indices = @transform_9, window_bounds = array<i64: 8, 32>}, {pipeline_mode = #tpu.pipeline_mode<synchronous>, transform_indices = @transform_10, window_bounds = array<i64: 1, 1>}, {transform_indices = @transform_11, window_bounds = array<i64: 1, 1, 1>}]} {
    %c0 = arith.constant 0 : index
    %c0_0 = arith.constant 0 : index
    %c0_1 = arith.constant 0 : index
    %c0_2 = arith.constant 0 : index
    %0 = vector.load %arg1[%c0, %c0_0, %c0_1, %c0_2] : memref<1x8x8x8xf32, #tpu.memory_space<vmem>>, vector<1x8x8x8xf32>
    %1 = vector.shape_cast %0 : vector<1x8x8x8xf32> to vector<8x8x8xf32>
    %2 = vector.shape_cast %1 : vector<8x8x8xf32> to vector<64x8xf32>
    %3 = arith.truncf %2 : vector<64x8xf32> to vector<64x8xbf16>
    %c0_3 = arith.constant 0 : index
    %c0_4 = arith.constant 0 : index
    %4 = vector.load %arg2[%c0_3, %c0_4] : memref<8x16xbf16, #tpu.memory_space<vmem>>, vector<8x16xbf16>
    %cst = arith.constant dense<0.000000e+00> : vector<64x16xf32>
    %5 = tpu.matmul %3, %4, %cst {dimension_numbers = #tpu.dot_dimension_numbers<[1], [0], [0], [1], [0, 0, 1, 1], [], []>} : vector<64x8xbf16>, vector<8x16xbf16>, vector<64x16xf32> -> vector<64x16xf32>
    %c0_5 = arith.constant 0 : index
    %c0_6 = arith.constant 0 : index
    %6 = vector.load %arg3[%c0_5, %c0_6] : memref<1x16xf32, #tpu.memory_space<vmem>>, vector<1x16xf32>
    %7 = vector.broadcast %6 : vector<1x16xf32> to vector<64x16xf32>
    %8 = arith.addf %5, %7 : vector<64x16xf32>
    %cst_7 = arith.constant 0.000000e+00 : f32
    %9 = vector.broadcast %cst_7 : f32 to vector<64x16xf32>
    %10 = arith.maximumf %8, %9 : vector<64x16xf32>
    %11 = arith.truncf %10 : vector<64x16xf32> to vector<64x16xbf16>
    %c0_8 = arith.constant 0 : index
    %c0_9 = arith.constant 0 : index
    %12 = vector.load %arg4[%c0_8, %c0_9] : memref<16x144xbf16, #tpu.memory_space<vmem>>, vector<16x144xbf16>
    %cst_10 = arith.constant dense<0.000000e+00> : vector<64x144xf32>
    %13 = tpu.matmul %11, %12, %cst_10 {dimension_numbers = #tpu.dot_dimension_numbers<[1], [0], [0], [1], [0, 0, 1, 1], [], []>} : vector<64x16xbf16>, vector<16x144xbf16>, vector<64x144xf32> -> vector<64x144xf32>
    %c0_11 = arith.constant 0 : index
    %c0_12 = arith.constant 0 : index
    %14 = vector.load %arg5[%c0_11, %c0_12] : memref<1x144xf32, #tpu.memory_space<vmem>>, vector<1x144xf32>
    %15 = vector.broadcast %14 : vector<1x144xf32> to vector<64x144xf32>
    %16 = arith.addf %13, %15 : vector<64x144xf32>
    %17 = vector.shape_cast %16 : vector<64x144xf32> to vector<8x8x144xf32>
    %18 = vector.extract_strided_slice %17 {offsets = [0, 0, 0], sizes = [8, 8, 32], strides = [1, 1, 1]} : vector<8x8x144xf32> to vector<8x8x32xf32>
    %19 = vector.extract_strided_slice %17 {offsets = [0, 0, 32], sizes = [8, 8, 32], strides = [1, 1, 1]} : vector<8x8x144xf32> to vector<8x8x32xf32>
    %20 = vector.extract_strided_slice %17 {offsets = [0, 0, 64], sizes = [8, 8, 32], strides = [1, 1, 1]} : vector<8x8x144xf32> to vector<8x8x32xf32>
    %21 = vector.extract_strided_slice %17 {offsets = [0, 0, 96], sizes = [8, 8, 32], strides = [1, 1, 1]} : vector<8x8x144xf32> to vector<8x8x32xf32>
    %22 = vector.extract_strided_slice %17 {offsets = [0, 0, 128], sizes = [8, 8, 16], strides = [1, 1, 1]} : vector<8x8x144xf32> to vector<8x8x16xf32>
    %cst_13 = arith.constant 0.000000e+00 : f32
    %23 = vector.broadcast %cst_13 : f32 to vector<8x8x16xf32>
    %24 = vector.extract_strided_slice %18 {offsets = [0, 0, 0], sizes = [8, 8, 16], strides = [1, 1, 1]} : vector<8x8x32xf32> to vector<8x8x16xf32>
    %25 = arith.truncf %24 : vector<8x8x16xf32> to vector<8x8x16xbf16>
    %26 = vector.extract_strided_slice %19 {offsets = [0, 0, 0], sizes = [8, 8, 16], strides = [1, 1, 1]} : vector<8x8x32xf32> to vector<8x8x16xf32>
    %27 = arith.truncf %26 : vector<8x8x16xf32> to vector<8x8x16xbf16>
    %28 = vector.extract_strided_slice %20 {offsets = [0, 0, 0], sizes = [8, 8, 16], strides = [1, 1, 1]} : vector<8x8x32xf32> to vector<8x8x16xf32>
    %29 = arith.truncf %28 : vector<8x8x16xf32> to vector<8x8x16xbf16>
    %30 = vector.extract_strided_slice %21 {offsets = [0, 0, 0], sizes = [8, 8, 16], strides = [1, 1, 1]} : vector<8x8x32xf32> to vector<8x8x16xf32>
    "tpu.trace_start"() <{level = 10 : i32, message = "tnh,tmh->tnm"}> : () -> ()
    %cst_14 = arith.constant dense<0.000000e+00> : vector<8x8x8xf32>
    %31 = tpu.matmul %25, %27, %cst_14 {dimension_numbers = #tpu.dot_dimension_numbers<[2], [2], [1], [1], [0, 0, 0, 1, 1, 1], [0], [0]>} : vector<8x8x16xbf16>, vector<8x8x16xbf16>, vector<8x8x8xf32> -> vector<8x8x8xf32>
    "tpu.trace_stop"() : () -> ()
    %cst_15 = arith.constant 2.500000e-01 : f32
    %32 = vector.broadcast %cst_15 : f32 to vector<8x8x8xf32>
    %33 = arith.mulf %31, %32 : vector<8x8x8xf32>
    %cst_16 = arith.constant dense<0xFF800000> : vector<8x8xf32>
    %34 = vector.multi_reduction <maximumf>, %33, %cst_16 [2] : vector<8x8x8xf32> to vector<8x8xf32>
    %35 = vector.shape_cast %34 : vector<8x8xf32> to vector<8x8x1xf32>
    %36 = vector.broadcast %35 : vector<8x8x1xf32> to vector<8x8x8xf32>
    %37 = arith.subf %33, %36 : vector<8x8x8xf32>
    %38 = math.exp %37 : vector<8x8x8xf32>
    %cst_17 = arith.constant dense<0.000000e+00> : vector<8x8xf32>
    %39 = vector.multi_reduction <add>, %38, %cst_17 [2] : vector<8x8x8xf32> to vector<8x8xf32>
    %40 = vector.shape_cast %39 : vector<8x8xf32> to vector<8x8x1xf32>
    %41 = vector.broadcast %40 : vector<8x8x1xf32> to vector<8x8x8xf32>
    %42 = arith.divf %38, %41 : vector<8x8x8xf32>
    %43 = arith.truncf %42 : vector<8x8x8xf32> to vector<8x8x8xbf16>
    "tpu.trace_start"() <{level = 10 : i32, message = "tnm,tmh->tnh"}> : () -> ()
    %cst_18 = arith.constant dense<0.000000e+00> : vector<8x8x16xf32>
    %44 = tpu.matmul %43, %29, %cst_18 {dimension_numbers = #tpu.dot_dimension_numbers<[2], [1], [1], [2], [0, 0, 0, 1, 1, 2], [0], [0]>} : vector<8x8x8xbf16>, vector<8x8x16xbf16>, vector<8x8x16xf32> -> vector<8x8x16xf32>
    "tpu.trace_stop"() : () -> ()
    %45 = arith.negf %30 : vector<8x8x16xf32>
    %46 = math.exp %45 : vector<8x8x16xf32>
    %cst_19 = arith.constant 1.000000e+00 : f32
    %47 = vector.broadcast %cst_19 : f32 to vector<8x8x16xf32>
    %48 = arith.addf %47, %46 : vector<8x8x16xf32>
    %49 = arith.divf %47, %48 : vector<8x8x16xf32>
    %50 = arith.mulf %49, %44 : vector<8x8x16xf32>
    %51 = arith.addf %23, %50 : vector<8x8x16xf32>
    %52 = vector.extract_strided_slice %18 {offsets = [0, 0, 16], sizes = [8, 8, 16], strides = [1, 1, 1]} : vector<8x8x32xf32> to vector<8x8x16xf32>
    %53 = arith.truncf %52 : vector<8x8x16xf32> to vector<8x8x16xbf16>
    %54 = vector.extract_strided_slice %19 {offsets = [0, 0, 16], sizes = [8, 8, 16], strides = [1, 1, 1]} : vector<8x8x32xf32> to vector<8x8x16xf32>
    %55 = arith.truncf %54 : vector<8x8x16xf32> to vector<8x8x16xbf16>
    %56 = vector.extract_strided_slice %20 {offsets = [0, 0, 16], sizes = [8, 8, 16], strides = [1, 1, 1]} : vector<8x8x32xf32> to vector<8x8x16xf32>
    %57 = arith.truncf %56 : vector<8x8x16xf32> to vector<8x8x16xbf16>
    %58 = vector.extract_strided_slice %21 {offsets = [0, 0, 16], sizes = [8, 8, 16], strides = [1, 1, 1]} : vector<8x8x32xf32> to vector<8x8x16xf32>
    "tpu.trace_start"() <{level = 10 : i32, message = "tnh,tmh->tnm"}> : () -> ()
    %cst_20 = arith.constant dense<0.000000e+00> : vector<8x8x8xf32>
    %59 = tpu.matmul %53, %55, %cst_20 {dimension_numbers = #tpu.dot_dimension_numbers<[2], [2], [1], [1], [0, 0, 0, 1, 1, 1], [0], [0]>} : vector<8x8x16xbf16>, vector<8x8x16xbf16>, vector<8x8x8xf32> -> vector<8x8x8xf32>
    "tpu.trace_stop"() : () -> ()
    %cst_21 = arith.constant 2.500000e-01 : f32
    %60 = vector.broadcast %cst_21 : f32 to vector<8x8x8xf32>
    %61 = arith.mulf %59, %60 : vector<8x8x8xf32>
    %cst_22 = arith.constant dense<0xFF800000> : vector<8x8xf32>
    %62 = vector.multi_reduction <maximumf>, %61, %cst_22 [2] : vector<8x8x8xf32> to vector<8x8xf32>
    %63 = vector.shape_cast %62 : vector<8x8xf32> to vector<8x8x1xf32>
    %64 = vector.broadcast %63 : vector<8x8x1xf32> to vector<8x8x8xf32>
    %65 = arith.subf %61, %64 : vector<8x8x8xf32>
    %66 = math.exp %65 : vector<8x8x8xf32>
    %cst_23 = arith.constant dense<0.000000e+00> : vector<8x8xf32>
    %67 = vector.multi_reduction <add>, %66, %cst_23 [2] : vector<8x8x8xf32> to vector<8x8xf32>
    %68 = vector.shape_cast %67 : vector<8x8xf32> to vector<8x8x1xf32>
    %69 = vector.broadcast %68 : vector<8x8x1xf32> to vector<8x8x8xf32>
    %70 = arith.divf %66, %69 : vector<8x8x8xf32>
    %71 = arith.truncf %70 : vector<8x8x8xf32> to vector<8x8x8xbf16>
    "tpu.trace_start"() <{level = 10 : i32, message = "tnm,tmh->tnh"}> : () -> ()
    %cst_24 = arith.constant dense<0.000000e+00> : vector<8x8x16xf32>
    %72 = tpu.matmul %71, %57, %cst_24 {dimension_numbers = #tpu.dot_dimension_numbers<[2], [1], [1], [2], [0, 0, 0, 1, 1, 2], [0], [0]>} : vector<8x8x8xbf16>, vector<8x8x16xbf16>, vector<8x8x16xf32> -> vector<8x8x16xf32>
    "tpu.trace_stop"() : () -> ()
    %73 = arith.negf %58 : vector<8x8x16xf32>
    %74 = math.exp %73 : vector<8x8x16xf32>
    %cst_25 = arith.constant 1.000000e+00 : f32
    %75 = vector.broadcast %cst_25 : f32 to vector<8x8x16xf32>
    %76 = arith.addf %75, %74 : vector<8x8x16xf32>
    %77 = arith.divf %75, %76 : vector<8x8x16xf32>
    %78 = arith.mulf %77, %72 : vector<8x8x16xf32>
    %79 = arith.addf %51, %78 : vector<8x8x16xf32>
    %cst_26 = arith.constant 5.000000e-01 : f32
    %80 = vector.broadcast %cst_26 : f32 to vector<8x8x16xf32>
    %81 = arith.mulf %79, %80 : vector<8x8x16xf32>
    %82 = tpu.concatenate %22, %81 in 2 : vector<8x8x16xf32>, vector<8x8x16xf32> -> vector<8x8x32xf32>
    %c0_27 = arith.constant 0 : index
    %c0_28 = arith.constant 0 : index
    %83 = vector.load %arg6[%c0_27, %c0_28] : memref<32x96xbf16, #tpu.memory_space<vmem>>, vector<32x96xbf16>
    %c0_29 = arith.constant 0 : index
    %c0_30 = arith.constant 0 : index
    %84 = vector.load %arg7[%c0_29, %c0_30] : memref<32x96xbf16, #tpu.memory_space<vmem>>, vector<32x96xbf16>
    %c0_31 = arith.constant 0 : index
    %c0_32 = arith.constant 0 : index
    %85 = vector.load %arg8[%c0_31, %c0_32] : memref<1x96xf32, #tpu.memory_space<vmem>>, vector<1x96xf32>
    %c0_33 = arith.constant 0 : index
    %c0_34 = arith.constant 0 : index
    %86 = vector.load %arg9[%c0_33, %c0_34] : memref<1x96xf32, #tpu.memory_space<vmem>>, vector<1x96xf32>
    %cst_35 = arith.constant 0.000000e+00 : f32
    %87 = vector.broadcast %cst_35 : f32 to vector<8x32xf32>
    %88 = vector.extract_strided_slice %82 {offsets = [0, 0, 0], sizes = [1, 8, 32], strides = [1, 1, 1]} : vector<8x8x32xf32> to vector<1x8x32xf32>
    %89 = vector.shape_cast %88 : vector<1x8x32xf32> to vector<8x32xf32>
    %90 = arith.truncf %89 : vector<8x32xf32> to vector<8x32xbf16>
    %cst_36 = arith.constant dense<0.000000e+00> : vector<8x96xf32>
    %91 = tpu.matmul %90, %83, %cst_36 {dimension_numbers = #tpu.dot_dimension_numbers<[1], [0], [0], [1], [0, 0, 1, 1], [], []>} : vector<8x32xbf16>, vector<32x96xbf16>, vector<8x96xf32> -> vector<8x96xf32>
    %92 = vector.broadcast %85 : vector<1x96xf32> to vector<8x96xf32>
    %93 = arith.addf %91, %92 : vector<8x96xf32>
    %94 = arith.truncf %87 : vector<8x32xf32> to vector<8x32xbf16>
    %cst_37 = arith.constant dense<0.000000e+00> : vector<8x96xf32>
    %95 = tpu.matmul %94, %84, %cst_37 {dimension_numbers = #tpu.dot_dimension_numbers<[1], [0], [0], [1], [0, 0, 1, 1], [], []>} : vector<8x32xbf16>, vector<32x96xbf16>, vector<8x96xf32> -> vector<8x96xf32>
    %96 = vector.broadcast %86 : vector<1x96xf32> to vector<8x96xf32>
    %97 = arith.addf %95, %96 : vector<8x96xf32>
    %98 = vector.extract_strided_slice %93 {offsets = [0, 0], sizes = [8, 32], strides = [1, 1]} : vector<8x96xf32> to vector<8x32xf32>
    %99 = vector.extract_strided_slice %97 {offsets = [0, 0], sizes = [8, 32], strides = [1, 1]} : vector<8x96xf32> to vector<8x32xf32>
    %100 = arith.addf %98, %99 : vector<8x32xf32>
    %101 = arith.negf %100 : vector<8x32xf32>
    %102 = math.exp %101 : vector<8x32xf32>
    %cst_38 = arith.constant 1.000000e+00 : f32
    %103 = vector.broadcast %cst_38 : f32 to vector<8x32xf32>
    %104 = arith.addf %103, %102 : vector<8x32xf32>
    %105 = arith.divf %103, %104 : vector<8x32xf32>
    %106 = vector.extract_strided_slice %93 {offsets = [0, 32], sizes = [8, 32], strides = [1, 1]} : vector<8x96xf32> to vector<8x32xf32>
    %107 = vector.extract_strided_slice %97 {offsets = [0, 32], sizes = [8, 32], strides = [1, 1]} : vector<8x96xf32> to vector<8x32xf32>
    %108 = arith.addf %106, %107 : vector<8x32xf32>
    %109 = arith.negf %108 : vector<8x32xf32>
    %110 = math.exp %109 : vector<8x32xf32>
    %cst_39 = arith.constant 1.000000e+00 : f32
    %111 = vector.broadcast %cst_39 : f32 to vector<8x32xf32>
    %112 = arith.addf %111, %110 : vector<8x32xf32>
    %113 = arith.divf %111, %112 : vector<8x32xf32>
    %114 = vector.extract_strided_slice %93 {offsets = [0, 64], sizes = [8, 32], strides = [1, 1]} : vector<8x96xf32> to vector<8x32xf32>
    %115 = vector.extract_strided_slice %97 {offsets = [0, 64], sizes = [8, 32], strides = [1, 1]} : vector<8x96xf32> to vector<8x32xf32>
    %116 = arith.mulf %105, %115 : vector<8x32xf32>
    %117 = arith.addf %114, %116 : vector<8x32xf32>
    %118 = math.tanh %117 : vector<8x32xf32>
    %cst_40 = arith.constant 1.000000e+00 : f32
    %119 = vector.broadcast %cst_40 : f32 to vector<8x32xf32>
    %120 = arith.subf %119, %113 : vector<8x32xf32>
    %121 = arith.mulf %120, %118 : vector<8x32xf32>
    %122 = arith.mulf %113, %87 : vector<8x32xf32>
    %123 = arith.addf %121, %122 : vector<8x32xf32>
    %124 = vector.extract_strided_slice %82 {offsets = [1, 0, 0], sizes = [1, 8, 32], strides = [1, 1, 1]} : vector<8x8x32xf32> to vector<1x8x32xf32>
    %125 = vector.shape_cast %124 : vector<1x8x32xf32> to vector<8x32xf32>
    %126 = arith.truncf %125 : vector<8x32xf32> to vector<8x32xbf16>
    %cst_41 = arith.constant dense<0.000000e+00> : vector<8x96xf32>
    %127 = tpu.matmul %126, %83, %cst_41 {dimension_numbers = #tpu.dot_dimension_numbers<[1], [0], [0], [1], [0, 0, 1, 1], [], []>} : vector<8x32xbf16>, vector<32x96xbf16>, vector<8x96xf32> -> vector<8x96xf32>
    %128 = vector.broadcast %85 : vector<1x96xf32> to vector<8x96xf32>
    %129 = arith.addf %127, %128 : vector<8x96xf32>
    %130 = arith.truncf %123 : vector<8x32xf32> to vector<8x32xbf16>
    %cst_42 = arith.constant dense<0.000000e+00> : vector<8x96xf32>
    %131 = tpu.matmul %130, %84, %cst_42 {dimension_numbers = #tpu.dot_dimension_numbers<[1], [0], [0], [1], [0, 0, 1, 1], [], []>} : vector<8x32xbf16>, vector<32x96xbf16>, vector<8x96xf32> -> vector<8x96xf32>
    %132 = vector.broadcast %86 : vector<1x96xf32> to vector<8x96xf32>
    %133 = arith.addf %131, %132 : vector<8x96xf32>
    %134 = vector.extract_strided_slice %129 {offsets = [0, 0], sizes = [8, 32], strides = [1, 1]} : vector<8x96xf32> to vector<8x32xf32>
    %135 = vector.extract_strided_slice %133 {offsets = [0, 0], sizes = [8, 32], strides = [1, 1]} : vector<8x96xf32> to vector<8x32xf32>
    %136 = arith.addf %134, %135 : vector<8x32xf32>
    %137 = arith.negf %136 : vector<8x32xf32>
    %138 = math.exp %137 : vector<8x32xf32>
    %cst_43 = arith.constant 1.000000e+00 : f32
    %139 = vector.broadcast %cst_43 : f32 to vector<8x32xf32>
    %140 = arith.addf %139, %138 : vector<8x32xf32>
    %141 = arith.divf %139, %140 : vector<8x32xf32>
    %142 = vector.extract_strided_slice %129 {offsets = [0, 32], sizes = [8, 32], strides = [1, 1]} : vector<8x96xf32> to vector<8x32xf32>
    %143 = vector.extract_strided_slice %133 {offsets = [0, 32], sizes = [8, 32], strides = [1, 1]} : vector<8x96xf32> to vector<8x32xf32>
    %144 = arith.addf %142, %143 : vector<8x32xf32>
    %145 = arith.negf %144 : vector<8x32xf32>
    %146 = math.exp %145 : vector<8x32xf32>
    %cst_44 = arith.constant 1.000000e+00 : f32
    %147 = vector.broadcast %cst_44 : f32 to vector<8x32xf32>
    %148 = arith.addf %147, %146 : vector<8x32xf32>
    %149 = arith.divf %147, %148 : vector<8x32xf32>
    %150 = vector.extract_strided_slice %129 {offsets = [0, 64], sizes = [8, 32], strides = [1, 1]} : vector<8x96xf32> to vector<8x32xf32>
    %151 = vector.extract_strided_slice %133 {offsets = [0, 64], sizes = [8, 32], strides = [1, 1]} : vector<8x96xf32> to vector<8x32xf32>
    %152 = arith.mulf %141, %151 : vector<8x32xf32>
    %153 = arith.addf %150, %152 : vector<8x32xf32>
    %154 = math.tanh %153 : vector<8x32xf32>
    %cst_45 = arith.constant 1.000000e+00 : f32
    %155 = vector.broadcast %cst_45 : f32 to vector<8x32xf32>
    %156 = arith.subf %155, %149 : vector<8x32xf32>
    %157 = arith.mulf %156, %154 : vector<8x32xf32>
    %158 = arith.mulf %149, %123 : vector<8x32xf32>
    %159 = arith.addf %157, %158 : vector<8x32xf32>
    %160 = vector.extract_strided_slice %82 {offsets = [2, 0, 0], sizes = [1, 8, 32], strides = [1, 1, 1]} : vector<8x8x32xf32> to vector<1x8x32xf32>
    %161 = vector.shape_cast %160 : vector<1x8x32xf32> to vector<8x32xf32>
    %162 = arith.truncf %161 : vector<8x32xf32> to vector<8x32xbf16>
    %cst_46 = arith.constant dense<0.000000e+00> : vector<8x96xf32>
    %163 = tpu.matmul %162, %83, %cst_46 {dimension_numbers = #tpu.dot_dimension_numbers<[1], [0], [0], [1], [0, 0, 1, 1], [], []>} : vector<8x32xbf16>, vector<32x96xbf16>, vector<8x96xf32> -> vector<8x96xf32>
    %164 = vector.broadcast %85 : vector<1x96xf32> to vector<8x96xf32>
    %165 = arith.addf %163, %164 : vector<8x96xf32>
    %166 = arith.truncf %159 : vector<8x32xf32> to vector<8x32xbf16>
    %cst_47 = arith.constant dense<0.000000e+00> : vector<8x96xf32>
    %167 = tpu.matmul %166, %84, %cst_47 {dimension_numbers = #tpu.dot_dimension_numbers<[1], [0], [0], [1], [0, 0, 1, 1], [], []>} : vector<8x32xbf16>, vector<32x96xbf16>, vector<8x96xf32> -> vector<8x96xf32>
    %168 = vector.broadcast %86 : vector<1x96xf32> to vector<8x96xf32>
    %169 = arith.addf %167, %168 : vector<8x96xf32>
    %170 = vector.extract_strided_slice %165 {offsets = [0, 0], sizes = [8, 32], strides = [1, 1]} : vector<8x96xf32> to vector<8x32xf32>
    %171 = vector.extract_strided_slice %169 {offsets = [0, 0], sizes = [8, 32], strides = [1, 1]} : vector<8x96xf32> to vector<8x32xf32>
    %172 = arith.addf %170, %171 : vector<8x32xf32>
    %173 = arith.negf %172 : vector<8x32xf32>
    %174 = math.exp %173 : vector<8x32xf32>
    %cst_48 = arith.constant 1.000000e+00 : f32
    %175 = vector.broadcast %cst_48 : f32 to vector<8x32xf32>
    %176 = arith.addf %175, %174 : vector<8x32xf32>
    %177 = arith.divf %175, %176 : vector<8x32xf32>
    %178 = vector.extract_strided_slice %165 {offsets = [0, 32], sizes = [8, 32], strides = [1, 1]} : vector<8x96xf32> to vector<8x32xf32>
    %179 = vector.extract_strided_slice %169 {offsets = [0, 32], sizes = [8, 32], strides = [1, 1]} : vector<8x96xf32> to vector<8x32xf32>
    %180 = arith.addf %178, %179 : vector<8x32xf32>
    %181 = arith.negf %180 : vector<8x32xf32>
    %182 = math.exp %181 : vector<8x32xf32>
    %cst_49 = arith.constant 1.000000e+00 : f32
    %183 = vector.broadcast %cst_49 : f32 to vector<8x32xf32>
    %184 = arith.addf %183, %182 : vector<8x32xf32>
    %185 = arith.divf %183, %184 : vector<8x32xf32>
    %186 = vector.extract_strided_slice %165 {offsets = [0, 64], sizes = [8, 32], strides = [1, 1]} : vector<8x96xf32> to vector<8x32xf32>
    %187 = vector.extract_strided_slice %169 {offsets = [0, 64], sizes = [8, 32], strides = [1, 1]} : vector<8x96xf32> to vector<8x32xf32>
    %188 = arith.mulf %177, %187 : vector<8x32xf32>
    %189 = arith.addf %186, %188 : vector<8x32xf32>
    %190 = math.tanh %189 : vector<8x32xf32>
    %cst_50 = arith.constant 1.000000e+00 : f32
    %191 = vector.broadcast %cst_50 : f32 to vector<8x32xf32>
    %192 = arith.subf %191, %185 : vector<8x32xf32>
    %193 = arith.mulf %192, %190 : vector<8x32xf32>
    %194 = arith.mulf %185, %159 : vector<8x32xf32>
    %195 = arith.addf %193, %194 : vector<8x32xf32>
    %196 = vector.extract_strided_slice %82 {offsets = [3, 0, 0], sizes = [1, 8, 32], strides = [1, 1, 1]} : vector<8x8x32xf32> to vector<1x8x32xf32>
    %197 = vector.shape_cast %196 : vector<1x8x32xf32> to vector<8x32xf32>
    %198 = arith.truncf %197 : vector<8x32xf32> to vector<8x32xbf16>
    %cst_51 = arith.constant dense<0.000000e+00> : vector<8x96xf32>
    %199 = tpu.matmul %198, %83, %cst_51 {dimension_numbers = #tpu.dot_dimension_numbers<[1], [0], [0], [1], [0, 0, 1, 1], [], []>} : vector<8x32xbf16>, vector<32x96xbf16>, vector<8x96xf32> -> vector<8x96xf32>
    %200 = vector.broadcast %85 : vector<1x96xf32> to vector<8x96xf32>
    %201 = arith.addf %199, %200 : vector<8x96xf32>
    %202 = arith.truncf %195 : vector<8x32xf32> to vector<8x32xbf16>
    %cst_52 = arith.constant dense<0.000000e+00> : vector<8x96xf32>
    %203 = tpu.matmul %202, %84, %cst_52 {dimension_numbers = #tpu.dot_dimension_numbers<[1], [0], [0], [1], [0, 0, 1, 1], [], []>} : vector<8x32xbf16>, vector<32x96xbf16>, vector<8x96xf32> -> vector<8x96xf32>
    %204 = vector.broadcast %86 : vector<1x96xf32> to vector<8x96xf32>
    %205 = arith.addf %203, %204 : vector<8x96xf32>
    %206 = vector.extract_strided_slice %201 {offsets = [0, 0], sizes = [8, 32], strides = [1, 1]} : vector<8x96xf32> to vector<8x32xf32>
    %207 = vector.extract_strided_slice %205 {offsets = [0, 0], sizes = [8, 32], strides = [1, 1]} : vector<8x96xf32> to vector<8x32xf32>
    %208 = arith.addf %206, %207 : vector<8x32xf32>
    %209 = arith.negf %208 : vector<8x32xf32>
    %210 = math.exp %209 : vector<8x32xf32>
    %cst_53 = arith.constant 1.000000e+00 : f32
    %211 = vector.broadcast %cst_53 : f32 to vector<8x32xf32>
    %212 = arith.addf %211, %210 : vector<8x32xf32>
    %213 = arith.divf %211, %212 : vector<8x32xf32>
    %214 = vector.extract_strided_slice %201 {offsets = [0, 32], sizes = [8, 32], strides = [1, 1]} : vector<8x96xf32> to vector<8x32xf32>
    %215 = vector.extract_strided_slice %205 {offsets = [0, 32], sizes = [8, 32], strides = [1, 1]} : vector<8x96xf32> to vector<8x32xf32>
    %216 = arith.addf %214, %215 : vector<8x32xf32>
    %217 = arith.negf %216 : vector<8x32xf32>
    %218 = math.exp %217 : vector<8x32xf32>
    %cst_54 = arith.constant 1.000000e+00 : f32
    %219 = vector.broadcast %cst_54 : f32 to vector<8x32xf32>
    %220 = arith.addf %219, %218 : vector<8x32xf32>
    %221 = arith.divf %219, %220 : vector<8x32xf32>
    %222 = vector.extract_strided_slice %201 {offsets = [0, 64], sizes = [8, 32], strides = [1, 1]} : vector<8x96xf32> to vector<8x32xf32>
    %223 = vector.extract_strided_slice %205 {offsets = [0, 64], sizes = [8, 32], strides = [1, 1]} : vector<8x96xf32> to vector<8x32xf32>
    %224 = arith.mulf %213, %223 : vector<8x32xf32>
    %225 = arith.addf %222, %224 : vector<8x32xf32>
    %226 = math.tanh %225 : vector<8x32xf32>
    %cst_55 = arith.constant 1.000000e+00 : f32
    %227 = vector.broadcast %cst_55 : f32 to vector<8x32xf32>
    %228 = arith.subf %227, %221 : vector<8x32xf32>
    %229 = arith.mulf %228, %226 : vector<8x32xf32>
    %230 = arith.mulf %221, %195 : vector<8x32xf32>
    %231 = arith.addf %229, %230 : vector<8x32xf32>
    %232 = vector.extract_strided_slice %82 {offsets = [4, 0, 0], sizes = [1, 8, 32], strides = [1, 1, 1]} : vector<8x8x32xf32> to vector<1x8x32xf32>
    %233 = vector.shape_cast %232 : vector<1x8x32xf32> to vector<8x32xf32>
    %234 = arith.truncf %233 : vector<8x32xf32> to vector<8x32xbf16>
    %cst_56 = arith.constant dense<0.000000e+00> : vector<8x96xf32>
    %235 = tpu.matmul %234, %83, %cst_56 {dimension_numbers = #tpu.dot_dimension_numbers<[1], [0], [0], [1], [0, 0, 1, 1], [], []>} : vector<8x32xbf16>, vector<32x96xbf16>, vector<8x96xf32> -> vector<8x96xf32>
    %236 = vector.broadcast %85 : vector<1x96xf32> to vector<8x96xf32>
    %237 = arith.addf %235, %236 : vector<8x96xf32>
    %238 = arith.truncf %231 : vector<8x32xf32> to vector<8x32xbf16>
    %cst_57 = arith.constant dense<0.000000e+00> : vector<8x96xf32>
    %239 = tpu.matmul %238, %84, %cst_57 {dimension_numbers = #tpu.dot_dimension_numbers<[1], [0], [0], [1], [0, 0, 1, 1], [], []>} : vector<8x32xbf16>, vector<32x96xbf16>, vector<8x96xf32> -> vector<8x96xf32>
    %240 = vector.broadcast %86 : vector<1x96xf32> to vector<8x96xf32>
    %241 = arith.addf %239, %240 : vector<8x96xf32>
    %242 = vector.extract_strided_slice %237 {offsets = [0, 0], sizes = [8, 32], strides = [1, 1]} : vector<8x96xf32> to vector<8x32xf32>
    %243 = vector.extract_strided_slice %241 {offsets = [0, 0], sizes = [8, 32], strides = [1, 1]} : vector<8x96xf32> to vector<8x32xf32>
    %244 = arith.addf %242, %243 : vector<8x32xf32>
    %245 = arith.negf %244 : vector<8x32xf32>
    %246 = math.exp %245 : vector<8x32xf32>
    %cst_58 = arith.constant 1.000000e+00 : f32
    %247 = vector.broadcast %cst_58 : f32 to vector<8x32xf32>
    %248 = arith.addf %247, %246 : vector<8x32xf32>
    %249 = arith.divf %247, %248 : vector<8x32xf32>
    %250 = vector.extract_strided_slice %237 {offsets = [0, 32], sizes = [8, 32], strides = [1, 1]} : vector<8x96xf32> to vector<8x32xf32>
    %251 = vector.extract_strided_slice %241 {offsets = [0, 32], sizes = [8, 32], strides = [1, 1]} : vector<8x96xf32> to vector<8x32xf32>
    %252 = arith.addf %250, %251 : vector<8x32xf32>
    %253 = arith.negf %252 : vector<8x32xf32>
    %254 = math.exp %253 : vector<8x32xf32>
    %cst_59 = arith.constant 1.000000e+00 : f32
    %255 = vector.broadcast %cst_59 : f32 to vector<8x32xf32>
    %256 = arith.addf %255, %254 : vector<8x32xf32>
    %257 = arith.divf %255, %256 : vector<8x32xf32>
    %258 = vector.extract_strided_slice %237 {offsets = [0, 64], sizes = [8, 32], strides = [1, 1]} : vector<8x96xf32> to vector<8x32xf32>
    %259 = vector.extract_strided_slice %241 {offsets = [0, 64], sizes = [8, 32], strides = [1, 1]} : vector<8x96xf32> to vector<8x32xf32>
    %260 = arith.mulf %249, %259 : vector<8x32xf32>
    %261 = arith.addf %258, %260 : vector<8x32xf32>
    %262 = math.tanh %261 : vector<8x32xf32>
    %cst_60 = arith.constant 1.000000e+00 : f32
    %263 = vector.broadcast %cst_60 : f32 to vector<8x32xf32>
    %264 = arith.subf %263, %257 : vector<8x32xf32>
    %265 = arith.mulf %264, %262 : vector<8x32xf32>
    %266 = arith.mulf %257, %231 : vector<8x32xf32>
    %267 = arith.addf %265, %266 : vector<8x32xf32>
    %268 = vector.extract_strided_slice %82 {offsets = [5, 0, 0], sizes = [1, 8, 32], strides = [1, 1, 1]} : vector<8x8x32xf32> to vector<1x8x32xf32>
    %269 = vector.shape_cast %268 : vector<1x8x32xf32> to vector<8x32xf32>
    %270 = arith.truncf %269 : vector<8x32xf32> to vector<8x32xbf16>
    %cst_61 = arith.constant dense<0.000000e+00> : vector<8x96xf32>
    %271 = tpu.matmul %270, %83, %cst_61 {dimension_numbers = #tpu.dot_dimension_numbers<[1], [0], [0], [1], [0, 0, 1, 1], [], []>} : vector<8x32xbf16>, vector<32x96xbf16>, vector<8x96xf32> -> vector<8x96xf32>
    %272 = vector.broadcast %85 : vector<1x96xf32> to vector<8x96xf32>
    %273 = arith.addf %271, %272 : vector<8x96xf32>
    %274 = arith.truncf %267 : vector<8x32xf32> to vector<8x32xbf16>
    %cst_62 = arith.constant dense<0.000000e+00> : vector<8x96xf32>
    %275 = tpu.matmul %274, %84, %cst_62 {dimension_numbers = #tpu.dot_dimension_numbers<[1], [0], [0], [1], [0, 0, 1, 1], [], []>} : vector<8x32xbf16>, vector<32x96xbf16>, vector<8x96xf32> -> vector<8x96xf32>
    %276 = vector.broadcast %86 : vector<1x96xf32> to vector<8x96xf32>
    %277 = arith.addf %275, %276 : vector<8x96xf32>
    %278 = vector.extract_strided_slice %273 {offsets = [0, 0], sizes = [8, 32], strides = [1, 1]} : vector<8x96xf32> to vector<8x32xf32>
    %279 = vector.extract_strided_slice %277 {offsets = [0, 0], sizes = [8, 32], strides = [1, 1]} : vector<8x96xf32> to vector<8x32xf32>
    %280 = arith.addf %278, %279 : vector<8x32xf32>
    %281 = arith.negf %280 : vector<8x32xf32>
    %282 = math.exp %281 : vector<8x32xf32>
    %cst_63 = arith.constant 1.000000e+00 : f32
    %283 = vector.broadcast %cst_63 : f32 to vector<8x32xf32>
    %284 = arith.addf %283, %282 : vector<8x32xf32>
    %285 = arith.divf %283, %284 : vector<8x32xf32>
    %286 = vector.extract_strided_slice %273 {offsets = [0, 32], sizes = [8, 32], strides = [1, 1]} : vector<8x96xf32> to vector<8x32xf32>
    %287 = vector.extract_strided_slice %277 {offsets = [0, 32], sizes = [8, 32], strides = [1, 1]} : vector<8x96xf32> to vector<8x32xf32>
    %288 = arith.addf %286, %287 : vector<8x32xf32>
    %289 = arith.negf %288 : vector<8x32xf32>
    %290 = math.exp %289 : vector<8x32xf32>
    %cst_64 = arith.constant 1.000000e+00 : f32
    %291 = vector.broadcast %cst_64 : f32 to vector<8x32xf32>
    %292 = arith.addf %291, %290 : vector<8x32xf32>
    %293 = arith.divf %291, %292 : vector<8x32xf32>
    %294 = vector.extract_strided_slice %273 {offsets = [0, 64], sizes = [8, 32], strides = [1, 1]} : vector<8x96xf32> to vector<8x32xf32>
    %295 = vector.extract_strided_slice %277 {offsets = [0, 64], sizes = [8, 32], strides = [1, 1]} : vector<8x96xf32> to vector<8x32xf32>
    %296 = arith.mulf %285, %295 : vector<8x32xf32>
    %297 = arith.addf %294, %296 : vector<8x32xf32>
    %298 = math.tanh %297 : vector<8x32xf32>
    %cst_65 = arith.constant 1.000000e+00 : f32
    %299 = vector.broadcast %cst_65 : f32 to vector<8x32xf32>
    %300 = arith.subf %299, %293 : vector<8x32xf32>
    %301 = arith.mulf %300, %298 : vector<8x32xf32>
    %302 = arith.mulf %293, %267 : vector<8x32xf32>
    %303 = arith.addf %301, %302 : vector<8x32xf32>
    %304 = vector.extract_strided_slice %82 {offsets = [6, 0, 0], sizes = [1, 8, 32], strides = [1, 1, 1]} : vector<8x8x32xf32> to vector<1x8x32xf32>
    %305 = vector.shape_cast %304 : vector<1x8x32xf32> to vector<8x32xf32>
    %306 = arith.truncf %305 : vector<8x32xf32> to vector<8x32xbf16>
    %cst_66 = arith.constant dense<0.000000e+00> : vector<8x96xf32>
    %307 = tpu.matmul %306, %83, %cst_66 {dimension_numbers = #tpu.dot_dimension_numbers<[1], [0], [0], [1], [0, 0, 1, 1], [], []>} : vector<8x32xbf16>, vector<32x96xbf16>, vector<8x96xf32> -> vector<8x96xf32>
    %308 = vector.broadcast %85 : vector<1x96xf32> to vector<8x96xf32>
    %309 = arith.addf %307, %308 : vector<8x96xf32>
    %310 = arith.truncf %303 : vector<8x32xf32> to vector<8x32xbf16>
    %cst_67 = arith.constant dense<0.000000e+00> : vector<8x96xf32>
    %311 = tpu.matmul %310, %84, %cst_67 {dimension_numbers = #tpu.dot_dimension_numbers<[1], [0], [0], [1], [0, 0, 1, 1], [], []>} : vector<8x32xbf16>, vector<32x96xbf16>, vector<8x96xf32> -> vector<8x96xf32>
    %312 = vector.broadcast %86 : vector<1x96xf32> to vector<8x96xf32>
    %313 = arith.addf %311, %312 : vector<8x96xf32>
    %314 = vector.extract_strided_slice %309 {offsets = [0, 0], sizes = [8, 32], strides = [1, 1]} : vector<8x96xf32> to vector<8x32xf32>
    %315 = vector.extract_strided_slice %313 {offsets = [0, 0], sizes = [8, 32], strides = [1, 1]} : vector<8x96xf32> to vector<8x32xf32>
    %316 = arith.addf %314, %315 : vector<8x32xf32>
    %317 = arith.negf %316 : vector<8x32xf32>
    %318 = math.exp %317 : vector<8x32xf32>
    %cst_68 = arith.constant 1.000000e+00 : f32
    %319 = vector.broadcast %cst_68 : f32 to vector<8x32xf32>
    %320 = arith.addf %319, %318 : vector<8x32xf32>
    %321 = arith.divf %319, %320 : vector<8x32xf32>
    %322 = vector.extract_strided_slice %309 {offsets = [0, 32], sizes = [8, 32], strides = [1, 1]} : vector<8x96xf32> to vector<8x32xf32>
    %323 = vector.extract_strided_slice %313 {offsets = [0, 32], sizes = [8, 32], strides = [1, 1]} : vector<8x96xf32> to vector<8x32xf32>
    %324 = arith.addf %322, %323 : vector<8x32xf32>
    %325 = arith.negf %324 : vector<8x32xf32>
    %326 = math.exp %325 : vector<8x32xf32>
    %cst_69 = arith.constant 1.000000e+00 : f32
    %327 = vector.broadcast %cst_69 : f32 to vector<8x32xf32>
    %328 = arith.addf %327, %326 : vector<8x32xf32>
    %329 = arith.divf %327, %328 : vector<8x32xf32>
    %330 = vector.extract_strided_slice %309 {offsets = [0, 64], sizes = [8, 32], strides = [1, 1]} : vector<8x96xf32> to vector<8x32xf32>
    %331 = vector.extract_strided_slice %313 {offsets = [0, 64], sizes = [8, 32], strides = [1, 1]} : vector<8x96xf32> to vector<8x32xf32>
    %332 = arith.mulf %321, %331 : vector<8x32xf32>
    %333 = arith.addf %330, %332 : vector<8x32xf32>
    %334 = math.tanh %333 : vector<8x32xf32>
    %cst_70 = arith.constant 1.000000e+00 : f32
    %335 = vector.broadcast %cst_70 : f32 to vector<8x32xf32>
    %336 = arith.subf %335, %329 : vector<8x32xf32>
    %337 = arith.mulf %336, %334 : vector<8x32xf32>
    %338 = arith.mulf %329, %303 : vector<8x32xf32>
    %339 = arith.addf %337, %338 : vector<8x32xf32>
    %340 = vector.extract_strided_slice %82 {offsets = [7, 0, 0], sizes = [1, 8, 32], strides = [1, 1, 1]} : vector<8x8x32xf32> to vector<1x8x32xf32>
    %341 = vector.shape_cast %340 : vector<1x8x32xf32> to vector<8x32xf32>
    %342 = arith.truncf %341 : vector<8x32xf32> to vector<8x32xbf16>
    %cst_71 = arith.constant dense<0.000000e+00> : vector<8x96xf32>
    %343 = tpu.matmul %342, %83, %cst_71 {dimension_numbers = #tpu.dot_dimension_numbers<[1], [0], [0], [1], [0, 0, 1, 1], [], []>} : vector<8x32xbf16>, vector<32x96xbf16>, vector<8x96xf32> -> vector<8x96xf32>
    %344 = vector.broadcast %85 : vector<1x96xf32> to vector<8x96xf32>
    %345 = arith.addf %343, %344 : vector<8x96xf32>
    %346 = arith.truncf %339 : vector<8x32xf32> to vector<8x32xbf16>
    %cst_72 = arith.constant dense<0.000000e+00> : vector<8x96xf32>
    %347 = tpu.matmul %346, %84, %cst_72 {dimension_numbers = #tpu.dot_dimension_numbers<[1], [0], [0], [1], [0, 0, 1, 1], [], []>} : vector<8x32xbf16>, vector<32x96xbf16>, vector<8x96xf32> -> vector<8x96xf32>
    %348 = vector.broadcast %86 : vector<1x96xf32> to vector<8x96xf32>
    %349 = arith.addf %347, %348 : vector<8x96xf32>
    %350 = vector.extract_strided_slice %345 {offsets = [0, 0], sizes = [8, 32], strides = [1, 1]} : vector<8x96xf32> to vector<8x32xf32>
    %351 = vector.extract_strided_slice %349 {offsets = [0, 0], sizes = [8, 32], strides = [1, 1]} : vector<8x96xf32> to vector<8x32xf32>
    %352 = arith.addf %350, %351 : vector<8x32xf32>
    %353 = arith.negf %352 : vector<8x32xf32>
    %354 = math.exp %353 : vector<8x32xf32>
    %cst_73 = arith.constant 1.000000e+00 : f32
    %355 = vector.broadcast %cst_73 : f32 to vector<8x32xf32>
    %356 = arith.addf %355, %354 : vector<8x32xf32>
    %357 = arith.divf %355, %356 : vector<8x32xf32>
    %358 = vector.extract_strided_slice %345 {offsets = [0, 32], sizes = [8, 32], strides = [1, 1]} : vector<8x96xf32> to vector<8x32xf32>
    %359 = vector.extract_strided_slice %349 {offsets = [0, 32], sizes = [8, 32], strides = [1, 1]} : vector<8x96xf32> to vector<8x32xf32>
    %360 = arith.addf %358, %359 : vector<8x32xf32>
    %361 = arith.negf %360 : vector<8x32xf32>
    %362 = math.exp %361 : vector<8x32xf32>
    %cst_74 = arith.constant 1.000000e+00 : f32
    %363 = vector.broadcast %cst_74 : f32 to vector<8x32xf32>
    %364 = arith.addf %363, %362 : vector<8x32xf32>
    %365 = arith.divf %363, %364 : vector<8x32xf32>
    %366 = vector.extract_strided_slice %345 {offsets = [0, 64], sizes = [8, 32], strides = [1, 1]} : vector<8x96xf32> to vector<8x32xf32>
    %367 = vector.extract_strided_slice %349 {offsets = [0, 64], sizes = [8, 32], strides = [1, 1]} : vector<8x96xf32> to vector<8x32xf32>
    %368 = arith.mulf %357, %367 : vector<8x32xf32>
    %369 = arith.addf %366, %368 : vector<8x32xf32>
    %370 = math.tanh %369 : vector<8x32xf32>
    %cst_75 = arith.constant 1.000000e+00 : f32
    %371 = vector.broadcast %cst_75 : f32 to vector<8x32xf32>
    %372 = arith.subf %371, %365 : vector<8x32xf32>
    %373 = arith.mulf %372, %370 : vector<8x32xf32>
    %374 = arith.mulf %365, %339 : vector<8x32xf32>
    %375 = arith.addf %373, %374 : vector<8x32xf32>
    %c0_76 = arith.constant 0 : index
    %c0_77 = arith.constant 0 : index
    %376 = vector.load %arg10[%c0_76, %c0_77] : memref<8x32xf32, #tpu.memory_space<vmem>>, vector<8x32xf32>
    %377 = arith.mulf %375, %376 : vector<8x32xf32>
    %cst_78 = arith.constant dense<0.000000e+00> : vector<8xf32>
    %378 = vector.multi_reduction <add>, %377, %cst_78 [1] : vector<8x32xf32> to vector<8xf32>
    %379 = vector.shape_cast %378 : vector<8xf32> to vector<8x1xf32>
    %cst_79 = arith.constant dense<0.000000e+00> : vector<1xf32>
    %380 = vector.multi_reduction <add>, %379, %cst_79 [0] : vector<8x1xf32> to vector<1xf32>
    %381 = vector.shape_cast %380 : vector<1xf32> to vector<1x1xf32>
    %c0_80 = arith.constant 0 : index
    %c0_81 = arith.constant 0 : index
    %382 = vector.load %arg11[%c0_80, %c0_81] : memref<1x1xf32, #tpu.memory_space<vmem>>, vector<1x1xf32>
    %383 = arith.addf %381, %382 : vector<1x1xf32>
    %384 = vector.shape_cast %383 : vector<1x1xf32> to vector<1x1x1xf32>
    %c0_82 = arith.constant 0 : index
    %c0_83 = arith.constant 0 : index
    %c0_84 = arith.constant 0 : index
    %385 = vector.load %arg12[%c0_82, %c0_83, %c0_84] : memref<1x1x1xf32, #tpu.memory_space<vmem>>, vector<1x1x1xf32>
    tpu.vector_store %arg12[%c0_82, %c0_83, %c0_84], %384 {strides = array<i32>} : memref<1x1x1xf32, #tpu.memory_space<vmem>>, vector<1x1x1xf32>,
    return
  }
  func.func @transform_0(%arg0: i32) -> (i32, i32, i32, i32) {
    %c0_i32 = arith.constant 0 : i32
    %c0_i32_0 = arith.constant 0 : i32
    %c0_i32_1 = arith.constant 0 : i32
    %c0_i32_2 = arith.constant 0 : i32
    return %arg0, %c0_i32, %c0_i32_0, %c0_i32_1 : i32, i32, i32, i32
  }
  func.func @transform_1(%arg0: i32) -> (i32, i32) {
    %c0_i32 = arith.constant 0 : i32
    %c0_i32_0 = arith.constant 0 : i32
    %c0_i32_1 = arith.constant 0 : i32
    return %c0_i32, %c0_i32_0 : i32, i32
  }
  func.func @transform_2(%arg0: i32) -> (i32, i32) {
    %c0_i32 = arith.constant 0 : i32
    %c0_i32_0 = arith.constant 0 : i32
    %c0_i32_1 = arith.constant 0 : i32
    return %c0_i32, %c0_i32_0 : i32, i32
  }
  func.func @transform_3(%arg0: i32) -> (i32, i32) {
    %c0_i32 = arith.constant 0 : i32
    %c0_i32_0 = arith.constant 0 : i32
    %c0_i32_1 = arith.constant 0 : i32
    return %c0_i32, %c0_i32_0 : i32, i32
  }
  func.func @transform_4(%arg0: i32) -> (i32, i32) {
    %c0_i32 = arith.constant 0 : i32
    %c0_i32_0 = arith.constant 0 : i32
    %c0_i32_1 = arith.constant 0 : i32
    return %c0_i32, %c0_i32_0 : i32, i32
  }
  func.func @transform_5(%arg0: i32) -> (i32, i32) {
    %c0_i32 = arith.constant 0 : i32
    %c0_i32_0 = arith.constant 0 : i32
    %c0_i32_1 = arith.constant 0 : i32
    return %c0_i32, %c0_i32_0 : i32, i32
  }
  func.func @transform_6(%arg0: i32) -> (i32, i32) {
    %c0_i32 = arith.constant 0 : i32
    %c0_i32_0 = arith.constant 0 : i32
    %c0_i32_1 = arith.constant 0 : i32
    return %c0_i32, %c0_i32_0 : i32, i32
  }
  func.func @transform_7(%arg0: i32) -> (i32, i32) {
    %c0_i32 = arith.constant 0 : i32
    %c0_i32_0 = arith.constant 0 : i32
    %c0_i32_1 = arith.constant 0 : i32
    return %c0_i32, %c0_i32_0 : i32, i32
  }
  func.func @transform_8(%arg0: i32) -> (i32, i32) {
    %c0_i32 = arith.constant 0 : i32
    %c0_i32_0 = arith.constant 0 : i32
    %c0_i32_1 = arith.constant 0 : i32
    return %c0_i32, %c0_i32_0 : i32, i32
  }
  func.func @transform_9(%arg0: i32) -> (i32, i32) {
    %c0_i32 = arith.constant 0 : i32
    %c0_i32_0 = arith.constant 0 : i32
    %c0_i32_1 = arith.constant 0 : i32
    return %c0_i32, %c0_i32_0 : i32, i32
  }
  func.func @transform_10(%arg0: i32) -> (i32, i32) {
    %c0_i32 = arith.constant 0 : i32
    %c0_i32_0 = arith.constant 0 : i32
    %c0_i32_1 = arith.constant 0 : i32
    return %c0_i32, %c0_i32_0 : i32, i32
  }
  func.func @transform_11(%arg0: i32) -> (i32, i32, i32) {
    %c0_i32 = arith.constant 0 : i32
    %c0_i32_0 = arith.constant 0 : i32
    %c0_i32_1 = arith.constant 0 : i32
    return %arg0, %c0_i32, %c0_i32_0 : i32, i32, i32
  }
}

</mosaic_0001>

<llo_original>
// kernel: bapm_forward.1
$region0: #{bapm_forward.1}
  #allocation0 [shape = 'u32[]', space=smem, size = 0x4, offset = 0x4, fixed_abs, tag = 'smem constant byte address 0x4 - core index']
  #allocation1 [shape = 'u32[72,128]{1,0:T(1,128)}', space=vmem, size = 0x9000, scoped, tag = 'internal scratch']
  #allocation2 [shape = 'f32[1,1]{1,0:T(1,128)S(1)}', space=vmem, size = 0x200, scoped, tag = 'scoped memory for bapm_forward.1']
  %s0 = inlined_call_operand.vmem [shape: f32[2,8,8,8], index: 0, kind: input, shape index: {}]
  %s1 = inlined_call_operand.vmem [shape: bf16[8,16], index: 1, kind: input, shape index: {}]
  %s2 = inlined_call_operand.vmem [shape: f32[1,16], index: 2, kind: input, shape index: {}]
  %s3 = inlined_call_operand.vmem [shape: bf16[16,144], index: 3, kind: input, shape index: {}]
  %s4 = inlined_call_operand.vmem [shape: f32[1,144], index: 4, kind: input, shape index: {}]
  %s5 = inlined_call_operand.vmem [shape: bf16[32,96], index: 5, kind: input, shape index: {}]
  %s6 = inlined_call_operand.vmem [shape: bf16[32,96], index: 6, kind: input, shape index: {}]
  %s7 = inlined_call_operand.vmem [shape: f32[1,96], index: 7, kind: input, shape index: {}]
  %s8 = inlined_call_operand.vmem [shape: f32[1,96], index: 8, kind: input, shape index: {}]
  %s9 = inlined_call_operand.vmem [shape: f32[8,32], index: 9, kind: input, shape index: {}]
  %s10 = inlined_call_operand.<no memory space> [shape: f32[1,1], index: 10, kind: input, shape index: {}]
  %s11 = inlined_call_operand.vmem [shape: f32[2,1,1], index: 11, kind: output, shape index: {}]
  %s12 = sld [smem:[#allocation0]]
  $region77: #{bapm_forward.1} parent=0
    _
  %s14 = ssub.s32 1, %s12
  %s15 = scalar_select 0, %s14, %s12
  %v16 = vstv %s10
  %17 = vst [vmem:[#allocation2] sm:$0x1] %v16
  loop: start=0, step=1, limit=4
  $region2: #{bapm_forward.1} parent=0 // loop_pre_header
    _
  $region3: #{bapm_forward.1} parent=0 // loop_header
    %s19 = sphi 0, %s23
    %p20 = scmp.ge.s32.totalorder %s19, 4
    %s29 = sphi 0, %s31
    %s32 = sphi 0, %s29
    %s33 = sphi 0, %s32
    %s49 = sphi 0, %s33
    %s53 = sphi 0, %s53
    %s55 = sphi 0, %s53
    %s56 = sphi 0, %s55
    %s70 = sphi 0, %s56
    %s74 = sphi 0, %s74
    %s76 = sphi 0, %s74
    %s77 = sphi 0, %s76
    %s91 = sphi 0, %s77
    %s95 = sphi 0, %s95
    %s97 = sphi 0, %s95
    %s98 = sphi 0, %s97
    %s112 = sphi 0, %s98
    %s116 = sphi 0, %s116
    %s118 = sphi 0, %s116
    %s119 = sphi 0, %s118
    %s133 = sphi 0, %s119
    %s137 = sphi 0, %s137
    %s139 = sphi 0, %s137
    %s140 = sphi 0, %s139
    %s154 = sphi 0, %s140
    %s158 = sphi 0, %s158
    %s160 = sphi 0, %s158
    %s161 = sphi 0, %s160
    %s175 = sphi 0, %s161
    %s179 = sphi 0, %s179
    %s181 = sphi 0, %s179
    %s182 = sphi 0, %s181
    %s196 = sphi 0, %s182
    %s200 = sphi 0, %s200
    %s202 = sphi 0, %s200
    %s203 = sphi 0, %s202
    %s217 = sphi 0, %s203
    %s221 = sphi 0, %s221
    %s223 = sphi 0, %s221
    %s224 = sphi 0, %s223
    %s238 = sphi 0, %s224
    %s242 = sphi 0, %s242
    %s244 = sphi 0, %s242
    %s245 = sphi 0, %s244
    %s259 = sphi 0, %s245
    %s265 = sphi 0, %s267
    %s268 = sphi 0, %s265
    %s269 = sphi 0, %s268
    %s285 = sphi 0, %s269
  $region4: #{bapm_forward.1} parent=0 // loop_header_branch
    %22 = sbr.rel (%p20) target = $region8
  $region5: #{bapm_forward.1} parent=0 // loop_body
    %s24 = ssub.s32 %s19, 1
    %s25 = ssub.s32 %s19, 2
    %s26 = sadd.s32 %s19, 1
    %s27 = ssub.s32 %s19, %s26
    %p28 = scmp.eq.s32.totalorder %s27, 0
    %s30 = sadd.s32 %s29, 1
    %s31 = scalar_select %p28, %s29, %s30
    %p34 = pneg %p28
    %p35 = scmp.eq.s32.totalorder %s19, 1
    %p36 = por %p34, %p35
    %p37 = scmp.ne.s32.totalorder %s29, %s32
    %p38 = scmp.eq.s32.totalorder %s19, 0
    %p39 = por %p37, %p38
    %p40 = scmp.ne.s32.totalorder %s29, %s32
    %p41 = scmp.eq.s32.totalorder %s24, 1
    %p42 = por %p40, %p41
    %p43 = scmp.ne.s32.totalorder %s32, %s33
    %p44 = scmp.eq.s32.totalorder %s24, 0
    %p45 = por %p43, %p44
    %p46 = scmp.ne.s32.totalorder %s32, %s33
    %p47 = scmp.eq.s32.totalorder %s25, 1
    %p48 = por %p46, %p47
    %p50 = scmp.ne.s32.totalorder %s33, %s49
    %p51 = scmp.eq.s32.totalorder %s25, 0
    %p52 = por %p50, %p51
    %s54 = sadd.s32 %s53, 1
    %p57 = scmp.eq.s32.totalorder %s19, 1
    %p58 = scmp.ne.s32.totalorder %s53, %s55
    %p59 = scmp.eq.s32.totalorder %s19, 0
    %p60 = por %p58, %p59
    %p61 = scmp.ne.s32.totalorder %s53, %s55
    %p62 = scmp.eq.s32.totalorder %s24, 1
    %p63 = por %p61, %p62
    %p64 = scmp.ne.s32.totalorder %s55, %s56
    %p65 = scmp.eq.s32.totalorder %s24, 0
    %p66 = por %p64, %p65
    %p67 = scmp.ne.s32.totalorder %s55, %s56
    %p68 = scmp.eq.s32.totalorder %s25, 1
    %p69 = por %p67, %p68
    %p71 = scmp.ne.s32.totalorder %s56, %s70
    %p72 = scmp.eq.s32.totalorder %s25, 0
    %p73 = por %p71, %p72
    %s75 = sadd.s32 %s74, 1
    %p78 = scmp.eq.s32.totalorder %s19, 1
    %p79 = scmp.ne.s32.totalorder %s74, %s76
    %p80 = scmp.eq.s32.totalorder %s19, 0
    %p81 = por %p79, %p80
    %p82 = scmp.ne.s32.totalorder %s74, %s76
    %p83 = scmp.eq.s32.totalorder %s24, 1
    %p84 = por %p82, %p83
    %p85 = scmp.ne.s32.totalorder %s76, %s77
    %p86 = scmp.eq.s32.totalorder %s24, 0
    %p87 = por %p85, %p86
    %p88 = scmp.ne.s32.totalorder %s76, %s77
    %p89 = scmp.eq.s32.totalorder %s25, 1
    %p90 = por %p88, %p89
    %p92 = scmp.ne.s32.totalorder %s77, %s91
    %p93 = scmp.eq.s32.totalorder %s25, 0
    %p94 = por %p92, %p93
    %s96 = sadd.s32 %s95, 1
    %p99 = scmp.eq.s32.totalorder %s19, 1
    %p100 = scmp.ne.s32.totalorder %s95, %s97
    %p101 = scmp.eq.s32.totalorder %s19, 0
    %p102 = por %p100, %p101
    %p103 = scmp.ne.s32.totalorder %s95, %s97
    %p104 = scmp.eq.s32.totalorder %s24, 1
    %p105 = por %p103, %p104
    %p106 = scmp.ne.s32.totalorder %s97, %s98
    %p107 = scmp.eq.s32.totalorder %s24, 0
    %p108 = por %p106, %p107
    %p109 = scmp.ne.s32.totalorder %s97, %s98
    %p110 = scmp.eq.s32.totalorder %s25, 1
    %p111 = por %p109, %p110
    %p113 = scmp.ne.s32.totalorder %s98, %s112
    %p114 = scmp.eq.s32.totalorder %s25, 0
    %p115 = por %p113, %p114
    %s117 = sadd.s32 %s116, 1
    %p120 = scmp.eq.s32.totalorder %s19, 1
    %p121 = scmp.ne.s32.totalorder %s116, %s118
    %p122 = scmp.eq.s32.totalorder %s19, 0
    %p123 = por %p121, %p122
    %p124 = scmp.ne.s32.totalorder %s116, %s118
    %p125 = scmp.eq.s32.totalorder %s24, 1
    %p126 = por %p124, %p125
    %p127 = scmp.ne.s32.totalorder %s118, %s119
    %p128 = scmp.eq.s32.totalorder %s24, 0
    %p129 = por %p127, %p128
    %p130 = scmp.ne.s32.totalorder %s118, %s119
    %p131 = scmp.eq.s32.totalorder %s25, 1
    %p132 = por %p130, %p131
    %p134 = scmp.ne.s32.totalorder %s119, %s133
    %p135 = scmp.eq.s32.totalorder %s25, 0
    %p136 = por %p134, %p135
    %s138 = sadd.s32 %s137, 1
    %p141 = scmp.eq.s32.totalorder %s19, 1
    %p142 = scmp.ne.s32.totalorder %s137, %s139
    %p143 = scmp.eq.s32.totalorder %s19, 0
    %p144 = por %p142, %p143
    %p145 = scmp.ne.s32.totalorder %s137, %s139
    %p146 = scmp.eq.s32.totalorder %s24, 1
    %p147 = por %p145, %p146
    %p148 = scmp.ne.s32.totalorder %s139, %s140
    %p149 = scmp.eq.s32.totalorder %s24, 0
    %p150 = por %p148, %p149
    %p151 = scmp.ne.s32.totalorder %s139, %s140
    %p152 = scmp.eq.s32.totalorder %s25, 1
    %p153 = por %p151, %p152
    %p155 = scmp.ne.s32.totalorder %s140, %s154
    %p156 = scmp.eq.s32.totalorder %s25, 0
    %p157 = por %p155, %p156
    %s159 = sadd.s32 %s158, 1
    %p162 = scmp.eq.s32.totalorder %s19, 1
    %p163 = scmp.ne.s32.totalorder %s158, %s160
    %p164 = scmp.eq.s32.totalorder %s19, 0
    %p165 = por %p163, %p164
    %p166 = scmp.ne.s32.totalorder %s158, %s160
    %p167 = scmp.eq.s32.totalorder %s24, 1
    %p168 = por %p166, %p167
    %p169 = scmp.ne.s32.totalorder %s160, %s161
    %p170 = scmp.eq.s32.totalorder %s24, 0
    %p171 = por %p169, %p170
    %p172 = scmp.ne.s32.totalorder %s160, %s161
    %p173 = scmp.eq.s32.totalorder %s25, 1
    %p174 = por %p172, %p173
    %p176 = scmp.ne.s32.totalorder %s161, %s175
    %p177 = scmp.eq.s32.totalorder %s25, 0
    %p178 = por %p176, %p177
    %s180 = sadd.s32 %s179, 1
    %p183 = scmp.eq.s32.totalorder %s19, 1
    %p184 = scmp.ne.s32.totalorder %s179, %s181
    %p185 = scmp.eq.s32.totalorder %s19, 0
    %p186 = por %p184, %p185
    %p187 = scmp.ne.s32.totalorder %s179, %s181
    %p188 = scmp.eq.s32.totalorder %s24, 1
    %p189 = por %p187, %p188
    %p190 = scmp.ne.s32.totalorder %s181, %s182
    %p191 = scmp.eq.s32.totalorder %s24, 0
    %p192 = por %p190, %p191
    %p193 = scmp.ne.s32.totalorder %s181, %s182
    %p194 = scmp.eq.s32.totalorder %s25, 1
    %p195 = por %p193, %p194
    %p197 = scmp.ne.s32.totalorder %s182, %s196
    %p198 = scmp.eq.s32.totalorder %s25, 0
    %p199 = por %p197, %p198
    %s201 = sadd.s32 %s200, 1
    %p204 = scmp.eq.s32.totalorder %s19, 1
    %p205 = scmp.ne.s32.totalorder %s200, %s202
    %p206 = scmp.eq.s32.totalorder %s19, 0
    %p207 = por %p205, %p206
    %p208 = scmp.ne.s32.totalorder %s200, %s202
    %p209 = scmp.eq.s32.totalorder %s24, 1
    %p210 = por %p208, %p209
    %p211 = scmp.ne.s32.totalorder %s202, %s203
    %p212 = scmp.eq.s32.totalorder %s24, 0
    %p213 = por %p211, %p212
    %p214 = scmp.ne.s32.totalorder %s202, %s203
    %p215 = scmp.eq.s32.totalorder %s25, 1
    %p216 = por %p214, %p215
    %p218 = scmp.ne.s32.totalorder %s203, %s217
    %p219 = scmp.eq.s32.totalorder %s25, 0
    %p220 = por %p218, %p219
    %s222 = sadd.s32 %s221, 1
    %p225 = scmp.eq.s32.totalorder %s19, 1
    %p226 = scmp.ne.s32.totalorder %s221, %s223
    %p227 = scmp.eq.s32.totalorder %s19, 0
    %p228 = por %p226, %p227
    %p229 = scmp.ne.s32.totalorder %s221, %s223
    %p230 = scmp.eq.s32.totalorder %s24, 1
    %p231 = por %p229, %p230
    %p232 = scmp.ne.s32.totalorder %s223, %s224
    %p233 = scmp.eq.s32.totalorder %s24, 0
    %p234 = por %p232, %p233
    %p235 = scmp.ne.s32.totalorder %s223, %s224
    %p236 = scmp.eq.s32.totalorder %s25, 1
    %p237 = por %p235, %p236
    %p239 = scmp.ne.s32.totalorder %s224, %s238
    %p240 = scmp.eq.s32.totalorder %s25, 0
    %p241 = por %p239, %p240
    %s243 = sadd.s32 %s242, 1
    %p246 = scmp.eq.s32.totalorder %s19, 1
    %p247 = scmp.ne.s32.totalorder %s242, %s244
    %p248 = scmp.eq.s32.totalorder %s19, 0
    %p249 = por %p247, %p248
    %p250 = scmp.ne.s32.totalorder %s242, %s244
    %p251 = scmp.eq.s32.totalorder %s24, 1
    %p252 = por %p250, %p251
    %p253 = scmp.ne.s32.totalorder %s244, %s245
    %p254 = scmp.eq.s32.totalorder %s24, 0
    %p255 = por %p253, %p254
    %p256 = scmp.ne.s32.totalorder %s244, %s245
    %p257 = scmp.eq.s32.totalorder %s25, 1
    %p258 = por %p256, %p257
    %p260 = scmp.ne.s32.totalorder %s245, %s259
    %p261 = scmp.eq.s32.totalorder %s25, 0
    %p262 = por %p260, %p261
    %s263 = ssub.s32 %s19, %s26
    %p264 = scmp.eq.s32.totalorder %s263, 0
    %s266 = sadd.s32 %s265, 1
    %s267 = scalar_select %p264, %s265, %s266
    %p270 = pneg %p264
    %p271 = scmp.eq.s32.totalorder %s19, 1
    %p272 = por %p270, %p271
    %p273 = scmp.ne.s32.totalorder %s265, %s268
    %p274 = scmp.eq.s32.totalorder %s19, 0
    %p275 = por %p273, %p274
    %p276 = scmp.ne.s32.totalorder %s265, %s268
    %p277 = scmp.eq.s32.totalorder %s24, 1
    %p278 = por %p276, %p277
    %p279 = scmp.ne.s32.totalorder %s268, %s269
    %p280 = scmp.eq.s32.totalorder %s24, 0
    %p281 = por %p279, %p280
    %p282 = scmp.ne.s32.totalorder %s268, %s269
    %p283 = scmp.eq.s32.totalorder %s25, 1
    %p284 = por %p282, %p283
    %p286 = scmp.ne.s32.totalorder %s269, %s285
    %p287 = scmp.eq.s32.totalorder %s25, 0
    %p288 = por %p286, %p287
    %p289 = scmp.le.s32.totalorder 1, %s19
    %p290 = scmp.lt.s32.totalorder %s19, 3
    %p291 = pnand %p289, %p290
    %p292 = pneg %p291
    // Predicated region
    $region9: #{bapm_forward.1} parent=5 // pred_check
      _
    $region10: #{bapm_forward.1} parent=5 // pred_check_branch
      %294 = sbr.rel (%p291) target = $region12
    $region11: #{bapm_forward.1} parent=5 // pred_region
      %s295 = ssub.s32 %s19, 1
      // Predicated region
      $region13: #{bapm_forward.1} parent=11 // pred_check
        %p296 = pneg %p66
      $region14: #{bapm_forward.1} parent=11 // pred_check_branch
        %298 = sbr.rel (%p296) target = $region16
      $region15: #{bapm_forward.1} parent=11 // pred_region
        _
      $region16: #{bapm_forward.1} parent=11 // pred_fallthru
        _
      // Predicated region
      $region17: #{bapm_forward.1} parent=11 // pred_check
        %p299 = pneg %p87
      $region18: #{bapm_forward.1} parent=11 // pred_check_branch
        %301 = sbr.rel (%p299) target = $region20
      $region19: #{bapm_forward.1} parent=11 // pred_region
        _
      $region20: #{bapm_forward.1} parent=11 // pred_fallthru
        _
      // Predicated region
      $region21: #{bapm_forward.1} parent=11 // pred_check
        %p302 = pneg %p108
      $region22: #{bapm_forward.1} parent=11 // pred_check_branch
        %304 = sbr.rel (%p302) target = $region24
      $region23: #{bapm_forward.1} parent=11 // pred_region
        _
      $region24: #{bapm_forward.1} parent=11 // pred_fallthru
        _
      // Predicated region
      $region25: #{bapm_forward.1} parent=11 // pred_check
        %p305 = pneg %p129
      $region26: #{bapm_forward.1} parent=11 // pred_check_branch
        %307 = sbr.rel (%p305) target = $region28
      $region27: #{bapm_forward.1} parent=11 // pred_region
        _
      $region28: #{bapm_forward.1} parent=11 // pred_fallthru
        _
      // Predicated region
      $region29: #{bapm_forward.1} parent=11 // pred_check
        %p308 = pneg %p150
      $region30: #{bapm_forward.1} parent=11 // pred_check_branch
        %310 = sbr.rel (%p308) target = $region32
      $region31: #{bapm_forward.1} parent=11 // pred_region
        _
      $region32: #{bapm_forward.1} parent=11 // pred_fallthru
        _
      // Predicated region
      $region33: #{bapm_forward.1} parent=11 // pred_check
        %p311 = pneg %p171
      $region34: #{bapm_forward.1} parent=11 // pred_check_branch
        %313 = sbr.rel (%p311) target = $region36
      $region35: #{bapm_forward.1} parent=11 // pred_region
        _
      $region36: #{bapm_forward.1} parent=11 // pred_fallthru
        _
      // Predicated region
      $region37: #{bapm_forward.1} parent=11 // pred_check
        %p314 = pneg %p192
      $region38: #{bapm_forward.1} parent=11 // pred_check_branch
        %316 = sbr.rel (%p314) target = $region40
      $region39: #{bapm_forward.1} parent=11 // pred_region
        _
      $region40: #{bapm_forward.1} parent=11 // pred_fallthru
        _
      // Predicated region
      $region41: #{bapm_forward.1} parent=11 // pred_check
        %p317 = pneg %p213
      $region42: #{bapm_forward.1} parent=11 // pred_check_branch
        %319 = sbr.rel (%p317) target = $region44
      $region43: #{bapm_forward.1} parent=11 // pred_region
        _
      $region44: #{bapm_forward.1} parent=11 // pred_fallthru
        _
      // Predicated region
      $region45: #{bapm_forward.1} parent=11 // pred_check
        %p320 = pneg %p234
      $region46: #{bapm_forward.1} parent=11 // pred_check_branch
        %322 = sbr.rel (%p320) target = $region48
      $region47: #{bapm_forward.1} parent=11 // pred_region
        _
      $region48: #{bapm_forward.1} parent=11 // pred_fallthru
        _
      // Predicated region
      $region49: #{bapm_forward.1} parent=11 // pred_check
        %p323 = pneg %p255
      $region50: #{bapm_forward.1} parent=11 // pred_check_branch
        %325 = sbr.rel (%p323) target = $region52
      $region51: #{bapm_forward.1} parent=11 // pred_region
        _
      $region52: #{bapm_forward.1} parent=11 // pred_fallthru
        _
    $region12: #{bapm_forward.1} parent=5 // pred_fallthru
      _
    %p326 = scmp.lt.s32.totalorder %s19, 2
    // Predicated region
    $region53: #{bapm_forward.1} parent=5 // pred_check
      %p327 = pneg %p326
    $region54: #{bapm_forward.1} parent=5 // pred_check_branch
      %329 = sbr.rel (%p327) target = $region56
    $region55: #{bapm_forward.1} parent=5 // pred_region
      // Predicated region
      $region57: #{bapm_forward.1} parent=55 // pred_check
        %p330 = pneg %p39
      $region58: #{bapm_forward.1} parent=55 // pred_check_branch
        %332 = sbr.rel (%p330) target = $region60
      $region59: #{bapm_forward.1} parent=55 // pred_region
        %p333 = scmp.lt.s32.totalorder %s19, 1
        %s334 = scalar_select %p333, %s19, 1
        %s335 = smul.addr %s334, 8
        %s336 = smul.addr %s335, 8
        %s337 = scalar_lea.vmem %s0, %s336
      $region60: #{bapm_forward.1} parent=55 // pred_fallthru
        _
    $region56: #{bapm_forward.1} parent=5 // pred_fallthru
      _
    %p338 = scmp.le.s32.totalorder 1, %s19
    %p339 = scmp.lt.s32.totalorder %s19, 3
    %p340 = pnand %p338, %p339
    %p341 = pneg %p340
    // Predicated region
    $region61: #{bapm_forward.1} parent=5 // pred_check
      _
    $region62: #{bapm_forward.1} parent=5 // pred_check_branch
      %343 = sbr.rel (%p340) target = $region64
    $region63: #{bapm_forward.1} parent=5 // pred_region
      %s344 = ssub.s32 %s19, 1
      %p345 = scmp.lt.s32.totalorder %s24, 1
      %s346 = scalar_select %p345, %s24, 1
      %s347 = smul.addr %s346, 8
      %s348 = smul.addr %s347, 8
      %s349 = scalar_lea.vmem %s0, %s348
      %p350 = pneg %p45
      %p351 = pneg %p42
      %p352 = pneg %p66
      %p353 = pneg %p63
      %p354 = pneg %p87
      %p355 = pneg %p84
      %p356 = pneg %p108
      %p357 = pneg %p105
      %p358 = pneg %p129
      %p359 = pneg %p126
      %p360 = pneg %p150
      %p361 = pneg %p147
      %p362 = pneg %p171
      %p363 = pneg %p168
      %p364 = pneg %p192
      %p365 = pneg %p189
      %p366 = pneg %p213
      %p367 = pneg %p210
      %p368 = pneg %p234
      %p369 = pneg %p231
      %p370 = pneg %p255
      %p371 = pneg %p252
      %p372 = pneg %p281
      %p373 = pneg %p278
      %p374 = scmp.lt.s32.totalorder %s24, 1
      %s375 = scalar_select %p374, %s24, 1
      %s376 = scalar_lea.vmem %s11, %s375
      %p377 = scmp.lt.s32.totalorder %s24, 1
      %s378 = scalar_select %p377, %s24, 1
      %s379 = smul.addr %s378, 8
      %s380 = smul.addr %s379, 8
      %s381 = scalar_lea.vmem %s0, %s380
      %p382 = scmp.lt.s32.totalorder %s24, 1
      %s383 = scalar_select %p382, %s24, 1
      %s384 = scalar_lea.vmem %s11, %s383
      %v386 = vld [vmem:[%s381] sm:$0xff]
      %v387 = vld [vmem:[%s381 + $0x8] sm:$0xff]
      %v388 = vld [vmem:[%s381 + $0x10] sm:$0xff]
      %v389 = vld [vmem:[%s381 + $0x18] sm:$0xff]
      %v390 = vld [vmem:[%s381 + $0x20] sm:$0xff]
      %v391 = vld [vmem:[%s381 + $0x28] sm:$0xff]
      %v392 = vld [vmem:[%s381 + $0x30] sm:$0xff]
      %v393 = vld [vmem:[%s381 + $0x38] sm:$0xff]
      %v394 = vpack.c.bf16 %v387, %v386
      %v395 = vpack.c.bf16 %v389, %v388
      %v396 = vpack.c.bf16 %v391, %v390
      %v397 = vpack.c.bf16 %v393, %v392
      %v398 = vld [vmem:[%s1] sm:$0xf]
      %v399 = vld [vmem:[%s2] sm:$0x1]
      %v401 = vperm.slane %v399, 0
      %vm403 = vcmask 64512
      %v405 = vsel %vm403, %v394, 0
      %v408 = vsel %vm403, %v395, 0
      %v411 = vsel %vm403, %v396, 0
      %v414 = vsel %vm403, %v397, 0
      %vm416 = vcmask 1043456
      %v418 = vsel %vm416, %v398, 0
      %420 = vmatpush.bf16.msra.mxu0 0
      %421 = vmatpush.bf16.msra.mxu0 0
      %422 = vmatpush.bf16.msra.mxu0 0
      %423 = vmatpush.bf16.msra.mxu0 0
      %424 = vmatpush.bf16.msra.mxu0 0
      %425 = vmatpush.bf16.msra.mxu0 0
      %426 = vmatpush.bf16.msra.mxu0 0
      %427 = vmatpush.bf16.msra.mxu0 %v418
      %428 = vmatmul.bf16.gmra.mxu0 %v405
      %v429 = vpop.f32.mrf.mxu0
      %v430 = vadd.f32 %v401, %v429
      %v431 = vpop.f32.mrf.mxu0
      %v432 = vadd.f32 %v401, %v431
      %433 = vmatmul.bf16.gmra.mxu0 %v408
      %v434 = vpop.f32.mrf.mxu0
      %v435 = vadd.f32 %v401, %v434
      %v436 = vpop.f32.mrf.mxu0
      %v437 = vadd.f32 %v401, %v436
      %438 = vmatmul.bf16.gmra.mxu0 %v411
      %v439 = vpop.f32.mrf.mxu0
      %v440 = vadd.f32 %v401, %v439
      %v441 = vpop.f32.mrf.mxu0
      %v442 = vadd.f32 %v401, %v441
      %443 = vmatmul.bf16.gmra.mxu0 %v414
      %v444 = vpop.f32.mrf.mxu0
      %v445 = vadd.f32 %v401, %v444
      %v446 = vpop.f32.mrf.mxu0
      %v447 = vadd.f32 %v401, %v446
      %448 = vdwg.mxu0
      %v449 = vmax.f32 %v430, 0.0
      %v450 = vmax.f32 %v432, 0.0
      %v451 = vmax.f32 %v435, 0.0
      %v452 = vmax.f32 %v437, 0.0
      %v453 = vmax.f32 %v440, 0.0
      %v454 = vmax.f32 %v442, 0.0
      %v455 = vmax.f32 %v445, 0.0
      %v456 = vmax.f32 %v447, 0.0
      %v457 = vpack.c.bf16 %v450, %v449
      %v458 = vpack.c.bf16 %v452, %v451
      %v459 = vpack.c.bf16 %v454, %v453
      %v460 = vpack.c.bf16 %v456, %v455
      %v461 = vld [vmem:[%s3] sm:$0xff]
      %v462 = vld [vmem:[%s3 + $0x8] sm:$0xff]
      %v463 = vld [vmem:[%s4] sm:$0x3]
      %v465 = vperm.slane %v463, 0
      %v466 = vperm.slane %v463, 1
      %v471 = vunpack.c.l.b16 %v461
      %v472 = vunpack.c.h.b16 %v461
      %v473 = vunpack.c.l.b16 %v462
      %v474 = vunpack.c.h.b16 %v462
      %v475 = vpack.c.b16 %v473, %v471
      %v476 = vpack.c.b16 %v474, %v472
      %vm479 = vcmask 130048
      %v481 = vsel %vm479, %v457, 0
      %v484 = vsel %vm479, %v458, 0
      %v487 = vsel %vm479, %v459, 0
      %v490 = vsel %vm479, %v460, 0
      %492 = vmatpush.bf16.msra.mxu0 0
      %493 = vmatpush.bf16.msra.mxu0 0
      %494 = vmatpush.bf16.msra.mxu0 0
      %495 = vmatpush.bf16.msra.mxu0 0
      %496 = vmatpush.bf16.msra.mxu0 0
      %497 = vmatpush.bf16.msra.mxu0 0
      %498 = vmatpush.bf16.msra.mxu0 0
      %499 = vmatpush.bf16.msra.mxu0 %v475
      %500 = vmatmul.bf16.gmra.mxu0 %v481
      %v501 = vpop.f32.mrf.mxu0
      %v502 = vadd.f32 %v465, %v501
      %v503 = vpop.f32.mrf.mxu0
      %v504 = vadd.f32 %v465, %v503
      %505 = vmatmul.bf16.gmra.mxu0 %v484
      %v506 = vpop.f32.mrf.mxu0
      %v507 = vadd.f32 %v465, %v506
      %v508 = vpop.f32.mrf.mxu0
      %v509 = vadd.f32 %v465, %v508
      %510 = vmatmul.bf16.gmra.mxu0 %v487
      %v511 = vpop.f32.mrf.mxu0
      %v512 = vadd.f32 %v465, %v511
      %v513 = vpop.f32.mrf.mxu0
      %v514 = vadd.f32 %v465, %v513
      %515 = vmatmul.bf16.gmra.mxu0 %v490
      %v516 = vpop.f32.mrf.mxu0
      %v517 = vadd.f32 %v465, %v516
      %v518 = vpop.f32.mrf.mxu0
      %v519 = vadd.f32 %v465, %v518
      %520 = vdwg.mxu0
      %521 = vmatpush.bf16.msra.mxu0 0
      %522 = vmatpush.bf16.msra.mxu0 0
      %523 = vmatpush.bf16.msra.mxu0 0
      %524 = vmatpush.bf16.msra.mxu0 0
      %525 = vmatpush.bf16.msra.mxu0 0
      %526 = vmatpush.bf16.msra.mxu0 0
      %527 = vmatpush.bf16.msra.mxu0 0
      %528 = vmatpush.bf16.msra.mxu0 %v476
      %529 = vmatmul.bf16.gmra.mxu0 %v481
      %v530 = vpop.f32.mrf.mxu0
      %v531 = vadd.f32 %v466, %v530
      %v532 = vpop.f32.mrf.mxu0
      %v533 = vadd.f32 %v466, %v532
      %534 = vmatmul.bf16.gmra.mxu0 %v484
      %v535 = vpop.f32.mrf.mxu0
      %v536 = vadd.f32 %v466, %v535
      %v537 = vpop.f32.mrf.mxu0
      %v538 = vadd.f32 %v466, %v537
      %539 = vmatmul.bf16.gmra.mxu0 %v487
      %v540 = vpop.f32.mrf.mxu0
      %v541 = vadd.f32 %v466, %v540
      %v542 = vpop.f32.mrf.mxu0
      %v543 = vadd.f32 %v466, %v542
      %544 = vmatmul.bf16.gmra.mxu0 %v490
      %v545 = vpop.f32.mrf.mxu0
      %v546 = vadd.f32 %v466, %v545
      %v547 = vpop.f32.mrf.mxu0
      %v548 = vadd.f32 %v466, %v547
      %549 = vdwg.mxu0
      %v550 = vpack.c.bf16 %v502, %v502
      %v551 = vpack.c.bf16 %v504, %v504
      %v552 = vpack.c.bf16 %v507, %v507
      %v553 = vpack.c.bf16 %v509, %v509
      %v554 = vpack.c.bf16 %v512, %v512
      %v555 = vpack.c.bf16 %v514, %v514
      %v556 = vpack.c.bf16 %v517, %v517
      %v557 = vpack.c.bf16 %v519, %v519
      %v559 = vunpack.c.l.b16 %v550
      %v560 = vpack.c.b16 %v559, %v559
      %561 = vrot.lane.b32.xlu0 %v560, 96
      %v562 = vpop.permute.xlu0 %561
      %v564 = vsel %vm479, %v550, 0
      %v567 = vsel %vm479, %v562, 0
      %569 = vmatpush.bf16.xpose.msra.mxu0 0
      %570 = vmatpush.bf16.xpose.msra.mxu0 0
      %571 = vmatpush.bf16.xpose.msra.mxu0 0
      %572 = vmatpush.bf16.xpose.msra.mxu0 0
      %573 = vmatpush.bf16.xpose.msra.mxu0 0
      %574 = vmatpush.bf16.xpose.msra.mxu0 0
      %575 = vmatpush.bf16.xpose.msra.mxu0 0
      %576 = vmatpush.bf16.xpose.msra.mxu0 %v567
      %577 = vmatmul.bf16.gmra.mxu0 %v564
      %v578 = vpop.f32.mrf.mxu0
      %v579 = vadd.f32 0.0, %v578
      %v580 = vpop.f32.mrf.mxu0
      %581 = vdwg.mxu0
      %v583 = vunpack.c.l.b16 %v551
      %v584 = vpack.c.b16 %v583, %v583
      %585 = vrot.lane.b32.xlu0 %v584, 96
      %v586 = vpop.permute.xlu0 %585
      %v588 = vsel %vm479, %v551, 0
      %v591 = vsel %vm479, %v586, 0
      %593 = vmatpush.bf16.xpose.msra.mxu0 0
      %594 = vmatpush.bf16.xpose.msra.mxu0 0
      %595 = vmatpush.bf16.xpose.msra.mxu0 0
      %596 = vmatpush.bf16.xpose.msra.mxu0 0
      %597 = vmatpush.bf16.xpose.msra.mxu0 0
      %598 = vmatpush.bf16.xpose.msra.mxu0 0
      %599 = vmatpush.bf16.xpose.msra.mxu0 0
      %600 = vmatpush.bf16.xpose.msra.mxu0 %v591
      %601 = vmatmul.bf16.gmra.mxu0 %v588
      %v602 = vpop.f32.mrf.mxu0
      %v603 = vadd.f32 0.0, %v602
      %v604 = vpop.f32.mrf.mxu0
      %605 = vdwg.mxu0
      %v607 = vunpack.c.l.b16 %v552
      %v608 = vpack.c.b16 %v607, %v607
      %609 = vrot.lane.b32.xlu0 %v608, 96
      %v610 = vpop.permute.xlu0 %609
      %v612 = vsel %vm479, %v552, 0
      %v615 = vsel %vm479, %v610, 0
      %617 = vmatpush.bf16.xpose.msra.mxu0 0
      %618 = vmatpush.bf16.xpose.msra.mxu0 0
      %619 = vmatpush.bf16.xpose.msra.mxu0 0
      %620 = vmatpush.bf16.xpose.msra.mxu0 0
      %621 = vmatpush.bf16.xpose.msra.mxu0 0
      %622 = vmatpush.bf16.xpose.msra.mxu0 0
      %623 = vmatpush.bf16.xpose.msra.mxu0 0
      %624 = vmatpush.bf16.xpose.msra.mxu0 %v615
      %625 = vmatmul.bf16.gmra.mxu0 %v612
      %v626 = vpop.f32.mrf.mxu0
      %v627 = vadd.f32 0.0, %v626
      %v628 = vpop.f32.mrf.mxu0
      %629 = vdwg.mxu0
      %v631 = vunpack.c.l.b16 %v553
      %v632 = vpack.c.b16 %v631, %v631
      %633 = vrot.lane.b32.xlu0 %v632, 96
      %v634 = vpop.permute.xlu0 %633
      %v636 = vsel %vm479, %v553, 0
      %v639 = vsel %vm479, %v634, 0
      %641 = vmatpush.bf16.xpose.msra.mxu0 0
      %642 = vmatpush.bf16.xpose.msra.mxu0 0
      %643 = vmatpush.bf16.xpose.msra.mxu0 0
      %644 = vmatpush.bf16.xpose.msra.mxu0 0
      %645 = vmatpush.bf16.xpose.msra.mxu0 0
      %646 = vmatpush.bf16.xpose.msra.mxu0 0
      %647 = vmatpush.bf16.xpose.msra.mxu0 0
      %648 = vmatpush.bf16.xpose.msra.mxu0 %v639
      %649 = vmatmul.bf16.gmra.mxu0 %v636
      %v650 = vpop.f32.mrf.mxu0
      %v651 = vadd.f32 0.0, %v650
      %v652 = vpop.f32.mrf.mxu0
      %653 = vdwg.mxu0
      %v655 = vunpack.c.l.b16 %v554
      %v656 = vpack.c.b16 %v655, %v655
      %657 = vrot.lane.b32.xlu0 %v656, 96
      %v658 = vpop.permute.xlu0 %657
      %v660 = vsel %vm479, %v554, 0
      %v663 = vsel %vm479, %v658, 0
      %665 = vmatpush.bf16.xpose.msra.mxu0 0
      %666 = vmatpush.bf16.xpose.msra.mxu0 0
      %667 = vmatpush.bf16.xpose.msra.mxu0 0
      %668 = vmatpush.bf16.xpose.msra.mxu0 0
      %669 = vmatpush.bf16.xpose.msra.mxu0 0
      %670 = vmatpush.bf16.xpose.msra.mxu0 0
      %671 = vmatpush.bf16.xpose.msra.mxu0 0
      %672 = vmatpush.bf16.xpose.msra.mxu0 %v663
      %673 = vmatmul.bf16.gmra.mxu0 %v660
      %v674 = vpop.f32.mrf.mxu0
      %v675 = vadd.f32 0.0, %v674
      %v676 = vpop.f32.mrf.mxu0
      %677 = vdwg.mxu0
      %v679 = vunpack.c.l.b16 %v555
      %v680 = vpack.c.b16 %v679, %v679
      %681 = vrot.lane.b32.xlu0 %v680, 96
      %v682 = vpop.permute.xlu0 %681
      %v684 = vsel %vm479, %v555, 0
      %v687 = vsel %vm479, %v682, 0
      %689 = vmatpush.bf16.xpose.msra.mxu0 0
      %690 = vmatpush.bf16.xpose.msra.mxu0 0
      %691 = vmatpush.bf16.xpose.msra.mxu0 0
      %692 = vmatpush.bf16.xpose.msra.mxu0 0
      %693 = vmatpush.bf16.xpose.msra.mxu0 0
      %694 = vmatpush.bf16.xpose.msra.mxu0 0
      %695 = vmatpush.bf16.xpose.msra.mxu0 0
      %696 = vmatpush.bf16.xpose.msra.mxu0 %v687
      %697 = vmatmul.bf16.gmra.mxu0 %v684
      %v698 = vpop.f32.mrf.mxu0
      %v699 = vadd.f32 0.0, %v698
      %v700 = vpop.f32.mrf.mxu0
      %701 = vdwg.mxu0
      %v703 = vunpack.c.l.b16 %v556
      %v704 = vpack.c.b16 %v703, %v703
      %705 = vrot.lane.b32.xlu0 %v704, 96
      %v706 = vpop.permute.xlu0 %705
      %v708 = vsel %vm479, %v556, 0
      %v711 = vsel %vm479, %v706, 0
      %713 = vmatpush.bf16.xpose.msra.mxu0 0
      %714 = vmatpush.bf16.xpose.msra.mxu0 0
      %715 = vmatpush.bf16.xpose.msra.mxu0 0
      %716 = vmatpush.bf16.xpose.msra.mxu0 0
      %717 = vmatpush.bf16.xpose.msra.mxu0 0
      %718 = vmatpush.bf16.xpose.msra.mxu0 0
      %719 = vmatpush.bf16.xpose.msra.mxu0 0
      %720 = vmatpush.bf16.xpose.msra.mxu0 %v711
      %721 = vmatmul.bf16.gmra.mxu0 %v708
      %v722 = vpop.f32.mrf.mxu0
      %v723 = vadd.f32 0.0, %v722
      %v724 = vpop.f32.mrf.mxu0
      %725 = vdwg.mxu0
      %v727 = vunpack.c.l.b16 %v557
      %v728 = vpack.c.b16 %v727, %v727
      %729 = vrot.lane.b32.xlu0 %v728, 96
      %v730 = vpop.permute.xlu0 %729
      %v732 = vsel %vm479, %v557, 0
      %v735 = vsel %vm479, %v730, 0
      %737 = vmatpush.bf16.xpose.msra.mxu0 0
      %738 = vmatpush.bf16.xpose.msra.mxu0 0
      %739 = vmatpush.bf16.xpose.msra.mxu0 0
      %740 = vmatpush.bf16.xpose.msra.mxu0 0
      %741 = vmatpush.bf16.xpose.msra.mxu0 0
      %742 = vmatpush.bf16.xpose.msra.mxu0 0
      %743 = vmatpush.bf16.xpose.msra.mxu0 0
      %744 = vmatpush.bf16.xpose.msra.mxu0 %v735
      %745 = vmatmul.bf16.gmra.mxu0 %v732
      %v746 = vpop.f32.mrf.mxu0
      %v747 = vadd.f32 0.0, %v746
      %v748 = vpop.f32.mrf.mxu0
      %749 = vdwg.mxu0
      %v750 = vmul.f32 %v579, 0.25
      %v751 = vmul.f32 %v603, 0.25
      %v752 = vmul.f32 %v627, 0.25
      %v753 = vmul.f32 %v651, 0.25
      %v754 = vmul.f32 %v675, 0.25
      %v755 = vmul.f32 %v699, 0.25
      %v756 = vmul.f32 %v723, 0.25
      %v757 = vmul.f32 %v747, 0.25
      %v758 = vsel %vm403, %v750, -inf
      %759 = vmax.xlane.f32.xlu0 %v758
      %v760 = vpop.xlane.xlu0 %759
      %v761 = vsel %vm403, %v751, -inf
      %762 = vmax.xlane.f32.xlu0 %v761
      %v763 = vpop.xlane.xlu0 %762
      %v764 = vsel %vm403, %v752, -inf
      %765 = vmax.xlane.f32.xlu0 %v764
      %v766 = vpop.xlane.xlu0 %765
      %v767 = vsel %vm403, %v753, -inf
      %768 = vmax.xlane.f32.xlu0 %v767
      %v769 = vpop.xlane.xlu0 %768
      %v770 = vsel %vm403, %v754, -inf
      %771 = vmax.xlane.f32.xlu0 %v770
      %v772 = vpop.xlane.xlu0 %771
      %v773 = vsel %vm403, %v755, -inf
      %774 = vmax.xlane.f32.xlu0 %v773
      %v775 = vpop.xlane.xlu0 %774
      %v776 = vsel %vm403, %v756, -inf
      %777 = vmax.xlane.f32.xlu0 %v776
      %v778 = vpop.xlane.xlu0 %777
      %v779 = vsel %vm403, %v757, -inf
      %780 = vmax.xlane.f32.xlu0 %v779
      %v781 = vpop.xlane.xlu0 %780
      %v782 = vsub.f32 %v750, %v760
      %v783 = vsub.f32 %v751, %v763
      %v784 = vsub.f32 %v752, %v766
      %v785 = vsub.f32 %v753, %v769
      %v786 = vsub.f32 %v754, %v772
      %v787 = vsub.f32 %v755, %v775
      %v788 = vsub.f32 %v756, %v778
      %v789 = vsub.f32 %v757, %v781
      %v790 = vmul.f32 %v782, 1.442695
      %v791 = vpow.pop %v790
      %v792 = vmul.f32 %v783, 1.442695
      %v793 = vpow.pop %v792
      %v794 = vmul.f32 %v784, 1.442695
      %v795 = vpow.pop %v794
      %v796 = vmul.f32 %v785, 1.442695
      %v797 = vpow.pop %v796
      %v798 = vmul.f32 %v786, 1.442695
      %v799 = vpow.pop %v798
      %v800 = vmul.f32 %v787, 1.442695
      %v801 = vpow.pop %v800
      %v802 = vmul.f32 %v788, 1.442695
      %v803 = vpow.pop %v802
      %v804 = vmul.f32 %v789, 1.442695
      %v805 = vpow.pop %v804
      %v806 = vsel %vm403, %v791, 0.0
      %807 = vadd.xlane.f32.xlu0 %v806
      %v808 = vpop.xlane.xlu0 %807
      %v809 = vsel %vm403, %v793, 0.0
      %810 = vadd.xlane.f32.xlu0 %v809
      %v811 = vpop.xlane.xlu0 %810
      %v812 = vsel %vm403, %v795, 0.0
      %813 = vadd.xlane.f32.xlu0 %v812
      %v814 = vpop.xlane.xlu0 %813
      %v815 = vsel %vm403, %v797, 0.0
      %816 = vadd.xlane.f32.xlu0 %v815
      %v817 = vpop.xlane.xlu0 %816
      %v818 = vsel %vm403, %v799, 0.0
      %819 = vadd.xlane.f32.xlu0 %v818
      %v820 = vpop.xlane.xlu0 %819
      %v821 = vsel %vm403, %v801, 0.0
      %822 = vadd.xlane.f32.xlu0 %v821
      %v823 = vpop.xlane.xlu0 %822
      %v824 = vsel %vm403, %v803, 0.0
      %825 = vadd.xlane.f32.xlu0 %v824
      %v826 = vpop.xlane.xlu0 %825
      %v827 = vsel %vm403, %v805, 0.0
      %828 = vadd.xlane.f32.xlu0 %v827
      %v829 = vpop.xlane.xlu0 %828
      %v830 = vrcp.pop %v808
      %v831 = vmul.f32 %v808, %v830
      %v832 = vsub.f32 1.0, %v831
      %v833 = vmul.f32 %v830, %v832
      %v834 = vadd.f32 %v830, %v833
      %vm835 = vweird.f32 %v808
      %vm836 = vweird.f32 %v830
      %vm837 = vmor %vm835, %vm836
      %v838 = vsel %vm837, %v830, %v834
      %v839 = vand.u32 2147483647, %v808
      %vm840 = vcmp.eq.f32.partialorder %v839, 8.507059e+37
      %v841 = vand.u32 %v808, 2147483648
      %v842 = vor.u32 1.1754944e-38, %v841
      %v843 = vsel %vm840, %v842, %v838
      %v844 = vmul.f32 %v791, %v843
      %v845 = vrcp.pop %v811
      %v846 = vmul.f32 %v811, %v845
      %v847 = vsub.f32 1.0, %v846
      %v848 = vmul.f32 %v845, %v847
      %v849 = vadd.f32 %v845, %v848
      %vm850 = vweird.f32 %v811
      %vm851 = vweird.f32 %v845
      %vm852 = vmor %vm850, %vm851
      %v853 = vsel %vm852, %v845, %v849
      %v854 = vand.u32 2147483647, %v811
      %vm855 = vcmp.eq.f32.partialorder %v854, 8.507059e+37
      %v856 = vand.u32 %v811, 2147483648
      %v857 = vor.u32 1.1754944e-38, %v856
      %v858 = vsel %vm855, %v857, %v853
      %v859 = vmul.f32 %v793, %v858
      %v860 = vrcp.pop %v814
      %v861 = vmul.f32 %v814, %v860
      %v862 = vsub.f32 1.0, %v861
      %v863 = vmul.f32 %v860, %v862
      %v864 = vadd.f32 %v860, %v863
      %vm865 = vweird.f32 %v814
      %vm866 = vweird.f32 %v860
      %vm867 = vmor %vm865, %vm866
      %v868 = vsel %vm867, %v860, %v864
      %v869 = vand.u32 2147483647, %v814
      %vm870 = vcmp.eq.f32.partialorder %v869, 8.507059e+37
      %v871 = vand.u32 %v814, 2147483648
      %v872 = vor.u32 1.1754944e-38, %v871
      %v873 = vsel %vm870, %v872, %v868
      %v874 = vmul.f32 %v795, %v873
      %v875 = vrcp.pop %v817
      %v876 = vmul.f32 %v817, %v875
      %v877 = vsub.f32 1.0, %v876
      %v878 = vmul.f32 %v875, %v877
      %v879 = vadd.f32 %v875, %v878
      %vm880 = vweird.f32 %v817
      %vm881 = vweird.f32 %v875
      %vm882 = vmor %vm880, %vm881
      %v883 = vsel %vm882, %v875, %v879
      %v884 = vand.u32 2147483647, %v817
      %vm885 = vcmp.eq.f32.partialorder %v884, 8.507059e+37
      %v886 = vand.u32 %v817, 2147483648
      %v887 = vor.u32 1.1754944e-38, %v886
      %v888 = vsel %vm885, %v887, %v883
      %v889 = vmul.f32 %v797, %v888
      %v890 = vrcp.pop %v820
      %v891 = vmul.f32 %v820, %v890
      %v892 = vsub.f32 1.0, %v891
      %v893 = vmul.f32 %v890, %v892
      %v894 = vadd.f32 %v890, %v893
      %vm895 = vweird.f32 %v820
      %vm896 = vweird.f32 %v890
      %vm897 = vmor %vm895, %vm896
      %v898 = vsel %vm897, %v890, %v894
      %v899 = vand.u32 2147483647, %v820
      %vm900 = vcmp.eq.f32.partialorder %v899, 8.507059e+37
      %v901 = vand.u32 %v820, 2147483648
      %v902 = vor.u32 1.1754944e-38, %v901
      %v903 = vsel %vm900, %v902, %v898
      %v904 = vmul.f32 %v799, %v903
      %v905 = vrcp.pop %v823
      %v906 = vmul.f32 %v823, %v905
      %v907 = vsub.f32 1.0, %v906
      %v908 = vmul.f32 %v905, %v907
      %v909 = vadd.f32 %v905, %v908
      %vm910 = vweird.f32 %v823
      %vm911 = vweird.f32 %v905
      %vm912 = vmor %vm910, %vm911
      %v913 = vsel %vm912, %v905, %v909
      %v914 = vand.u32 2147483647, %v823
      %vm915 = vcmp.eq.f32.partialorder %v914, 8.507059e+37
      %v916 = vand.u32 %v823, 2147483648
      %v917 = vor.u32 1.1754944e-38, %v916
      %v918 = vsel %vm915, %v917, %v913
      %v919 = vmul.f32 %v801, %v918
      %v920 = vrcp.pop %v826
      %v921 = vmul.f32 %v826, %v920
      %v922 = vsub.f32 1.0, %v921
      %v923 = vmul.f32 %v920, %v922
      %v924 = vadd.f32 %v920, %v923
      %vm925 = vweird.f32 %v826
      %vm926 = vweird.f32 %v920
      %vm927 = vmor %vm925, %vm926
      %v928 = vsel %vm927, %v920, %v924
      %v929 = vand.u32 2147483647, %v826
      %vm930 = vcmp.eq.f32.partialorder %v929, 8.507059e+37
      %v931 = vand.u32 %v826, 2147483648
      %v932 = vor.u32 1.1754944e-38, %v931
      %v933 = vsel %vm930, %v932, %v928
      %v934 = vmul.f32 %v803, %v933
      %v935 = vrcp.pop %v829
      %v936 = vmul.f32 %v829, %v935
      %v937 = vsub.f32 1.0, %v936
      %v938 = vmul.f32 %v935, %v937
      %v939 = vadd.f32 %v935, %v938
      %vm940 = vweird.f32 %v829
      %vm941 = vweird.f32 %v935
      %vm942 = vmor %vm940, %vm941
      %v943 = vsel %vm942, %v935, %v939
      %v944 = vand.u32 2147483647, %v829
      %vm945 = vcmp.eq.f32.partialorder %v944, 8.507059e+37
      %v946 = vand.u32 %v829, 2147483648
      %v947 = vor.u32 1.1754944e-38, %v946
      %v948 = vsel %vm945, %v947, %v943
      %v949 = vmul.f32 %v805, %v948
      %v950 = vpack.c.bf16 %v844, %v844
      %v951 = vpack.c.bf16 %v859, %v859
      %v952 = vpack.c.bf16 %v874, %v874
      %v953 = vpack.c.bf16 %v889, %v889
      %v954 = vpack.c.bf16 %v904, %v904
      %v955 = vpack.c.bf16 %v919, %v919
      %v956 = vpack.c.bf16 %v934, %v934
      %v957 = vpack.c.bf16 %v949, %v949
      %958 = vrot.lane.b32.xlu0 %v560, 64
      %v959 = vpop.permute.xlu0 %958
      %v961 = vsel %vm403, %v950, 0
      %v964 = vsel %vm416, %v959, 0
      %966 = vmatpush.bf16.msra.mxu0 0
      %967 = vmatpush.bf16.msra.mxu0 0
      %968 = vmatpush.bf16.msra.mxu0 0
      %969 = vmatpush.bf16.msra.mxu0 0
      %970 = vmatpush.bf16.msra.mxu0 0
      %971 = vmatpush.bf16.msra.mxu0 0
      %972 = vmatpush.bf16.msra.mxu0 0
      %973 = vmatpush.bf16.msra.mxu0 %v964
      %974 = vmatmul.bf16.gmra.mxu0 %v961
      %v975 = vpop.f32.mrf.mxu0
      %v976 = vadd.f32 0.0, %v975
      %v977 = vpop.f32.mrf.mxu0
      %978 = vdwg.mxu0
      %979 = vrot.lane.b32.xlu0 %v584, 64
      %v980 = vpop.permute.xlu0 %979
      %v982 = vsel %vm403, %v951, 0
      %v985 = vsel %vm416, %v980, 0
      %987 = vmatpush.bf16.msra.mxu0 0
      %988 = vmatpush.bf16.msra.mxu0 0
      %989 = vmatpush.bf16.msra.mxu0 0
      %990 = vmatpush.bf16.msra.mxu0 0
      %991 = vmatpush.bf16.msra.mxu0 0
      %992 = vmatpush.bf16.msra.mxu0 0
      %993 = vmatpush.bf16.msra.mxu0 0
      %994 = vmatpush.bf16.msra.mxu0 %v985
      %995 = vmatmul.bf16.gmra.mxu0 %v982
      %v996 = vpop.f32.mrf.mxu0
      %v997 = vadd.f32 0.0, %v996
      %v998 = vpop.f32.mrf.mxu0
      %999 = vdwg.mxu0
      %1000 = vrot.lane.b32.xlu0 %v608, 64
      %v1001 = vpop.permute.xlu0 %1000
      %v1003 = vsel %vm403, %v952, 0
      %v1006 = vsel %vm416, %v1001, 0
      %1008 = vmatpush.bf16.msra.mxu0 0
      %1009 = vmatpush.bf16.msra.mxu0 0
      %1010 = vmatpush.bf16.msra.mxu0 0
      %1011 = vmatpush.bf16.msra.mxu0 0
      %1012 = vmatpush.bf16.msra.mxu0 0
      %1013 = vmatpush.bf16.msra.mxu0 0
      %1014 = vmatpush.bf16.msra.mxu0 0
      %1015 = vmatpush.bf16.msra.mxu0 %v1006
      %1016 = vmatmul.bf16.gmra.mxu0 %v1003
      %v1017 = vpop.f32.mrf.mxu0
      %v1018 = vadd.f32 0.0, %v1017
      %v1019 = vpop.f32.mrf.mxu0
      %1020 = vdwg.mxu0
      %1021 = vrot.lane.b32.xlu0 %v632, 64
      %v1022 = vpop.permute.xlu0 %1021
      %v1024 = vsel %vm403, %v953, 0
      %v1027 = vsel %vm416, %v1022, 0
      %1029 = vmatpush.bf16.msra.mxu0 0
      %1030 = vmatpush.bf16.msra.mxu0 0
      %1031 = vmatpush.bf16.msra.mxu0 0
      %1032 = vmatpush.bf16.msra.mxu0 0
      %1033 = vmatpush.bf16.msra.mxu0 0
      %1034 = vmatpush.bf16.msra.mxu0 0
      %1035 = vmatpush.bf16.msra.mxu0 0
      %1036 = vmatpush.bf16.msra.mxu0 %v1027
      %1037 = vmatmul.bf16.gmra.mxu0 %v1024
      %v1038 = vpop.f32.mrf.mxu0
      %v1039 = vadd.f32 0.0, %v1038
      %v1040 = vpop.f32.mrf.mxu0
      %1041 = vdwg.mxu0
      %1042 = vrot.lane.b32.xlu0 %v656, 64
      %v1043 = vpop.permute.xlu0 %1042
      %v1045 = vsel %vm403, %v954, 0
      %v1048 = vsel %vm416, %v1043, 0
      %1050 = vmatpush.bf16.msra.mxu0 0
      %1051 = vmatpush.bf16.msra.mxu0 0
      %1052 = vmatpush.bf16.msra.mxu0 0
      %1053 = vmatpush.bf16.msra.mxu0 0
      %1054 = vmatpush.bf16.msra.mxu0 0
      %1055 = vmatpush.bf16.msra.mxu0 0
      %1056 = vmatpush.bf16.msra.mxu0 0
      %1057 = vmatpush.bf16.msra.mxu0 %v1048
      %1058 = vmatmul.bf16.gmra.mxu0 %v1045
      %v1059 = vpop.f32.mrf.mxu0
      %v1060 = vadd.f32 0.0, %v1059
      %v1061 = vpop.f32.mrf.mxu0
      %1062 = vdwg.mxu0
      %1063 = vrot.lane.b32.xlu0 %v680, 64
      %v1064 = vpop.permute.xlu0 %1063
      %v1066 = vsel %vm403, %v955, 0
      %v1069 = vsel %vm416, %v1064, 0
      %1071 = vmatpush.bf16.msra.mxu0 0
      %1072 = vmatpush.bf16.msra.mxu0 0
      %1073 = vmatpush.bf16.msra.mxu0 0
      %1074 = vmatpush.bf16.msra.mxu0 0
      %1075 = vmatpush.bf16.msra.mxu0 0
      %1076 = vmatpush.bf16.msra.mxu0 0
      %1077 = vmatpush.bf16.msra.mxu0 0
      %1078 = vmatpush.bf16.msra.mxu0 %v1069
      %1079 = vmatmul.bf16.gmra.mxu0 %v1066
      %v1080 = vpop.f32.mrf.mxu0
      %v1081 = vadd.f32 0.0, %v1080
      %v1082 = vpop.f32.mrf.mxu0
      %1083 = vdwg.mxu0
      %1084 = vrot.lane.b32.xlu0 %v704, 64
      %v1085 = vpop.permute.xlu0 %1084
      %v1087 = vsel %vm403, %v956, 0
      %v1090 = vsel %vm416, %v1085, 0
      %1092 = vmatpush.bf16.msra.mxu0 0
      %1093 = vmatpush.bf16.msra.mxu0 0
      %1094 = vmatpush.bf16.msra.mxu0 0
      %1095 = vmatpush.bf16.msra.mxu0 0
      %1096 = vmatpush.bf16.msra.mxu0 0
      %1097 = vmatpush.bf16.msra.mxu0 0
      %1098 = vmatpush.bf16.msra.mxu0 0
      %1099 = vmatpush.bf16.msra.mxu0 %v1090
      %1100 = vmatmul.bf16.gmra.mxu0 %v1087
      %v1101 = vpop.f32.mrf.mxu0
      %v1102 = vadd.f32 0.0, %v1101
      %v1103 = vpop.f32.mrf.mxu0
      %1104 = vdwg.mxu0
      %1105 = vrot.lane.b32.xlu0 %v728, 64
      %v1106 = vpop.permute.xlu0 %1105
      %v1108 = vsel %vm403, %v957, 0
      %v1111 = vsel %vm416, %v1106, 0
      %1113 = vmatpush.bf16.msra.mxu0 0
      %1114 = vmatpush.bf16.msra.mxu0 0
      %1115 = vmatpush.bf16.msra.mxu0 0
      %1116 = vmatpush.bf16.msra.mxu0 0
      %1117 = vmatpush.bf16.msra.mxu0 0
      %1118 = vmatpush.bf16.msra.mxu0 0
      %1119 = vmatpush.bf16.msra.mxu0 0
      %1120 = vmatpush.bf16.msra.mxu0 %v1111
      %1121 = vmatmul.bf16.gmra.mxu0 %v1108
      %v1122 = vpop.f32.mrf.mxu0
      %v1123 = vadd.f32 0.0, %v1122
      %v1124 = vpop.f32.mrf.mxu0
      %1125 = vdwg.mxu0
      %v1126 = vxor.u32 %v502, 2147483648
      %v1127 = vxor.u32 %v504, 2147483648
      %v1128 = vxor.u32 %v507, 2147483648
      %v1129 = vxor.u32 %v509, 2147483648
      %v1130 = vxor.u32 %v512, 2147483648
      %v1131 = vxor.u32 %v514, 2147483648
      %v1132 = vxor.u32 %v517, 2147483648
      %v1133 = vxor.u32 %v519, 2147483648
      %v1134 = vmul.f32 %v1126, 1.442695
      %v1135 = vpow.pop %v1134
      %v1136 = vmul.f32 %v1127, 1.442695
      %v1137 = vpow.pop %v1136
      %v1138 = vmul.f32 %v1128, 1.442695
      %v1139 = vpow.pop %v1138
      %v1140 = vmul.f32 %v1129, 1.442695
      %v1141 = vpow.pop %v1140
      %v1142 = vmul.f32 %v1130, 1.442695
      %v1143 = vpow.pop %v1142
      %v1144 = vmul.f32 %v1131, 1.442695
      %v1145 = vpow.pop %v1144
      %v1146 = vmul.f32 %v1132, 1.442695
      %v1147 = vpow.pop %v1146
      %v1148 = vmul.f32 %v1133, 1.442695
      %v1149 = vpow.pop %v1148
      %v1150 = vadd.f32 %v1135, 1.0
      %v1151 = vadd.f32 %v1137, 1.0
      %v1152 = vadd.f32 %v1139, 1.0
      %v1153 = vadd.f32 %v1141, 1.0
      %v1154 = vadd.f32 %v1143, 1.0
      %v1155 = vadd.f32 %v1145, 1.0
      %v1156 = vadd.f32 %v1147, 1.0
      %v1157 = vadd.f32 %v1149, 1.0
      %v1158 = vrcp.pop %v1150
      %v1159 = vmul.f32 %v1150, %v1158
      %v1160 = vsub.f32 1.0, %v1159
      %v1161 = vmul.f32 %v1158, %v1160
      %v1162 = vadd.f32 %v1158, %v1161
      %vm1163 = vweird.f32 %v1150
      %vm1164 = vweird.f32 %v1158
      %vm1165 = vmor %vm1163, %vm1164
      %v1166 = vsel %vm1165, %v1158, %v1162
      %v1167 = vand.u32 2147483647, %v1150
      %vm1168 = vcmp.eq.f32.partialorder %v1167, 8.507059e+37
      %v1169 = vand.u32 %v1150, 2147483648
      %v1170 = vor.u32 1.1754944e-38, %v1169
      %v1171 = vsel %vm1168, %v1170, %v1166
      %v1172 = vmul.f32 1.0, %v1171
      %v1173 = vrcp.pop %v1151
      %v1174 = vmul.f32 %v1151, %v1173
      %v1175 = vsub.f32 1.0, %v1174
      %v1176 = vmul.f32 %v1173, %v1175
      %v1177 = vadd.f32 %v1173, %v1176
      %vm1178 = vweird.f32 %v1151
      %vm1179 = vweird.f32 %v1173
      %vm1180 = vmor %vm1178, %vm1179
      %v1181 = vsel %vm1180, %v1173, %v1177
      %v1182 = vand.u32 2147483647, %v1151
      %vm1183 = vcmp.eq.f32.partialorder %v1182, 8.507059e+37
      %v1184 = vand.u32 %v1151, 2147483648
      %v1185 = vor.u32 1.1754944e-38, %v1184
      %v1186 = vsel %vm1183, %v1185, %v1181
      %v1187 = vmul.f32 1.0, %v1186
      %v1188 = vrcp.pop %v1152
      %v1189 = vmul.f32 %v1152, %v1188
      %v1190 = vsub.f32 1.0, %v1189
      %v1191 = vmul.f32 %v1188, %v1190
      %v1192 = vadd.f32 %v1188, %v1191
      %vm1193 = vweird.f32 %v1152
      %vm1194 = vweird.f32 %v1188
      %vm1195 = vmor %vm1193, %vm1194
      %v1196 = vsel %vm1195, %v1188, %v1192
      %v1197 = vand.u32 2147483647, %v1152
      %vm1198 = vcmp.eq.f32.partialorder %v1197, 8.507059e+37
      %v1199 = vand.u32 %v1152, 2147483648
      %v1200 = vor.u32 1.1754944e-38, %v1199
      %v1201 = vsel %vm1198, %v1200, %v1196
      %v1202 = vmul.f32 1.0, %v1201
      %v1203 = vrcp.pop %v1153
      %v1204 = vmul.f32 %v1153, %v1203
      %v1205 = vsub.f32 1.0, %v1204
      %v1206 = vmul.f32 %v1203, %v1205
      %v1207 = vadd.f32 %v1203, %v1206
      %vm1208 = vweird.f32 %v1153
      %vm1209 = vweird.f32 %v1203
      %vm1210 = vmor %vm1208, %vm1209
      %v1211 = vsel %vm1210, %v1203, %v1207
      %v1212 = vand.u32 2147483647, %v1153
      %vm1213 = vcmp.eq.f32.partialorder %v1212, 8.507059e+37
      %v1214 = vand.u32 %v1153, 2147483648
      %v1215 = vor.u32 1.1754944e-38, %v1214
      %v1216 = vsel %vm1213, %v1215, %v1211
      %v1217 = vmul.f32 1.0, %v1216
      %v1218 = vrcp.pop %v1154
      %v1219 = vmul.f32 %v1154, %v1218
      %v1220 = vsub.f32 1.0, %v1219
      %v1221 = vmul.f32 %v1218, %v1220
      %v1222 = vadd.f32 %v1218, %v1221
      %vm1223 = vweird.f32 %v1154
      %vm1224 = vweird.f32 %v1218
      %vm1225 = vmor %vm1223, %vm1224
      %v1226 = vsel %vm1225, %v1218, %v1222
      %v1227 = vand.u32 2147483647, %v1154
      %vm1228 = vcmp.eq.f32.partialorder %v1227, 8.507059e+37
      %v1229 = vand.u32 %v1154, 2147483648
      %v1230 = vor.u32 1.1754944e-38, %v1229
      %v1231 = vsel %vm1228, %v1230, %v1226
      %v1232 = vmul.f32 1.0, %v1231
      %v1233 = vrcp.pop %v1155
      %v1234 = vmul.f32 %v1155, %v1233
      %v1235 = vsub.f32 1.0, %v1234
      %v1236 = vmul.f32 %v1233, %v1235
      %v1237 = vadd.f32 %v1233, %v1236
      %vm1238 = vweird.f32 %v1155
      %vm1239 = vweird.f32 %v1233
      %vm1240 = vmor %vm1238, %vm1239
      %v1241 = vsel %vm1240, %v1233, %v1237
      %v1242 = vand.u32 2147483647, %v1155
      %vm1243 = vcmp.eq.f32.partialorder %v1242, 8.507059e+37
      %v1244 = vand.u32 %v1155, 2147483648
      %v1245 = vor.u32 1.1754944e-38, %v1244
      %v1246 = vsel %vm1243, %v1245, %v1241
      %v1247 = vmul.f32 1.0, %v1246
      %v1248 = vrcp.pop %v1156
      %v1249 = vmul.f32 %v1156, %v1248
      %v1250 = vsub.f32 1.0, %v1249
      %v1251 = vmul.f32 %v1248, %v1250
      %v1252 = vadd.f32 %v1248, %v1251
      %vm1253 = vweird.f32 %v1156
      %vm1254 = vweird.f32 %v1248
      %vm1255 = vmor %vm1253, %vm1254
      %v1256 = vsel %vm1255, %v1248, %v1252
      %v1257 = vand.u32 2147483647, %v1156
      %vm1258 = vcmp.eq.f32.partialorder %v1257, 8.507059e+37
      %v1259 = vand.u32 %v1156, 2147483648
      %v1260 = vor.u32 1.1754944e-38, %v1259
      %v1261 = vsel %vm1258, %v1260, %v1256
      %v1262 = vmul.f32 1.0, %v1261
      %v1263 = vrcp.pop %v1157
      %v1264 = vmul.f32 %v1157, %v1263
      %v1265 = vsub.f32 1.0, %v1264
      %v1266 = vmul.f32 %v1263, %v1265
      %v1267 = vadd.f32 %v1263, %v1266
      %vm1268 = vweird.f32 %v1157
      %vm1269 = vweird.f32 %v1263
      %vm1270 = vmor %vm1268, %vm1269
      %v1271 = vsel %vm1270, %v1263, %v1267
      %v1272 = vand.u32 2147483647, %v1157
      %vm1273 = vcmp.eq.f32.partialorder %v1272, 8.507059e+37
      %v1274 = vand.u32 %v1157, 2147483648
      %v1275 = vor.u32 1.1754944e-38, %v1274
      %v1276 = vsel %vm1273, %v1275, %v1271
      %v1277 = vmul.f32 1.0, %v1276
      %1286 = vrot.lane.b32.xlu0 %v976, 96
      %v1287 = vpop.permute.xlu0 %1286
      %1288 = vrot.lane.b32.xlu0 %v997, 96
      %v1289 = vpop.permute.xlu0 %1288
      %1290 = vrot.lane.b32.xlu0 %v1018, 96
      %v1291 = vpop.permute.xlu0 %1290
      %1292 = vrot.lane.b32.xlu0 %v1039, 96
      %v1293 = vpop.permute.xlu0 %1292
      %1294 = vrot.lane.b32.xlu0 %v1060, 96
      %v1295 = vpop.permute.xlu0 %1294
      %1296 = vrot.lane.b32.xlu0 %v1081, 96
      %v1297 = vpop.permute.xlu0 %1296
      %1298 = vrot.lane.b32.xlu0 %v1102, 96
      %v1299 = vpop.permute.xlu0 %1298
      %1300 = vrot.lane.b32.xlu0 %v1123, 96
      %v1301 = vpop.permute.xlu0 %1300
      %v1310 = vmul.f32 %v1172, %v1287
      %v1311 = vmul.f32 %v1187, %v1289
      %v1312 = vmul.f32 %v1202, %v1291
      %v1313 = vmul.f32 %v1217, %v1293
      %v1314 = vmul.f32 %v1232, %v1295
      %v1315 = vmul.f32 %v1247, %v1297
      %v1316 = vmul.f32 %v1262, %v1299
      %v1317 = vmul.f32 %v1277, %v1301
      %v1318 = vadd.f32 %v1310, 0.0
      %v1319 = vadd.f32 %v1311, 0.0
      %v1320 = vadd.f32 %v1312, 0.0
      %v1321 = vadd.f32 %v1313, 0.0
      %v1322 = vadd.f32 %v1314, 0.0
      %v1323 = vadd.f32 %v1315, 0.0
      %v1324 = vadd.f32 %v1316, 0.0
      %v1325 = vadd.f32 %v1317, 0.0
      %1326 = vrot.lane.b32.xlu0 %v560, 112
      %v1327 = vpop.permute.xlu0 %1326
      %1328 = vrot.lane.b32.xlu0 %v560, 80
      %v1329 = vpop.permute.xlu0 %1328
      %v1331 = vsel %vm479, %v1327, 0
      %v1334 = vsel %vm479, %v1329, 0
      %1336 = vmatpush.bf16.xpose.msra.mxu0 0
      %1337 = vmatpush.bf16.xpose.msra.mxu0 0
      %1338 = vmatpush.bf16.xpose.msra.mxu0 0
      %1339 = vmatpush.bf16.xpose.msra.mxu0 0
      %1340 = vmatpush.bf16.xpose.msra.mxu0 0
      %1341 = vmatpush.bf16.xpose.msra.mxu0 0
      %1342 = vmatpush.bf16.xpose.msra.mxu0 0
      %1343 = vmatpush.bf16.xpose.msra.mxu0 %v1334
      %1344 = vmatmul.bf16.gmra.mxu0 %v1331
      %v1345 = vpop.f32.mrf.mxu0
      %v1346 = vadd.f32 0.0, %v1345
      %v1347 = vpop.f32.mrf.mxu0
      %1348 = vdwg.mxu0
      %1349 = vrot.lane.b32.xlu0 %v584, 112
      %v1350 = vpop.permute.xlu0 %1349
      %1351 = vrot.lane.b32.xlu0 %v584, 80
      %v1352 = vpop.permute.xlu0 %1351
      %v1354 = vsel %vm479, %v1350, 0
      %v1357 = vsel %vm479, %v1352, 0
      %1359 = vmatpush.bf16.xpose.msra.mxu0 0
      %1360 = vmatpush.bf16.xpose.msra.mxu0 0
      %1361 = vmatpush.bf16.xpose.msra.mxu0 0
      %1362 = vmatpush.bf16.xpose.msra.mxu0 0
      %1363 = vmatpush.bf16.xpose.msra.mxu0 0
      %1364 = vmatpush.bf16.xpose.msra.mxu0 0
      %1365 = vmatpush.bf16.xpose.msra.mxu0 0
      %1366 = vmatpush.bf16.xpose.msra.mxu0 %v1357
      %1367 = vmatmul.bf16.gmra.mxu0 %v1354
      %v1368 = vpop.f32.mrf.mxu0
      %v1369 = vadd.f32 0.0, %v1368
      %v1370 = vpop.f32.mrf.mxu0
      %1371 = vdwg.mxu0
      %1372 = vrot.lane.b32.xlu0 %v608, 112
      %v1373 = vpop.permute.xlu0 %1372
      %1374 = vrot.lane.b32.xlu0 %v608, 80
      %v1375 = vpop.permute.xlu0 %1374
      %v1377 = vsel %vm479, %v1373, 0
      %v1380 = vsel %vm479, %v1375, 0
      %1382 = vmatpush.bf16.xpose.msra.mxu0 0
      %1383 = vmatpush.bf16.xpose.msra.mxu0 0
      %1384 = vmatpush.bf16.xpose.msra.mxu0 0
      %1385 = vmatpush.bf16.xpose.msra.mxu0 0
      %1386 = vmatpush.bf16.xpose.msra.mxu0 0
      %1387 = vmatpush.bf16.xpose.msra.mxu0 0
      %1388 = vmatpush.bf16.xpose.msra.mxu0 0
      %1389 = vmatpush.bf16.xpose.msra.mxu0 %v1380
      %1390 = vmatmul.bf16.gmra.mxu0 %v1377
      %v1391 = vpop.f32.mrf.mxu0
      %v1392 = vadd.f32 0.0, %v1391
      %v1393 = vpop.f32.mrf.mxu0
      %1394 = vdwg.mxu0
      %1395 = vrot.lane.b32.xlu0 %v632, 112
      %v1396 = vpop.permute.xlu0 %1395
      %1397 = vrot.lane.b32.xlu0 %v632, 80
      %v1398 = vpop.permute.xlu0 %1397
      %v1400 = vsel %vm479, %v1396, 0
      %v1403 = vsel %vm479, %v1398, 0
      %1405 = vmatpush.bf16.xpose.msra.mxu0 0
      %1406 = vmatpush.bf16.xpose.msra.mxu0 0
      %1407 = vmatpush.bf16.xpose.msra.mxu0 0
      %1408 = vmatpush.bf16.xpose.msra.mxu0 0
      %1409 = vmatpush.bf16.xpose.msra.mxu0 0
      %1410 = vmatpush.bf16.xpose.msra.mxu0 0
      %1411 = vmatpush.bf16.xpose.msra.mxu0 0
      %1412 = vmatpush.bf16.xpose.msra.mxu0 %v1403
      %1413 = vmatmul.bf16.gmra.mxu0 %v1400
      %v1414 = vpop.f32.mrf.mxu0
      %v1415 = vadd.f32 0.0, %v1414
      %v1416 = vpop.f32.mrf.mxu0
      %1417 = vdwg.mxu0
      %1418 = vrot.lane.b32.xlu0 %v656, 112
      %v1419 = vpop.permute.xlu0 %1418
      %1420 = vrot.lane.b32.xlu0 %v656, 80
      %v1421 = vpop.permute.xlu0 %1420
      %v1423 = vsel %vm479, %v1419, 0
      %v1426 = vsel %vm479, %v1421, 0
      %1428 = vmatpush.bf16.xpose.msra.mxu0 0
      %1429 = vmatpush.bf16.xpose.msra.mxu0 0
      %1430 = vmatpush.bf16.xpose.msra.mxu0 0
      %1431 = vmatpush.bf16.xpose.msra.mxu0 0
      %1432 = vmatpush.bf16.xpose.msra.mxu0 0
      %1433 = vmatpush.bf16.xpose.msra.mxu0 0
      %1434 = vmatpush.bf16.xpose.msra.mxu0 0
      %1435 = vmatpush.bf16.xpose.msra.mxu0 %v1426
      %1436 = vmatmul.bf16.gmra.mxu0 %v1423
      %v1437 = vpop.f32.mrf.mxu0
      %v1438 = vadd.f32 0.0, %v1437
      %v1439 = vpop.f32.mrf.mxu0
      %1440 = vdwg.mxu0
      %1441 = vrot.lane.b32.xlu0 %v680, 112
      %v1442 = vpop.permute.xlu0 %1441
      %1443 = vrot.lane.b32.xlu0 %v680, 80
      %v1444 = vpop.permute.xlu0 %1443
      %v1446 = vsel %vm479, %v1442, 0
      %v1449 = vsel %vm479, %v1444, 0
      %1451 = vmatpush.bf16.xpose.msra.mxu0 0
      %1452 = vmatpush.bf16.xpose.msra.mxu0 0
      %1453 = vmatpush.bf16.xpose.msra.mxu0 0
      %1454 = vmatpush.bf16.xpose.msra.mxu0 0
      %1455 = vmatpush.bf16.xpose.msra.mxu0 0
      %1456 = vmatpush.bf16.xpose.msra.mxu0 0
      %1457 = vmatpush.bf16.xpose.msra.mxu0 0
      %1458 = vmatpush.bf16.xpose.msra.mxu0 %v1449
      %1459 = vmatmul.bf16.gmra.mxu0 %v1446
      %v1460 = vpop.f32.mrf.mxu0
      %v1461 = vadd.f32 0.0, %v1460
      %v1462 = vpop.f32.mrf.mxu0
      %1463 = vdwg.mxu0
      %1464 = vrot.lane.b32.xlu0 %v704, 112
      %v1465 = vpop.permute.xlu0 %1464
      %1466 = vrot.lane.b32.xlu0 %v704, 80
      %v1467 = vpop.permute.xlu0 %1466
      %v1469 = vsel %vm479, %v1465, 0
      %v1472 = vsel %vm479, %v1467, 0
      %1474 = vmatpush.bf16.xpose.msra.mxu0 0
      %1475 = vmatpush.bf16.xpose.msra.mxu0 0
      %1476 = vmatpush.bf16.xpose.msra.mxu0 0
      %1477 = vmatpush.bf16.xpose.msra.mxu0 0
      %1478 = vmatpush.bf16.xpose.msra.mxu0 0
      %1479 = vmatpush.bf16.xpose.msra.mxu0 0
      %1480 = vmatpush.bf16.xpose.msra.mxu0 0
      %1481 = vmatpush.bf16.xpose.msra.mxu0 %v1472
      %1482 = vmatmul.bf16.gmra.mxu0 %v1469
      %v1483 = vpop.f32.mrf.mxu0
      %v1484 = vadd.f32 0.0, %v1483
      %v1485 = vpop.f32.mrf.mxu0
      %1486 = vdwg.mxu0
      %1487 = vrot.lane.b32.xlu0 %v728, 112
      %v1488 = vpop.permute.xlu0 %1487
      %1489 = vrot.lane.b32.xlu0 %v728, 80
      %v1490 = vpop.permute.xlu0 %1489
      %v1492 = vsel %vm479, %v1488, 0
      %v1495 = vsel %vm479, %v1490, 0
      %1497 = vmatpush.bf16.xpose.msra.mxu0 0
      %1498 = vmatpush.bf16.xpose.msra.mxu0 0
      %1499 = vmatpush.bf16.xpose.msra.mxu0 0
      %1500 = vmatpush.bf16.xpose.msra.mxu0 0
      %1501 = vmatpush.bf16.xpose.msra.mxu0 0
      %1502 = vmatpush.bf16.xpose.msra.mxu0 0
      %1503 = vmatpush.bf16.xpose.msra.mxu0 0
      %1504 = vmatpush.bf16.xpose.msra.mxu0 %v1495
      %1505 = vmatmul.bf16.gmra.mxu0 %v1492
      %v1506 = vpop.f32.mrf.mxu0
      %v1507 = vadd.f32 0.0, %v1506
      %v1508 = vpop.f32.mrf.mxu0
      %1509 = vdwg.mxu0
      %v1510 = vmul.f32 %v1346, 0.25
      %v1511 = vmul.f32 %v1369, 0.25
      %v1512 = vmul.f32 %v1392, 0.25
      %v1513 = vmul.f32 %v1415, 0.25
      %v1514 = vmul.f32 %v1438, 0.25
      %v1515 = vmul.f32 %v1461, 0.25
      %v1516 = vmul.f32 %v1484, 0.25
      %v1517 = vmul.f32 %v1507, 0.25
      %v1518 = vsel %vm403, %v1510, -inf
      %1519 = vmax.xlane.f32.xlu0 %v1518
      %v1520 = vpop.xlane.xlu0 %1519
      %v1521 = vsel %vm403, %v1511, -inf
      %1522 = vmax.xlane.f32.xlu0 %v1521
      %v1523 = vpop.xlane.xlu0 %1522
      %v1524 = vsel %vm403, %v1512, -inf
      %1525 = vmax.xlane.f32.xlu0 %v1524
      %v1526 = vpop.xlane.xlu0 %1525
      %v1527 = vsel %vm403, %v1513, -inf
      %1528 = vmax.xlane.f32.xlu0 %v1527
      %v1529 = vpop.xlane.xlu0 %1528
      %v1530 = vsel %vm403, %v1514, -inf
      %1531 = vmax.xlane.f32.xlu0 %v1530
      %v1532 = vpop.xlane.xlu0 %1531
      %v1533 = vsel %vm403, %v1515, -inf
      %1534 = vmax.xlane.f32.xlu0 %v1533
      %v1535 = vpop.xlane.xlu0 %1534
      %v1536 = vsel %vm403, %v1516, -inf
      %1537 = vmax.xlane.f32.xlu0 %v1536
      %v1538 = vpop.xlane.xlu0 %1537
      %v1539 = vsel %vm403, %v1517, -inf
      %1540 = vmax.xlane.f32.xlu0 %v1539
      %v1541 = vpop.xlane.xlu0 %1540
      %v1542 = vsub.f32 %v1510, %v1520
      %v1543 = vsub.f32 %v1511, %v1523
      %v1544 = vsub.f32 %v1512, %v1526
      %v1545 = vsub.f32 %v1513, %v1529
      %v1546 = vsub.f32 %v1514, %v1532
      %v1547 = vsub.f32 %v1515, %v1535
      %v1548 = vsub.f32 %v1516, %v1538
      %v1549 = vsub.f32 %v1517, %v1541
      %v1550 = vmul.f32 %v1542, 1.442695
      %v1551 = vpow.pop %v1550
      %v1552 = vmul.f32 %v1543, 1.442695
      %v1553 = vpow.pop %v1552
      %v1554 = vmul.f32 %v1544, 1.442695
      %v1555 = vpow.pop %v1554
      %v1556 = vmul.f32 %v1545, 1.442695
      %v1557 = vpow.pop %v1556
      %v1558 = vmul.f32 %v1546, 1.442695
      %v1559 = vpow.pop %v1558
      %v1560 = vmul.f32 %v1547, 1.442695
      %v1561 = vpow.pop %v1560
      %v1562 = vmul.f32 %v1548, 1.442695
      %v1563 = vpow.pop %v1562
      %v1564 = vmul.f32 %v1549, 1.442695
      %v1565 = vpow.pop %v1564
      %v1566 = vsel %vm403, %v1551, 0.0
      %1567 = vadd.xlane.f32.xlu0 %v1566
      %v1568 = vpop.xlane.xlu0 %1567
      %v1569 = vsel %vm403, %v1553, 0.0
      %1570 = vadd.xlane.f32.xlu0 %v1569
      %v1571 = vpop.xlane.xlu0 %1570
      %v1572 = vsel %vm403, %v1555, 0.0
      %1573 = vadd.xlane.f32.xlu0 %v1572
      %v1574 = vpop.xlane.xlu0 %1573
      %v1575 = vsel %vm403, %v1557, 0.0
      %1576 = vadd.xlane.f32.xlu0 %v1575
      %v1577 = vpop.xlane.xlu0 %1576
      %v1578 = vsel %vm403, %v1559, 0.0
      %1579 = vadd.xlane.f32.xlu0 %v1578
      %v1580 = vpop.xlane.xlu0 %1579
      %v1581 = vsel %vm403, %v1561, 0.0
      %1582 = vadd.xlane.f32.xlu0 %v1581
      %v1583 = vpop.xlane.xlu0 %1582
      %v1584 = vsel %vm403, %v1563, 0.0
      %1585 = vadd.xlane.f32.xlu0 %v1584
      %v1586 = vpop.xlane.xlu0 %1585
      %v1587 = vsel %vm403, %v1565, 0.0
      %1588 = vadd.xlane.f32.xlu0 %v1587
      %v1589 = vpop.xlane.xlu0 %1588
      %v1590 = vrcp.pop %v1568
      %v1591 = vmul.f32 %v1568, %v1590
      %v1592 = vsub.f32 1.0, %v1591
      %v1593 = vmul.f32 %v1590, %v1592
      %v1594 = vadd.f32 %v1590, %v1593
      %vm1595 = vweird.f32 %v1568
      %vm1596 = vweird.f32 %v1590
      %vm1597 = vmor %vm1595, %vm1596
      %v1598 = vsel %vm1597, %v1590, %v1594
      %v1599 = vand.u32 2147483647, %v1568
      %vm1600 = vcmp.eq.f32.partialorder %v1599, 8.507059e+37
      %v1601 = vand.u32 %v1568, 2147483648
      %v1602 = vor.u32 1.1754944e-38, %v1601
      %v1603 = vsel %vm1600, %v1602, %v1598
      %v1604 = vmul.f32 %v1551, %v1603
      %v1605 = vrcp.pop %v1571
      %v1606 = vmul.f32 %v1571, %v1605
      %v1607 = vsub.f32 1.0, %v1606
      %v1608 = vmul.f32 %v1605, %v1607
      %v1609 = vadd.f32 %v1605, %v1608
      %vm1610 = vweird.f32 %v1571
      %vm1611 = vweird.f32 %v1605
      %vm1612 = vmor %vm1610, %vm1611
      %v1613 = vsel %vm1612, %v1605, %v1609
      %v1614 = vand.u32 2147483647, %v1571
      %vm1615 = vcmp.eq.f32.partialorder %v1614, 8.507059e+37
      %v1616 = vand.u32 %v1571, 2147483648
      %v1617 = vor.u32 1.1754944e-38, %v1616
      %v1618 = vsel %vm1615, %v1617, %v1613
      %v1619 = vmul.f32 %v1553, %v1618
      %v1620 = vrcp.pop %v1574
      %v1621 = vmul.f32 %v1574, %v1620
      %v1622 = vsub.f32 1.0, %v1621
      %v1623 = vmul.f32 %v1620, %v1622
      %v1624 = vadd.f32 %v1620, %v1623
      %vm1625 = vweird.f32 %v1574
      %vm1626 = vweird.f32 %v1620
      %vm1627 = vmor %vm1625, %vm1626
      %v1628 = vsel %vm1627, %v1620, %v1624
      %v1629 = vand.u32 2147483647, %v1574
      %vm1630 = vcmp.eq.f32.partialorder %v1629, 8.507059e+37
      %v1631 = vand.u32 %v1574, 2147483648
      %v1632 = vor.u32 1.1754944e-38, %v1631
      %v1633 = vsel %vm1630, %v1632, %v1628
      %v1634 = vmul.f32 %v1555, %v1633
      %v1635 = vrcp.pop %v1577
      %v1636 = vmul.f32 %v1577, %v1635
      %v1637 = vsub.f32 1.0, %v1636
      %v1638 = vmul.f32 %v1635, %v1637
      %v1639 = vadd.f32 %v1635, %v1638
      %vm1640 = vweird.f32 %v1577
      %vm1641 = vweird.f32 %v1635
      %vm1642 = vmor %vm1640, %vm1641
      %v1643 = vsel %vm1642, %v1635, %v1639
      %v1644 = vand.u32 2147483647, %v1577
      %vm1645 = vcmp.eq.f32.partialorder %v1644, 8.507059e+37
      %v1646 = vand.u32 %v1577, 2147483648
      %v1647 = vor.u32 1.1754944e-38, %v1646
      %v1648 = vsel %vm1645, %v1647, %v1643
      %v1649 = vmul.f32 %v1557, %v1648
      %v1650 = vrcp.pop %v1580
      %v1651 = vmul.f32 %v1580, %v1650
      %v1652 = vsub.f32 1.0, %v1651
      %v1653 = vmul.f32 %v1650, %v1652
      %v1654 = vadd.f32 %v1650, %v1653
      %vm1655 = vweird.f32 %v1580
      %vm1656 = vweird.f32 %v1650
      %vm1657 = vmor %vm1655, %vm1656
      %v1658 = vsel %vm1657, %v1650, %v1654
      %v1659 = vand.u32 2147483647, %v1580
      %vm1660 = vcmp.eq.f32.partialorder %v1659, 8.507059e+37
      %v1661 = vand.u32 %v1580, 2147483648
      %v1662 = vor.u32 1.1754944e-38, %v1661
      %v1663 = vsel %vm1660, %v1662, %v1658
      %v1664 = vmul.f32 %v1559, %v1663
      %v1665 = vrcp.pop %v1583
      %v1666 = vmul.f32 %v1583, %v1665
      %v1667 = vsub.f32 1.0, %v1666
      %v1668 = vmul.f32 %v1665, %v1667
      %v1669 = vadd.f32 %v1665, %v1668
      %vm1670 = vweird.f32 %v1583
      %vm1671 = vweird.f32 %v1665
      %vm1672 = vmor %vm1670, %vm1671
      %v1673 = vsel %vm1672, %v1665, %v1669
      %v1674 = vand.u32 2147483647, %v1583
      %vm1675 = vcmp.eq.f32.partialorder %v1674, 8.507059e+37
      %v1676 = vand.u32 %v1583, 2147483648
      %v1677 = vor.u32 1.1754944e-38, %v1676
      %v1678 = vsel %vm1675, %v1677, %v1673
      %v1679 = vmul.f32 %v1561, %v1678
      %v1680 = vrcp.pop %v1586
      %v1681 = vmul.f32 %v1586, %v1680
      %v1682 = vsub.f32 1.0, %v1681
      %v1683 = vmul.f32 %v1680, %v1682
      %v1684 = vadd.f32 %v1680, %v1683
      %vm1685 = vweird.f32 %v1586
      %vm1686 = vweird.f32 %v1680
      %vm1687 = vmor %vm1685, %vm1686
      %v1688 = vsel %vm1687, %v1680, %v1684
      %v1689 = vand.u32 2147483647, %v1586
      %vm1690 = vcmp.eq.f32.partialorder %v1689, 8.507059e+37
      %v1691 = vand.u32 %v1586, 2147483648
      %v1692 = vor.u32 1.1754944e-38, %v1691
      %v1693 = vsel %vm1690, %v1692, %v1688
      %v1694 = vmul.f32 %v1563, %v1693
      %v1695 = vrcp.pop %v1589
      %v1696 = vmul.f32 %v1589, %v1695
      %v1697 = vsub.f32 1.0, %v1696
      %v1698 = vmul.f32 %v1695, %v1697
      %v1699 = vadd.f32 %v1695, %v1698
      %vm1700 = vweird.f32 %v1589
      %vm1701 = vweird.f32 %v1695
      %vm1702 = vmor %vm1700, %vm1701
      %v1703 = vsel %vm1702, %v1695, %v1699
      %v1704 = vand.u32 2147483647, %v1589
      %vm1705 = vcmp.eq.f32.partialorder %v1704, 8.507059e+37
      %v1706 = vand.u32 %v1589, 2147483648
      %v1707 = vor.u32 1.1754944e-38, %v1706
      %v1708 = vsel %vm1705, %v1707, %v1703
      %v1709 = vmul.f32 %v1565, %v1708
      %v1710 = vpack.c.bf16 %v1604, %v1604
      %v1711 = vpack.c.bf16 %v1619, %v1619
      %v1712 = vpack.c.bf16 %v1634, %v1634
      %v1713 = vpack.c.bf16 %v1649, %v1649
      %v1714 = vpack.c.bf16 %v1664, %v1664
      %v1715 = vpack.c.bf16 %v1679, %v1679
      %v1716 = vpack.c.bf16 %v1694, %v1694
      %v1717 = vpack.c.bf16 %v1709, %v1709
      %1718 = vrot.lane.b32.xlu0 %v560, 48
      %v1719 = vpop.permute.xlu0 %1718
      %v1721 = vsel %vm403, %v1710, 0
      %v1724 = vsel %vm416, %v1719, 0
      %1726 = vmatpush.bf16.msra.mxu0 0
      %1727 = vmatpush.bf16.msra.mxu0 0
      %1728 = vmatpush.bf16.msra.mxu0 0
      %1729 = vmatpush.bf16.msra.mxu0 0
      %1730 = vmatpush.bf16.msra.mxu0 0
      %1731 = vmatpush.bf16.msra.mxu0 0
      %1732 = vmatpush.bf16.msra.mxu0 0
      %1733 = vmatpush.bf16.msra.mxu0 %v1724
      %1734 = vmatmul.bf16.gmra.mxu0 %v1721
      %v1735 = vpop.f32.mrf.mxu0
      %v1736 = vadd.f32 0.0, %v1735
      %v1737 = vpop.f32.mrf.mxu0
      %1738 = vdwg.mxu0
      %1739 = vrot.lane.b32.xlu0 %v584, 48
      %v1740 = vpop.permute.xlu0 %1739
      %v1742 = vsel %vm403, %v1711, 0
      %v1745 = vsel %vm416, %v1740, 0
      %1747 = vmatpush.bf16.msra.mxu0 0
      %1748 = vmatpush.bf16.msra.mxu0 0
      %1749 = vmatpush.bf16.msra.mxu0 0
      %1750 = vmatpush.bf16.msra.mxu0 0
      %1751 = vmatpush.bf16.msra.mxu0 0
      %1752 = vmatpush.bf16.msra.mxu0 0
      %1753 = vmatpush.bf16.msra.mxu0 0
      %1754 = vmatpush.bf16.msra.mxu0 %v1745
      %1755 = vmatmul.bf16.gmra.mxu0 %v1742
      %v1756 = vpop.f32.mrf.mxu0
      %v1757 = vadd.f32 0.0, %v1756
      %v1758 = vpop.f32.mrf.mxu0
      %1759 = vdwg.mxu0
      %1760 = vrot.lane.b32.xlu0 %v608, 48
      %v1761 = vpop.permute.xlu0 %1760
      %v1763 = vsel %vm403, %v1712, 0
      %v1766 = vsel %vm416, %v1761, 0
      %1768 = vmatpush.bf16.msra.mxu0 0
      %1769 = vmatpush.bf16.msra.mxu0 0
      %1770 = vmatpush.bf16.msra.mxu0 0
      %1771 = vmatpush.bf16.msra.mxu0 0
      %1772 = vmatpush.bf16.msra.mxu0 0
      %1773 = vmatpush.bf16.msra.mxu0 0
      %1774 = vmatpush.bf16.msra.mxu0 0
      %1775 = vmatpush.bf16.msra.mxu0 %v1766
      %1776 = vmatmul.bf16.gmra.mxu0 %v1763
      %v1777 = vpop.f32.mrf.mxu0
      %v1778 = vadd.f32 0.0, %v1777
      %v1779 = vpop.f32.mrf.mxu0
      %1780 = vdwg.mxu0
      %1781 = vrot.lane.b32.xlu0 %v632, 48
      %v1782 = vpop.permute.xlu0 %1781
      %v1784 = vsel %vm403, %v1713, 0
      %v1787 = vsel %vm416, %v1782, 0
      %1789 = vmatpush.bf16.msra.mxu0 0
      %1790 = vmatpush.bf16.msra.mxu0 0
      %1791 = vmatpush.bf16.msra.mxu0 0
      %1792 = vmatpush.bf16.msra.mxu0 0
      %1793 = vmatpush.bf16.msra.mxu0 0
      %1794 = vmatpush.bf16.msra.mxu0 0
      %1795 = vmatpush.bf16.msra.mxu0 0
      %1796 = vmatpush.bf16.msra.mxu0 %v1787
      %1797 = vmatmul.bf16.gmra.mxu0 %v1784
      %v1798 = vpop.f32.mrf.mxu0
      %v1799 = vadd.f32 0.0, %v1798
      %v1800 = vpop.f32.mrf.mxu0
      %1801 = vdwg.mxu0
      %1802 = vrot.lane.b32.xlu0 %v656, 48
      %v1803 = vpop.permute.xlu0 %1802
      %v1805 = vsel %vm403, %v1714, 0
      %v1808 = vsel %vm416, %v1803, 0
      %1810 = vmatpush.bf16.msra.mxu0 0
      %1811 = vmatpush.bf16.msra.mxu0 0
      %1812 = vmatpush.bf16.msra.mxu0 0
      %1813 = vmatpush.bf16.msra.mxu0 0
      %1814 = vmatpush.bf16.msra.mxu0 0
      %1815 = vmatpush.bf16.msra.mxu0 0
      %1816 = vmatpush.bf16.msra.mxu0 0
      %1817 = vmatpush.bf16.msra.mxu0 %v1808
      %1818 = vmatmul.bf16.gmra.mxu0 %v1805
      %v1819 = vpop.f32.mrf.mxu0
      %v1820 = vadd.f32 0.0, %v1819
      %v1821 = vpop.f32.mrf.mxu0
      %1822 = vdwg.mxu0
      %1823 = vrot.lane.b32.xlu0 %v680, 48
      %v1824 = vpop.permute.xlu0 %1823
      %v1826 = vsel %vm403, %v1715, 0
      %v1829 = vsel %vm416, %v1824, 0
      %1831 = vmatpush.bf16.msra.mxu0 0
      %1832 = vmatpush.bf16.msra.mxu0 0
      %1833 = vmatpush.bf16.msra.mxu0 0
      %1834 = vmatpush.bf16.msra.mxu0 0
      %1835 = vmatpush.bf16.msra.mxu0 0
      %1836 = vmatpush.bf16.msra.mxu0 0
      %1837 = vmatpush.bf16.msra.mxu0 0
      %1838 = vmatpush.bf16.msra.mxu0 %v1829
      %1839 = vmatmul.bf16.gmra.mxu0 %v1826
      %v1840 = vpop.f32.mrf.mxu0
      %v1841 = vadd.f32 0.0, %v1840
      %v1842 = vpop.f32.mrf.mxu0
      %1843 = vdwg.mxu0
      %1844 = vrot.lane.b32.xlu0 %v704, 48
      %v1845 = vpop.permute.xlu0 %1844
      %v1847 = vsel %vm403, %v1716, 0
      %v1850 = vsel %vm416, %v1845, 0
      %1852 = vmatpush.bf16.msra.mxu0 0
      %1853 = vmatpush.bf16.msra.mxu0 0
      %1854 = vmatpush.bf16.msra.mxu0 0
      %1855 = vmatpush.bf16.msra.mxu0 0
      %1856 = vmatpush.bf16.msra.mxu0 0
      %1857 = vmatpush.bf16.msra.mxu0 0
      %1858 = vmatpush.bf16.msra.mxu0 0
      %1859 = vmatpush.bf16.msra.mxu0 %v1850
      %1860 = vmatmul.bf16.gmra.mxu0 %v1847
      %v1861 = vpop.f32.mrf.mxu0
      %v1862 = vadd.f32 0.0, %v1861
      %v1863 = vpop.f32.mrf.mxu0
      %1864 = vdwg.mxu0
      %1865 = vrot.lane.b32.xlu0 %v728, 48
      %v1866 = vpop.permute.xlu0 %1865
      %v1868 = vsel %vm403, %v1717, 0
      %v1871 = vsel %vm416, %v1866, 0
      %1873 = vmatpush.bf16.msra.mxu0 0
      %1874 = vmatpush.bf16.msra.mxu0 0
      %1875 = vmatpush.bf16.msra.mxu0 0
      %1876 = vmatpush.bf16.msra.mxu0 0
      %1877 = vmatpush.bf16.msra.mxu0 0
      %1878 = vmatpush.bf16.msra.mxu0 0
      %1879 = vmatpush.bf16.msra.mxu0 0
      %1880 = vmatpush.bf16.msra.mxu0 %v1871
      %1881 = vmatmul.bf16.gmra.mxu0 %v1868
      %v1882 = vpop.f32.mrf.mxu0
      %v1883 = vadd.f32 0.0, %v1882
      %v1884 = vpop.f32.mrf.mxu0
      %1885 = vdwg.mxu0
      %1894 = vrot.lane.b32.xlu0 %v1736, 112
      %v1895 = vpop.permute.xlu0 %1894
      %1896 = vrot.lane.b32.xlu0 %v1757, 112
      %v1897 = vpop.permute.xlu0 %1896
      %1898 = vrot.lane.b32.xlu0 %v1778, 112
      %v1899 = vpop.permute.xlu0 %1898
      %1900 = vrot.lane.b32.xlu0 %v1799, 112
      %v1901 = vpop.permute.xlu0 %1900
      %1902 = vrot.lane.b32.xlu0 %v1820, 112
      %v1903 = vpop.permute.xlu0 %1902
      %1904 = vrot.lane.b32.xlu0 %v1841, 112
      %v1905 = vpop.permute.xlu0 %1904
      %1906 = vrot.lane.b32.xlu0 %v1862, 112
      %v1907 = vpop.permute.xlu0 %1906
      %1908 = vrot.lane.b32.xlu0 %v1883, 112
      %v1909 = vpop.permute.xlu0 %1908
      %v1918 = vmul.f32 %v1172, %v1895
      %v1919 = vmul.f32 %v1187, %v1897
      %v1920 = vmul.f32 %v1202, %v1899
      %v1921 = vmul.f32 %v1217, %v1901
      %v1922 = vmul.f32 %v1232, %v1903
      %v1923 = vmul.f32 %v1247, %v1905
      %v1924 = vmul.f32 %v1262, %v1907
      %v1925 = vmul.f32 %v1277, %v1909
      %1934 = vrot.lane.b32.xlu0 %v1918, 112
      %v1935 = vpop.permute.xlu0 %1934
      %1936 = vrot.lane.b32.xlu0 %v1919, 112
      %v1937 = vpop.permute.xlu0 %1936
      %1938 = vrot.lane.b32.xlu0 %v1920, 112
      %v1939 = vpop.permute.xlu0 %1938
      %1940 = vrot.lane.b32.xlu0 %v1921, 112
      %v1941 = vpop.permute.xlu0 %1940
      %1942 = vrot.lane.b32.xlu0 %v1922, 112
      %v1943 = vpop.permute.xlu0 %1942
      %1944 = vrot.lane.b32.xlu0 %v1923, 112
      %v1945 = vpop.permute.xlu0 %1944
      %1946 = vrot.lane.b32.xlu0 %v1924, 112
      %v1947 = vpop.permute.xlu0 %1946
      %1948 = vrot.lane.b32.xlu0 %v1925, 112
      %v1949 = vpop.permute.xlu0 %1948
      %v1958 = vadd.f32 %v1318, %v1935
      %v1959 = vadd.f32 %v1319, %v1937
      %v1960 = vadd.f32 %v1320, %v1939
      %v1961 = vadd.f32 %v1321, %v1941
      %v1962 = vadd.f32 %v1322, %v1943
      %v1963 = vadd.f32 %v1323, %v1945
      %v1964 = vadd.f32 %v1324, %v1947
      %v1965 = vadd.f32 %v1325, %v1949
      %v1966 = vmul.f32 %v1958, 0.5
      %v1967 = vmul.f32 %v1959, 0.5
      %v1968 = vmul.f32 %v1960, 0.5
      %v1969 = vmul.f32 %v1961, 0.5
      %v1970 = vmul.f32 %v1962, 0.5
      %v1971 = vmul.f32 %v1963, 0.5
      %v1972 = vmul.f32 %v1964, 0.5
      %v1973 = vmul.f32 %v1965, 0.5
      %1982 = vrot.lane.b32.xlu0 %v1966, 48
      %v1983 = vpop.permute.xlu0 %1982
      %1984 = vrot.lane.b32.xlu0 %v1967, 48
      %v1985 = vpop.permute.xlu0 %1984
      %1986 = vrot.lane.b32.xlu0 %v1968, 48
      %v1987 = vpop.permute.xlu0 %1986
      %1988 = vrot.lane.b32.xlu0 %v1969, 48
      %v1989 = vpop.permute.xlu0 %1988
      %1990 = vrot.lane.b32.xlu0 %v1970, 48
      %v1991 = vpop.permute.xlu0 %1990
      %1992 = vrot.lane.b32.xlu0 %v1971, 48
      %v1993 = vpop.permute.xlu0 %1992
      %1994 = vrot.lane.b32.xlu0 %v1972, 48
      %v1995 = vpop.permute.xlu0 %1994
      %1996 = vrot.lane.b32.xlu0 %v1973, 48
      %v1997 = vpop.permute.xlu0 %1996
      %v2006 = vsel %vm479, %v531, %v1983
      %v2007 = vsel %vm479, %v533, %v1985
      %v2008 = vsel %vm479, %v536, %v1987
      %v2009 = vsel %vm479, %v538, %v1989
      %v2010 = vsel %vm479, %v541, %v1991
      %v2011 = vsel %vm479, %v543, %v1993
      %v2012 = vsel %vm479, %v546, %v1995
      %v2013 = vsel %vm479, %v548, %v1997
      %v2014 = vld [vmem:[%s5] sm:$0xf]
      %v2015 = vld [vmem:[%s5 + $0x4] sm:$0xf]
      %v2016 = vld [vmem:[%s5 + $0x8] sm:$0xf]
      %v2017 = vld [vmem:[%s5 + $0xc] sm:$0xf]
      %v2018 = vld [vmem:[%s6] sm:$0xf]
      %v2019 = vld [vmem:[%s6 + $0x4] sm:$0xf]
      %v2020 = vld [vmem:[%s6 + $0x8] sm:$0xf]
      %v2021 = vld [vmem:[%s6 + $0xc] sm:$0xf]
      %v2022 = vld [vmem:[%s7] sm:$0x1]
      %v2023 = vld [vmem:[%s8] sm:$0x1]
      %v2024 = vpack.c.bf16 %v2006, %v2006
      %v2026 = vperm.slane %v2022, 0
      %v2032 = vunpack.c.l.b16 %v2014
      %v2033 = vunpack.c.l.b16 %v2015
      %v2034 = vunpack.c.l.b16 %v2016
      %v2035 = vunpack.c.l.b16 %v2017
      %v2036 = vpack.c.b16 %v2033, %v2032
      %v2037 = vpack.c.b16 %v2035, %v2034
      %vm2040 = vcmask 261120
      %v2042 = vsel %vm2040, %v2024, 0
      %2044 = vmatpush.bf16.msra.mxu0 0
      %2045 = vmatpush.bf16.msra.mxu0 0
      %2046 = vmatpush.bf16.msra.mxu0 0
      %2047 = vmatpush.bf16.msra.mxu0 0
      %2048 = vmatpush.bf16.msra.mxu0 0
      %2049 = vmatpush.bf16.msra.mxu0 0
      %2050 = vmatpush.bf16.msra.mxu0 %v2037
      %2051 = vmatpush.bf16.msra.mxu0 %v2036
      %2052 = vmatmul.bf16.gmra.mxu0 %v2042
      %v2053 = vpop.f32.mrf.mxu0
      %v2054 = vadd.f32 %v2026, %v2053
      %v2055 = vpop.f32.mrf.mxu0
      %2056 = vdwg.mxu0
      %v2058 = vperm.slane %v2023, 0
      %v2064 = vunpack.c.l.b16 %v2018
      %v2065 = vunpack.c.l.b16 %v2019
      %v2066 = vunpack.c.l.b16 %v2020
      %v2067 = vunpack.c.l.b16 %v2021
      %v2068 = vpack.c.b16 %v2065, %v2064
      %v2069 = vpack.c.b16 %v2067, %v2066
      %v2073 = vsel %vm2040, 0, 0
      %2075 = vmatpush.bf16.msra.mxu0 0
      %2076 = vmatpush.bf16.msra.mxu0 0
      %2077 = vmatpush.bf16.msra.mxu0 0
      %2078 = vmatpush.bf16.msra.mxu0 0
      %2079 = vmatpush.bf16.msra.mxu0 0
      %2080 = vmatpush.bf16.msra.mxu0 0
      %2081 = vmatpush.bf16.msra.mxu0 %v2069
      %2082 = vmatpush.bf16.msra.mxu0 %v2068
      %2083 = vmatmul.bf16.gmra.mxu0 %v2073
      %v2084 = vpop.f32.mrf.mxu0
      %v2085 = vadd.f32 %v2058, %v2084
      %v2086 = vpop.f32.mrf.mxu0
      %2087 = vdwg.mxu0
      %v2088 = vadd.f32 %v2054, %v2085
      %v2089 = vxor.u32 %v2088, 2147483648
      %v2090 = vmul.f32 %v2089, 1.442695
      %v2091 = vpow.pop %v2090
      %v2092 = vadd.f32 %v2091, 1.0
      %v2093 = vrcp.pop %v2092
      %v2094 = vmul.f32 %v2092, %v2093
      %v2095 = vsub.f32 1.0, %v2094
      %v2096 = vmul.f32 %v2093, %v2095
      %v2097 = vadd.f32 %v2093, %v2096
      %vm2098 = vweird.f32 %v2092
      %vm2099 = vweird.f32 %v2093
      %vm2100 = vmor %vm2098, %vm2099
      %v2101 = vsel %vm2100, %v2093, %v2097
      %v2102 = vand.u32 2147483647, %v2092
      %vm2103 = vcmp.eq.f32.partialorder %v2102, 8.507059e+37
      %v2104 = vand.u32 %v2092, 2147483648
      %v2105 = vor.u32 1.1754944e-38, %v2104
      %v2106 = vsel %vm2103, %v2105, %v2101
      %v2107 = vmul.f32 1.0, %v2106
      %2109 = vrot.lane.b32.xlu0 %v2085, 64
      %v2110 = vpop.permute.xlu0 %2109
      %v2112 = vmul.f32 %v2107, %v2110
      %2114 = vrot.lane.b32.xlu0 %v2112, 64
      %v2115 = vpop.permute.xlu0 %2114
      %v2117 = vadd.f32 %v2054, %v2115
      %v2118 = vtanh.pop %v2117
      %v2119 = vsub.f32 1.0, %v2107
      %2121 = vrot.lane.b32.xlu0 %v2118, 96
      %v2122 = vpop.permute.xlu0 %2121
      %v2124 = vmul.f32 %v2119, %v2122
      %v2125 = vmul.f32 %v2107, 0.0
      %v2126 = vadd.f32 %v2124, %v2125
      %v2127 = vpack.c.bf16 %v2007, %v2007
      %v2129 = vsel %vm2040, %v2127, 0
      %2131 = vmatpush.bf16.msra.mxu0 0
      %2132 = vmatpush.bf16.msra.mxu0 0
      %2133 = vmatpush.bf16.msra.mxu0 0
      %2134 = vmatpush.bf16.msra.mxu0 0
      %2135 = vmatpush.bf16.msra.mxu0 0
      %2136 = vmatpush.bf16.msra.mxu0 0
      %2137 = vmatpush.bf16.msra.mxu0 %v2037
      %2138 = vmatpush.bf16.msra.mxu0 %v2036
      %2139 = vmatmul.bf16.gmra.mxu0 %v2129
      %v2140 = vpop.f32.mrf.mxu0
      %v2141 = vadd.f32 %v2026, %v2140
      %v2142 = vpop.f32.mrf.mxu0
      %2143 = vdwg.mxu0
      %v2144 = vpack.c.bf16 %v2126, %v2126
      %2146 = vrot.lane.b32.xlu0 %v2144, 96
      %v2147 = vpop.permute.xlu0 %2146
      %v2149 = vsel %vm2040, %v2147, 0
      %2151 = vmatpush.bf16.msra.mxu0 0
      %2152 = vmatpush.bf16.msra.mxu0 0
      %2153 = vmatpush.bf16.msra.mxu0 0
      %2154 = vmatpush.bf16.msra.mxu0 0
      %2155 = vmatpush.bf16.msra.mxu0 0
      %2156 = vmatpush.bf16.msra.mxu0 0
      %2157 = vmatpush.bf16.msra.mxu0 %v2069
      %2158 = vmatpush.bf16.msra.mxu0 %v2068
      %2159 = vmatmul.bf16.gmra.mxu0 %v2149
      %v2160 = vpop.f32.mrf.mxu0
      %v2161 = vadd.f32 %v2058, %v2160
      %v2162 = vpop.f32.mrf.mxu0
      %2163 = vdwg.mxu0
      %v2164 = vadd.f32 %v2141, %v2161
      %v2165 = vxor.u32 %v2164, 2147483648
      %v2166 = vmul.f32 %v2165, 1.442695
      %v2167 = vpow.pop %v2166
      %v2168 = vadd.f32 %v2167, 1.0
      %v2169 = vrcp.pop %v2168
      %v2170 = vmul.f32 %v2168, %v2169
      %v2171 = vsub.f32 1.0, %v2170
      %v2172 = vmul.f32 %v2169, %v2171
      %v2173 = vadd.f32 %v2169, %v2172
      %vm2174 = vweird.f32 %v2168
      %vm2175 = vweird.f32 %v2169
      %vm2176 = vmor %vm2174, %vm2175
      %v2177 = vsel %vm2176, %v2169, %v2173
      %v2178 = vand.u32 2147483647, %v2168
      %vm2179 = vcmp.eq.f32.partialorder %v2178, 8.507059e+37
      %v2180 = vand.u32 %v2168, 2147483648
      %v2181 = vor.u32 1.1754944e-38, %v2180
      %v2182 = vsel %vm2179, %v2181, %v2177
      %v2183 = vmul.f32 1.0, %v2182
      %2185 = vrot.lane.b32.xlu0 %v2161, 64
      %v2186 = vpop.permute.xlu0 %2185
      %v2188 = vmul.f32 %v2183, %v2186
      %2190 = vrot.lane.b32.xlu0 %v2188, 64
      %v2191 = vpop.permute.xlu0 %2190
      %v2193 = vadd.f32 %v2141, %v2191
      %v2194 = vtanh.pop %v2193
      %v2195 = vsub.f32 1.0, %v2183
      %2197 = vrot.lane.b32.xlu0 %v2194, 96
      %v2198 = vpop.permute.xlu0 %2197
      %v2200 = vmul.f32 %v2195, %v2198
      %v2201 = vmul.f32 %v2183, %v2126
      %v2202 = vadd.f32 %v2200, %v2201
      %v2203 = vpack.c.bf16 %v2008, %v2008
      %v2205 = vsel %vm2040, %v2203, 0
      %2207 = vmatpush.bf16.msra.mxu0 0
      %2208 = vmatpush.bf16.msra.mxu0 0
      %2209 = vmatpush.bf16.msra.mxu0 0
      %2210 = vmatpush.bf16.msra.mxu0 0
      %2211 = vmatpush.bf16.msra.mxu0 0
      %2212 = vmatpush.bf16.msra.mxu0 0
      %2213 = vmatpush.bf16.msra.mxu0 %v2037
      %2214 = vmatpush.bf16.msra.mxu0 %v2036
      %2215 = vmatmul.bf16.gmra.mxu0 %v2205
      %v2216 = vpop.f32.mrf.mxu0
      %v2217 = vadd.f32 %v2026, %v2216
      %v2218 = vpop.f32.mrf.mxu0
      %2219 = vdwg.mxu0
      %v2220 = vpack.c.bf16 %v2202, %v2202
      %2222 = vrot.lane.b32.xlu0 %v2220, 96
      %v2223 = vpop.permute.xlu0 %2222
      %v2225 = vsel %vm2040, %v2223, 0
      %2227 = vmatpush.bf16.msra.mxu0 0
      %2228 = vmatpush.bf16.msra.mxu0 0
      %2229 = vmatpush.bf16.msra.mxu0 0
      %2230 = vmatpush.bf16.msra.mxu0 0
      %2231 = vmatpush.bf16.msra.mxu0 0
      %2232 = vmatpush.bf16.msra.mxu0 0
      %2233 = vmatpush.bf16.msra.mxu0 %v2069
      %2234 = vmatpush.bf16.msra.mxu0 %v2068
      %2235 = vmatmul.bf16.gmra.mxu0 %v2225
      %v2236 = vpop.f32.mrf.mxu0
      %v2237 = vadd.f32 %v2058, %v2236
      %v2238 = vpop.f32.mrf.mxu0
      %2239 = vdwg.mxu0
      %v2240 = vadd.f32 %v2217, %v2237
      %v2241 = vxor.u32 %v2240, 2147483648
      %v2242 = vmul.f32 %v2241, 1.442695
      %v2243 = vpow.pop %v2242
      %v2244 = vadd.f32 %v2243, 1.0
      %v2245 = vrcp.pop %v2244
      %v2246 = vmul.f32 %v2244, %v2245
      %v2247 = vsub.f32 1.0, %v2246
      %v2248 = vmul.f32 %v2245, %v2247
      %v2249 = vadd.f32 %v2245, %v2248
      %vm2250 = vweird.f32 %v2244
      %vm2251 = vweird.f32 %v2245
      %vm2252 = vmor %vm2250, %vm2251
      %v2253 = vsel %vm2252, %v2245, %v2249
      %v2254 = vand.u32 2147483647, %v2244
      %vm2255 = vcmp.eq.f32.partialorder %v2254, 8.507059e+37
      %v2256 = vand.u32 %v2244, 2147483648
      %v2257 = vor.u32 1.1754944e-38, %v2256
      %v2258 = vsel %vm2255, %v2257, %v2253
      %v2259 = vmul.f32 1.0, %v2258
      %2261 = vrot.lane.b32.xlu0 %v2237, 64
      %v2262 = vpop.permute.xlu0 %2261
      %v2264 = vmul.f32 %v2259, %v2262
      %2266 = vrot.lane.b32.xlu0 %v2264, 64
      %v2267 = vpop.permute.xlu0 %2266
      %v2269 = vadd.f32 %v2217, %v2267
      %v2270 = vtanh.pop %v2269
      %v2271 = vsub.f32 1.0, %v2259
      %2273 = vrot.lane.b32.xlu0 %v2270, 96
      %v2274 = vpop.permute.xlu0 %2273
      %v2276 = vmul.f32 %v2271, %v2274
      %v2277 = vmul.f32 %v2259, %v2202
      %v2278 = vadd.f32 %v2276, %v2277
      %v2279 = vpack.c.bf16 %v2009, %v2009
      %v2281 = vsel %vm2040, %v2279, 0
      %2283 = vmatpush.bf16.msra.mxu0 0
      %2284 = vmatpush.bf16.msra.mxu0 0
      %2285 = vmatpush.bf16.msra.mxu0 0
      %2286 = vmatpush.bf16.msra.mxu0 0
      %2287 = vmatpush.bf16.msra.mxu0 0
      %2288 = vmatpush.bf16.msra.mxu0 0
      %2289 = vmatpush.bf16.msra.mxu0 %v2037
      %2290 = vmatpush.bf16.msra.mxu0 %v2036
      %2291 = vmatmul.bf16.gmra.mxu0 %v2281
      %v2292 = vpop.f32.mrf.mxu0
      %v2293 = vadd.f32 %v2026, %v2292
      %v2294 = vpop.f32.mrf.mxu0
      %2295 = vdwg.mxu0
      %v2296 = vpack.c.bf16 %v2278, %v2278
      %2298 = vrot.lane.b32.xlu0 %v2296, 96
      %v2299 = vpop.permute.xlu0 %2298
      %v2301 = vsel %vm2040, %v2299, 0
      %2303 = vmatpush.bf16.msra.mxu0 0
      %2304 = vmatpush.bf16.msra.mxu0 0
      %2305 = vmatpush.bf16.msra.mxu0 0
      %2306 = vmatpush.bf16.msra.mxu0 0
      %2307 = vmatpush.bf16.msra.mxu0 0
      %2308 = vmatpush.bf16.msra.mxu0 0
      %2309 = vmatpush.bf16.msra.mxu0 %v2069
      %2310 = vmatpush.bf16.msra.mxu0 %v2068
      %2311 = vmatmul.bf16.gmra.mxu0 %v2301
      %v2312 = vpop.f32.mrf.mxu0
      %v2313 = vadd.f32 %v2058, %v2312
      %v2314 = vpop.f32.mrf.mxu0
      %2315 = vdwg.mxu0
      %v2316 = vadd.f32 %v2293, %v2313
      %v2317 = vxor.u32 %v2316, 2147483648
      %v2318 = vmul.f32 %v2317, 1.442695
      %v2319 = vpow.pop %v2318
      %v2320 = vadd.f32 %v2319, 1.0
      %v2321 = vrcp.pop %v2320
      %v2322 = vmul.f32 %v2320, %v2321
      %v2323 = vsub.f32 1.0, %v2322
      %v2324 = vmul.f32 %v2321, %v2323
      %v2325 = vadd.f32 %v2321, %v2324
      %vm2326 = vweird.f32 %v2320
      %vm2327 = vweird.f32 %v2321
      %vm2328 = vmor %vm2326, %vm2327
      %v2329 = vsel %vm2328, %v2321, %v2325
      %v2330 = vand.u32 2147483647, %v2320
      %vm2331 = vcmp.eq.f32.partialorder %v2330, 8.507059e+37
      %v2332 = vand.u32 %v2320, 2147483648
      %v2333 = vor.u32 1.1754944e-38, %v2332
      %v2334 = vsel %vm2331, %v2333, %v2329
      %v2335 = vmul.f32 1.0, %v2334
      %2337 = vrot.lane.b32.xlu0 %v2313, 64
      %v2338 = vpop.permute.xlu0 %2337
      %v2340 = vmul.f32 %v2335, %v2338
      %2342 = vrot.lane.b32.xlu0 %v2340, 64
      %v2343 = vpop.permute.xlu0 %2342
      %v2345 = vadd.f32 %v2293, %v2343
      %v2346 = vtanh.pop %v2345
      %v2347 = vsub.f32 1.0, %v2335
      %2349 = vrot.lane.b32.xlu0 %v2346, 96
      %v2350 = vpop.permute.xlu0 %2349
      %v2352 = vmul.f32 %v2347, %v2350
      %v2353 = vmul.f32 %v2335, %v2278
      %v2354 = vadd.f32 %v2352, %v2353
      %v2355 = vpack.c.bf16 %v2010, %v2010
      %v2357 = vsel %vm2040, %v2355, 0
      %2359 = vmatpush.bf16.msra.mxu0 0
      %2360 = vmatpush.bf16.msra.mxu0 0
      %2361 = vmatpush.bf16.msra.mxu0 0
      %2362 = vmatpush.bf16.msra.mxu0 0
      %2363 = vmatpush.bf16.msra.mxu0 0
      %2364 = vmatpush.bf16.msra.mxu0 0
      %2365 = vmatpush.bf16.msra.mxu0 %v2037
      %2366 = vmatpush.bf16.msra.mxu0 %v2036
      %2367 = vmatmul.bf16.gmra.mxu0 %v2357
      %v2368 = vpop.f32.mrf.mxu0
      %v2369 = vadd.f32 %v2026, %v2368
      %v2370 = vpop.f32.mrf.mxu0
      %2371 = vdwg.mxu0
      %v2372 = vpack.c.bf16 %v2354, %v2354
      %2374 = vrot.lane.b32.xlu0 %v2372, 96
      %v2375 = vpop.permute.xlu0 %2374
      %v2377 = vsel %vm2040, %v2375, 0
      %2379 = vmatpush.bf16.msra.mxu0 0
      %2380 = vmatpush.bf16.msra.mxu0 0
      %2381 = vmatpush.bf16.msra.mxu0 0
      %2382 = vmatpush.bf16.msra.mxu0 0
      %2383 = vmatpush.bf16.msra.mxu0 0
      %2384 = vmatpush.bf16.msra.mxu0 0
      %2385 = vmatpush.bf16.msra.mxu0 %v2069
      %2386 = vmatpush.bf16.msra.mxu0 %v2068
      %2387 = vmatmul.bf16.gmra.mxu0 %v2377
      %v2388 = vpop.f32.mrf.mxu0
      %v2389 = vadd.f32 %v2058, %v2388
      %v2390 = vpop.f32.mrf.mxu0
      %2391 = vdwg.mxu0
      %v2392 = vadd.f32 %v2369, %v2389
      %v2393 = vxor.u32 %v2392, 2147483648
      %v2394 = vmul.f32 %v2393, 1.442695
      %v2395 = vpow.pop %v2394
      %v2396 = vadd.f32 %v2395, 1.0
      %v2397 = vrcp.pop %v2396
      %v2398 = vmul.f32 %v2396, %v2397
      %v2399 = vsub.f32 1.0, %v2398
      %v2400 = vmul.f32 %v2397, %v2399
      %v2401 = vadd.f32 %v2397, %v2400
      %vm2402 = vweird.f32 %v2396
      %vm2403 = vweird.f32 %v2397
      %vm2404 = vmor %vm2402, %vm2403
      %v2405 = vsel %vm2404, %v2397, %v2401
      %v2406 = vand.u32 2147483647, %v2396
      %vm2407 = vcmp.eq.f32.partialorder %v2406, 8.507059e+37
      %v2408 = vand.u32 %v2396, 2147483648
      %v2409 = vor.u32 1.1754944e-38, %v2408
      %v2410 = vsel %vm2407, %v2409, %v2405
      %v2411 = vmul.f32 1.0, %v2410
      %2413 = vrot.lane.b32.xlu0 %v2389, 64
      %v2414 = vpop.permute.xlu0 %2413
      %v2416 = vmul.f32 %v2411, %v2414
      %2418 = vrot.lane.b32.xlu0 %v2416, 64
      %v2419 = vpop.permute.xlu0 %2418
      %v2421 = vadd.f32 %v2369, %v2419
      %v2422 = vtanh.pop %v2421
      %v2423 = vsub.f32 1.0, %v2411
      %2425 = vrot.lane.b32.xlu0 %v2422, 96
      %v2426 = vpop.permute.xlu0 %2425
      %v2428 = vmul.f32 %v2423, %v2426
      %v2429 = vmul.f32 %v2411, %v2354
      %v2430 = vadd.f32 %v2428, %v2429
      %v2431 = vpack.c.bf16 %v2011, %v2011
      %v2433 = vsel %vm2040, %v2431, 0
      %2435 = vmatpush.bf16.msra.mxu0 0
      %2436 = vmatpush.bf16.msra.mxu0 0
      %2437 = vmatpush.bf16.msra.mxu0 0
      %2438 = vmatpush.bf16.msra.mxu0 0
      %2439 = vmatpush.bf16.msra.mxu0 0
      %2440 = vmatpush.bf16.msra.mxu0 0
      %2441 = vmatpush.bf16.msra.mxu0 %v2037
      %2442 = vmatpush.bf16.msra.mxu0 %v2036
      %2443 = vmatmul.bf16.gmra.mxu0 %v2433
      %v2444 = vpop.f32.mrf.mxu0
      %v2445 = vadd.f32 %v2026, %v2444
      %v2446 = vpop.f32.mrf.mxu0
      %2447 = vdwg.mxu0
      %v2448 = vpack.c.bf16 %v2430, %v2430
      %2450 = vrot.lane.b32.xlu0 %v2448, 96
      %v2451 = vpop.permute.xlu0 %2450
      %v2453 = vsel %vm2040, %v2451, 0
      %2455 = vmatpush.bf16.msra.mxu0 0
      %2456 = vmatpush.bf16.msra.mxu0 0
      %2457 = vmatpush.bf16.msra.mxu0 0
      %2458 = vmatpush.bf16.msra.mxu0 0
      %2459 = vmatpush.bf16.msra.mxu0 0
      %2460 = vmatpush.bf16.msra.mxu0 0
      %2461 = vmatpush.bf16.msra.mxu0 %v2069
      %2462 = vmatpush.bf16.msra.mxu0 %v2068
      %2463 = vmatmul.bf16.gmra.mxu0 %v2453
      %v2464 = vpop.f32.mrf.mxu0
      %v2465 = vadd.f32 %v2058, %v2464
      %v2466 = vpop.f32.mrf.mxu0
      %2467 = vdwg.mxu0
      %v2468 = vadd.f32 %v2445, %v2465
      %v2469 = vxor.u32 %v2468, 2147483648
      %v2470 = vmul.f32 %v2469, 1.442695
      %v2471 = vpow.pop %v2470
      %v2472 = vadd.f32 %v2471, 1.0
      %v2473 = vrcp.pop %v2472
      %v2474 = vmul.f32 %v2472, %v2473
      %v2475 = vsub.f32 1.0, %v2474
      %v2476 = vmul.f32 %v2473, %v2475
      %v2477 = vadd.f32 %v2473, %v2476
      %vm2478 = vweird.f32 %v2472
      %vm2479 = vweird.f32 %v2473
      %vm2480 = vmor %vm2478, %vm2479
      %v2481 = vsel %vm2480, %v2473, %v2477
      %v2482 = vand.u32 2147483647, %v2472
      %vm2483 = vcmp.eq.f32.partialorder %v2482, 8.507059e+37
      %v2484 = vand.u32 %v2472, 2147483648
      %v2485 = vor.u32 1.1754944e-38, %v2484
      %v2486 = vsel %vm2483, %v2485, %v2481
      %v2487 = vmul.f32 1.0, %v2486
      %2489 = vrot.lane.b32.xlu0 %v2465, 64
      %v2490 = vpop.permute.xlu0 %2489
      %v2492 = vmul.f32 %v2487, %v2490
      %2494 = vrot.lane.b32.xlu0 %v2492, 64
      %v2495 = vpop.permute.xlu0 %2494
      %v2497 = vadd.f32 %v2445, %v2495
      %v2498 = vtanh.pop %v2497
      %v2499 = vsub.f32 1.0, %v2487
      %2501 = vrot.lane.b32.xlu0 %v2498, 96
      %v2502 = vpop.permute.xlu0 %2501
      %v2504 = vmul.f32 %v2499, %v2502
      %v2505 = vmul.f32 %v2487, %v2430
      %v2506 = vadd.f32 %v2504, %v2505
      %v2507 = vpack.c.bf16 %v2012, %v2012
      %v2509 = vsel %vm2040, %v2507, 0
      %2511 = vmatpush.bf16.msra.mxu0 0
      %2512 = vmatpush.bf16.msra.mxu0 0
      %2513 = vmatpush.bf16.msra.mxu0 0
      %2514 = vmatpush.bf16.msra.mxu0 0
      %2515 = vmatpush.bf16.msra.mxu0 0
      %2516 = vmatpush.bf16.msra.mxu0 0
      %2517 = vmatpush.bf16.msra.mxu0 %v2037
      %2518 = vmatpush.bf16.msra.mxu0 %v2036
      %2519 = vmatmul.bf16.gmra.mxu0 %v2509
      %v2520 = vpop.f32.mrf.mxu0
      %v2521 = vadd.f32 %v2026, %v2520
      %v2522 = vpop.f32.mrf.mxu0
      %2523 = vdwg.mxu0
      %v2524 = vpack.c.bf16 %v2506, %v2506
      %2526 = vrot.lane.b32.xlu0 %v2524, 96
      %v2527 = vpop.permute.xlu0 %2526
      %v2529 = vsel %vm2040, %v2527, 0
      %2531 = vmatpush.bf16.msra.mxu0 0
      %2532 = vmatpush.bf16.msra.mxu0 0
      %2533 = vmatpush.bf16.msra.mxu0 0
      %2534 = vmatpush.bf16.msra.mxu0 0
      %2535 = vmatpush.bf16.msra.mxu0 0
      %2536 = vmatpush.bf16.msra.mxu0 0
      %2537 = vmatpush.bf16.msra.mxu0 %v2069
      %2538 = vmatpush.bf16.msra.mxu0 %v2068
      %2539 = vmatmul.bf16.gmra.mxu0 %v2529
      %v2540 = vpop.f32.mrf.mxu0
      %v2541 = vadd.f32 %v2058, %v2540
      %v2542 = vpop.f32.mrf.mxu0
      %2543 = vdwg.mxu0
      %v2544 = vadd.f32 %v2521, %v2541
      %v2545 = vxor.u32 %v2544, 2147483648
      %v2546 = vmul.f32 %v2545, 1.442695
      %v2547 = vpow.pop %v2546
      %v2548 = vadd.f32 %v2547, 1.0
      %v2549 = vrcp.pop %v2548
      %v2550 = vmul.f32 %v2548, %v2549
      %v2551 = vsub.f32 1.0, %v2550
      %v2552 = vmul.f32 %v2549, %v2551
      %v2553 = vadd.f32 %v2549, %v2552
      %vm2554 = vweird.f32 %v2548
      %vm2555 = vweird.f32 %v2549
      %vm2556 = vmor %vm2554, %vm2555
      %v2557 = vsel %vm2556, %v2549, %v2553
      %v2558 = vand.u32 2147483647, %v2548
      %vm2559 = vcmp.eq.f32.partialorder %v2558, 8.507059e+37
      %v2560 = vand.u32 %v2548, 2147483648
      %v2561 = vor.u32 1.1754944e-38, %v2560
      %v2562 = vsel %vm2559, %v2561, %v2557
      %v2563 = vmul.f32 1.0, %v2562
      %2565 = vrot.lane.b32.xlu0 %v2541, 64
      %v2566 = vpop.permute.xlu0 %2565
      %v2568 = vmul.f32 %v2563, %v2566
      %2570 = vrot.lane.b32.xlu0 %v2568, 64
      %v2571 = vpop.permute.xlu0 %2570
      %v2573 = vadd.f32 %v2521, %v2571
      %v2574 = vtanh.pop %v2573
      %v2575 = vsub.f32 1.0, %v2563
      %2577 = vrot.lane.b32.xlu0 %v2574, 96
      %v2578 = vpop.permute.xlu0 %2577
      %v2580 = vmul.f32 %v2575, %v2578
      %v2581 = vmul.f32 %v2563, %v2506
      %v2582 = vadd.f32 %v2580, %v2581
      %v2583 = vpack.c.bf16 %v2013, %v2013
      %v2585 = vsel %vm2040, %v2583, 0
      %2587 = vmatpush.bf16.msra.mxu0 0
      %2588 = vmatpush.bf16.msra.mxu0 0
      %2589 = vmatpush.bf16.msra.mxu0 0
      %2590 = vmatpush.bf16.msra.mxu0 0
      %2591 = vmatpush.bf16.msra.mxu0 0
      %2592 = vmatpush.bf16.msra.mxu0 0
      %2593 = vmatpush.bf16.msra.mxu0 %v2037
      %2594 = vmatpush.bf16.msra.mxu0 %v2036
      %2595 = vmatmul.bf16.gmra.mxu0 %v2585
      %v2596 = vpop.f32.mrf.mxu0
      %v2597 = vadd.f32 %v2026, %v2596
      %v2598 = vpop.f32.mrf.mxu0
      %2599 = vdwg.mxu0
      %v2600 = vpack.c.bf16 %v2582, %v2582
      %2602 = vrot.lane.b32.xlu0 %v2600, 96
      %v2603 = vpop.permute.xlu0 %2602
      %v2605 = vsel %vm2040, %v2603, 0
      %2607 = vmatpush.bf16.msra.mxu0 0
      %2608 = vmatpush.bf16.msra.mxu0 0
      %2609 = vmatpush.bf16.msra.mxu0 0
      %2610 = vmatpush.bf16.msra.mxu0 0
      %2611 = vmatpush.bf16.msra.mxu0 0
      %2612 = vmatpush.bf16.msra.mxu0 0
      %2613 = vmatpush.bf16.msra.mxu0 %v2069
      %2614 = vmatpush.bf16.msra.mxu0 %v2068
      %2615 = vmatmul.bf16.gmra.mxu0 %v2605
      %v2616 = vpop.f32.mrf.mxu0
      %v2617 = vadd.f32 %v2058, %v2616
      %v2618 = vpop.f32.mrf.mxu0
      %2619 = vdwg.mxu0
      %v2620 = vadd.f32 %v2597, %v2617
      %v2621 = vxor.u32 %v2620, 2147483648
      %v2622 = vmul.f32 %v2621, 1.442695
      %v2623 = vpow.pop %v2622
      %v2624 = vadd.f32 %v2623, 1.0
      %v2625 = vrcp.pop %v2624
      %v2626 = vmul.f32 %v2624, %v2625
      %v2627 = vsub.f32 1.0, %v2626
      %v2628 = vmul.f32 %v2625, %v2627
      %v2629 = vadd.f32 %v2625, %v2628
      %vm2630 = vweird.f32 %v2624
      %vm2631 = vweird.f32 %v2625
      %vm2632 = vmor %vm2630, %vm2631
      %v2633 = vsel %vm2632, %v2625, %v2629
      %v2634 = vand.u32 2147483647, %v2624
      %vm2635 = vcmp.eq.f32.partialorder %v2634, 8.507059e+37
      %v2636 = vand.u32 %v2624, 2147483648
      %v2637 = vor.u32 1.1754944e-38, %v2636
      %v2638 = vsel %vm2635, %v2637, %v2633
      %v2639 = vmul.f32 1.0, %v2638
      %2641 = vrot.lane.b32.xlu0 %v2617, 64
      %v2642 = vpop.permute.xlu0 %2641
      %v2644 = vmul.f32 %v2639, %v2642
      %2646 = vrot.lane.b32.xlu0 %v2644, 64
      %v2647 = vpop.permute.xlu0 %2646
      %v2649 = vadd.f32 %v2597, %v2647
      %v2650 = vtanh.pop %v2649
      %v2651 = vsub.f32 1.0, %v2639
      %2653 = vrot.lane.b32.xlu0 %v2650, 96
      %v2654 = vpop.permute.xlu0 %2653
      %v2656 = vmul.f32 %v2651, %v2654
      %v2657 = vmul.f32 %v2639, %v2582
      %v2658 = vadd.f32 %v2656, %v2657
      %v2659 = vld [vmem:[%s9] sm:$0xff]
      %2661 = vrot.lane.b32.xlu0 %v2659, 32
      %v2662 = vpop.permute.xlu0 %2661
      %v2664 = vmul.f32 %v2658, %v2662
      %2666 = vrot.lane.b32.xlu0 %v2664, 96
      %v2667 = vpop.permute.xlu0 %2666
      %v2669 = vsel %vm2040, %v2667, 0.0
      %2670 = vadd.xlane.f32.xlu0 %v2669
      %v2671 = vpop.xlane.xlu0 %2670
      %v2672 = vrot.slane %v2671, 4
      %v2673 = vadd.f32 %v2671, %v2672
      %v2674 = vrot.slane %v2673, 2
      %v2675 = vadd.f32 %v2673, %v2674
      %v2676 = vrot.slane %v2675, 1
      %v2677 = vadd.f32 %v2675, %v2676
      %v2678 = vld [vmem:[#allocation2] sm:$0x1]
      %v2679 = vadd.f32 %v2677, %v2678
      %vm2680 = vcmask 0
      %2681 = vst.msk [vmem:[%s384] sm:$0x1] %vm2680, %v2679
      %p2682 = scmp.lt.s32.totalorder %s24, 1
      %s2683 = scalar_select %p2682, %s24, 1
      %s2684 = scalar_lea.vmem %s11, %s2683
      // Predicated region
      $region65: #{bapm_forward.1} parent=63 // pred_check
        %p2685 = pneg %p278
      $region66: #{bapm_forward.1} parent=63 // pred_check_branch
        %2687 = sbr.rel (%p2685) target = $region68
      $region67: #{bapm_forward.1} parent=63 // pred_region
        _
      $region68: #{bapm_forward.1} parent=63 // pred_fallthru
        _
    $region64: #{bapm_forward.1} parent=5 // pred_fallthru
      _
    %p2688 = scmp.le.s32.totalorder 2, %s19
    // Predicated region
    $region69: #{bapm_forward.1} parent=5 // pred_check
      %p2689 = pneg %p2688
    $region70: #{bapm_forward.1} parent=5 // pred_check_branch
      %2691 = sbr.rel (%p2689) target = $region72
    $region71: #{bapm_forward.1} parent=5 // pred_region
      %s2692 = ssub.s32 %s19, 2
      // Predicated region
      $region73: #{bapm_forward.1} parent=71 // pred_check
        %p2693 = pneg %p284
      $region74: #{bapm_forward.1} parent=71 // pred_check_branch
        %2695 = sbr.rel (%p2693) target = $region76
      $region75: #{bapm_forward.1} parent=71 // pred_region
        %p2696 = scmp.lt.s32.totalorder %s25, 1
        %s2697 = scalar_select %p2696, %s25, 1
        %s2698 = scalar_lea.vmem %s11, %s2697
      $region76: #{bapm_forward.1} parent=71 // pred_fallthru
        _
    $region72: #{bapm_forward.1} parent=5 // pred_fallthru
      _
  $region6: #{bapm_forward.1} parent=0 // loop_footer
    %s23 = sadd.s32 1, %s19
  $region7: #{bapm_forward.1} parent=0 // loop_footer_branch
    %18 = sbr.rel target = $region3
  $region8: #{bapm_forward.1} parent=0 // loop_exit
    _

</llo_original>
